<compile_context>
chip_gen: v5e
topology: v5e:2x2
jax: 0.10.0
libtpu: 0.0.40
codegen_flags: <defaults>
</compile_context>

<pallas_src>
import jax
import jax.numpy as jnp
from jax import lax
from jax.experimental import pallas as pl
from jax.experimental.pallas import tpu as pltpu

SOS_TOKEN = 1

# Small synthetic model dims (lane-friendly).
V = 256   # vocab size
H = 128   # hidden size
T = 8     # input sequence length
L = 10    # max_length (number of greedy decode steps)


def greedy_decode_kernel(
    seq_ref, len_ref,                                        # SMEM scalars
    emb_ref,                                                 # (V, H) f32
    enc_wi_ref, enc_wh_ref, enc_bi_ref, enc_bh_ref,          # encoder GRU (w: bf16)
    dec_wi_ref, dec_wh_ref, dec_bi_ref, dec_bh_ref,          # decoder GRU (w: bf16)
    wc_ref, bc_ref, wout_ref, bout_ref,                      # concat / output linears
    tokens_ref, scores_ref,                                  # SMEM outputs (L,)
    gi_tab_ref,                                              # VMEM scratch (V, 3H) bf16
):
    f32 = jnp.float32
    bf16 = jnp.bfloat16
    length = len_ref[0]

    # ---- decoder input-projection table: one (V,H)@(H,3H) matmul, stored bf16 -------
    gi_tab_ref[...] = jnp.dot(
        emb_ref[...].astype(bf16), dec_wi_ref[...],
        preferred_element_type=f32).astype(bf16)                          # (V, 3H)

    # ---- gather encoder input embeddings into registers (one f32 vreg) --------------
    x_emb = jnp.concatenate(
        [emb_ref[pl.ds(seq_ref[t], 1), :] for t in range(T)], axis=0)     # (T, H) f32

    # ---- precompute encoder input projections: one (T,H)@(H,3H) matmul --------------
    gi_all = jnp.dot(x_emb.astype(bf16), enc_wi_ref[...],
                     preferred_element_type=f32) + enc_bi_ref[...]        # (T, 3H)

    def gru_gates(gi, gh, h):
        # PyTorch-convention GRU gates; gi/gh: (1,3H), h: (1,H), all f32.
        r = jax.nn.sigmoid(gi[:, 0:H] + gh[:, 0:H])
        z = jax.nn.sigmoid(gi[:, H:2 * H] + gh[:, H:2 * H])
        n = jnp.tanh(gi[:, 2 * H:3 * H] + r * gh[:, 2 * H:3 * H])
        return (1.0 - z) * n + z * h

    # ---- encoder recurrence (unrolled T=8); outputs collected in registers ----------
    enc_bh = enc_bh_ref[...]
    h = jnp.zeros((1, H), f32)
    enc_rows = []
    for t in range(T):
        gh = jnp.dot(h.astype(bf16), enc_wh_ref[...],
                     preferred_element_type=f32) + enc_bh
        h_new = gru_gates(gi_all[t:t + 1, :], gh, h)
        valid = t < length
        enc_rows.append(jnp.where(valid, h_new, jnp.zeros_like(h_new)))
        h = jnp.where(valid, h_new, h)
    enc_out = jnp.concatenate(enc_rows, axis=0)                           # (T, H) f32

    # decoder_hidden = encoder_hidden[:n_layers] (1 layer -> final encoder hidden).

    # ---- hoist loop-invariant small reads --------------------------------------------
    dec_bi = dec_bi_ref[...]
    dec_bh = dec_bh_ref[...]
    bc = bc_ref[...]
    bout = bout_ref[...]
    idx = lax.broadcasted_iota(jnp.int32, (1, V), 1)

    # SOS-token input projection (static row of the table).
    gi0 = gi_tab_ref[SOS_TOKEN:SOS_TOKEN + 1, :].astype(f32) + dec_bi     # (1, 3H)

    # ------------------------- greedy decode loop (compact fori) ---------------------
    def dec_step(i, carry):
        h, gi = carry

        # Decoder GRU step (gi comes precomputed from the table).
        gh = jnp.dot(h.astype(bf16), dec_wh_ref[...],
                     preferred_element_type=f32) + dec_bh
        h = gru_gates(gi, gh, h)

        # Luong "dot" attention, transpose-free: VPU multiply + XLU reductions.
        e = jnp.sum(enc_out * h, axis=1, keepdims=True)                   # (T, 1)
        e = e - jnp.max(e, axis=0, keepdims=True)
        w = jnp.exp(e)
        w = w * pl.reciprocal(jnp.sum(w, axis=0, keepdims=True), approx=True)
        ctx = jnp.sum(w * enc_out, axis=0, keepdims=True)                 # (1, H)

        # concat([h, ctx]) @ Wc + bc as a single (1,2H)@(2H,H) matmul.
        cat = jnp.concatenate([h, ctx], axis=1)                           # (1, 2H)
        cat_out = jnp.tanh(jnp.dot(cat.astype(bf16), wc_ref[...],
                                   preferred_element_type=f32) + bc)
        logits = jnp.dot(cat_out.astype(bf16), wout_ref[...],
                         preferred_element_type=f32) + bout               # (1, V) f32

        # torch.max(softmax(logits), dim=1) without materializing probs:
        #   max prob = 1 / sum(exp(logits - max)); argmax(probs) == first argmax(logits)
        m = jnp.max(logits, axis=1, keepdims=True)                        # (1, 1)
        sum_e = jnp.sum(jnp.exp(logits - m), axis=1, keepdims=True)       # (1, 1)
        tie = jnp.min(jnp.where(logits == m, idx, V),
                      axis=1, keepdims=True)                              # (1, 1) int32

        # Output writes (off the recurrence critical path).
        tokens_ref[i] = tie[0, 0]
        scores_ref[i] = (1.0 / sum_e)[0, 0]                               # exact recip

        # Next-step input projection: one-hot row-select from gi_tab on the idle MXU;
        # keeps the greedy feedback entirely in the vector domain.
        onehot = (idx == tie).astype(bf16)                                # (1, V)
        gi_next = jnp.dot(onehot, gi_tab_ref[...],
                          preferred_element_type=f32) + dec_bi            # (1, 3H)
        return h, gi_next

    lax.fori_loop(0, L, dec_step, (h, gi0))


def greedy_search_decode(input_seq, input_length, params):
    smem = pl.BlockSpec(memory_space=pltpu.MemorySpace.SMEM)
    vmem = pl.BlockSpec(memory_space=pltpu.MemorySpace.VMEM)
    in_specs = [smem, smem] + [vmem] * len(params)
    out_specs = (smem, smem)
    return pl.pallas_call(
        greedy_decode_kernel,
        out_shape=(jax.ShapeDtypeStruct((L,), jnp.int32),
                   jax.ShapeDtypeStruct((L,), jnp.float32)),
        in_specs=in_specs,
        out_specs=out_specs,
        scratch_shapes=[pltpu.VMEM((V, 3 * H), jnp.bfloat16)],  # decoder gi table
    )(input_seq, input_length, *params)


def init_params(key):
    def u(k, shape, scale=0.1):
        return jax.random.uniform(k, shape, jnp.float32, -scale, scale)
    ks = jax.random.split(key, 13)
    # Embedding stays f32 (dynamically row-sliced); big matmul weights are bf16.
    emb     = u(ks[0], (V, H))
    enc_wi  = u(ks[1], (H, 3 * H)).astype(jnp.bfloat16)
    enc_wh  = u(ks[2], (H, 3 * H)).astype(jnp.bfloat16)
    enc_bi  = u(ks[3], (1, 3 * H))
    enc_bh  = u(ks[4], (1, 3 * H))
    dec_wi  = u(ks[5], (H, 3 * H)).astype(jnp.bfloat16)
    dec_wh  = u(ks[6], (H, 3 * H)).astype(jnp.bfloat16)
    dec_bi  = u(ks[7], (1, 3 * H))
    dec_bh  = u(ks[8], (1, 3 * H))
    wc      = u(ks[9], (2 * H, H)).astype(jnp.bfloat16)
    bc      = u(ks[10], (1, H))
    wout    = u(ks[11], (H, V)).astype(jnp.bfloat16)
    bout    = u(ks[12], (1, V))
    return (emb, enc_wi, enc_wh, enc_bi, enc_bh,
            dec_wi, dec_wh, dec_bi, dec_bh, wc, bc, wout, bout)


if __name__ == "__main__":
    key = jax.random.PRNGKey(0)
    pkey, skey = jax.random.split(key)
    params = init_params(pkey)

    # input_seq: (T,) token ids in [2, V); input_length = T (full sequence valid)
    input_seq = jax.random.randint(skey, (T,), 2, V, dtype=jnp.int32)
    input_length = jnp.array([T], dtype=jnp.int32)

    all_tokens, all_scores = greedy_search_decode(input_seq, input_length, params)
    jax.block_until_ready((all_tokens, all_scores))

    assert all_tokens.shape == (L,) and all_tokens.dtype == jnp.int32
    assert all_scores.shape == (L,) and all_scores.dtype == jnp.float32
    assert bool(jnp.all(jnp.isfinite(all_scores)))
    assert bool(jnp.all((all_scores > 0.0) & (all_scores <= 1.0)))
    assert bool(jnp.all((all_tokens >= 0) & (all_tokens < V)))
    print("KERNEL_OK")
</pallas_src>

<mosaic_0001>
module attributes {stable_mosaic.version = 11 : i64} {
  func.func @greedy_decode_kernel(%arg0: memref<8xi32, #tpu.memory_space<smem>>, %arg1: memref<1xi32, #tpu.memory_space<smem>>, %arg2: memref<256x128xf32, #tpu.memory_space<vmem>>, %arg3: memref<128x384xbf16, #tpu.memory_space<vmem>>, %arg4: memref<128x384xbf16, #tpu.memory_space<vmem>>, %arg5: memref<1x384xf32, #tpu.memory_space<vmem>>, %arg6: memref<1x384xf32, #tpu.memory_space<vmem>>, %arg7: memref<128x384xbf16, #tpu.memory_space<vmem>>, %arg8: memref<128x384xbf16, #tpu.memory_space<vmem>>, %arg9: memref<1x384xf32, #tpu.memory_space<vmem>>, %arg10: memref<1x384xf32, #tpu.memory_space<vmem>>, %arg11: memref<256x128xbf16, #tpu.memory_space<vmem>>, %arg12: memref<1x128xf32, #tpu.memory_space<vmem>>, %arg13: memref<128x256xbf16, #tpu.memory_space<vmem>>, %arg14: memref<1x256xf32, #tpu.memory_space<vmem>>, %arg15: memref<10xi32, #tpu.memory_space<smem>>, %arg16: memref<10xf32, #tpu.memory_space<smem>>, %arg17: memref<256x384xbf16, #tpu.memory_space<vmem>>) attributes {dimension_semantics = [], scalar_prefetch = 0 : i64, scratch_operands = 1 : i64, tpu.core_type = #tpu.core_type<tc>} {
    %c0 = arith.constant 0 : index
    %0 = memref.load %arg1[%c0] : memref<1xi32, #tpu.memory_space<smem>>
    %c0_0 = arith.constant 0 : index
    %c0_1 = arith.constant 0 : index
    %1 = vector.load %arg2[%c0_0, %c0_1] : memref<256x128xf32, #tpu.memory_space<vmem>>, vector<256x128xf32>
    %2 = arith.truncf %1 : vector<256x128xf32> to vector<256x128xbf16>
    %c0_2 = arith.constant 0 : index
    %c0_3 = arith.constant 0 : index
    %3 = vector.load %arg7[%c0_2, %c0_3] : memref<128x384xbf16, #tpu.memory_space<vmem>>, vector<128x384xbf16>
    %cst = arith.constant dense<0.000000e+00> : vector<256x384xf32>
    %4 = tpu.matmul %2, %3, %cst {dimension_numbers = #tpu.dot_dimension_numbers<[1], [0], [0], [1], [0, 0, 1, 1], [], []>} : vector<256x128xbf16>, vector<128x384xbf16>, vector<256x384xf32> -> vector<256x384xf32>
    %5 = arith.truncf %4 : vector<256x384xf32> to vector<256x384xbf16>
    %c0_4 = arith.constant 0 : index
    %c0_5 = arith.constant 0 : index
    %6 = vector.load %arg17[%c0_4, %c0_5] : memref<256x384xbf16, #tpu.memory_space<vmem>>, vector<256x384xbf16>
    tpu.vector_store %arg17[%c0_4, %c0_5], %5 {strides = array<i32>} : memref<256x384xbf16, #tpu.memory_space<vmem>>, vector<256x384xbf16>,
    %c0_6 = arith.constant 0 : index
    %7 = memref.load %arg0[%c0_6] : memref<8xi32, #tpu.memory_space<smem>>
    %8 = arith.index_cast %7 : i32 to index
    %c0_7 = arith.constant 0 : index
    %9 = vector.load %arg2[%8, %c0_7] : memref<256x128xf32, #tpu.memory_space<vmem>>, vector<1x128xf32>
    %c1 = arith.constant 1 : index
    %10 = memref.load %arg0[%c1] : memref<8xi32, #tpu.memory_space<smem>>
    %11 = arith.index_cast %10 : i32 to index
    %c0_8 = arith.constant 0 : index
    %12 = vector.load %arg2[%11, %c0_8] : memref<256x128xf32, #tpu.memory_space<vmem>>, vector<1x128xf32>
    %c2 = arith.constant 2 : index
    %13 = memref.load %arg0[%c2] : memref<8xi32, #tpu.memory_space<smem>>
    %14 = arith.index_cast %13 : i32 to index
    %c0_9 = arith.constant 0 : index
    %15 = vector.load %arg2[%14, %c0_9] : memref<256x128xf32, #tpu.memory_space<vmem>>, vector<1x128xf32>
    %c3 = arith.constant 3 : index
    %16 = memref.load %arg0[%c3] : memref<8xi32, #tpu.memory_space<smem>>
    %17 = arith.index_cast %16 : i32 to index
    %c0_10 = arith.constant 0 : index
    %18 = vector.load %arg2[%17, %c0_10] : memref<256x128xf32, #tpu.memory_space<vmem>>, vector<1x128xf32>
    %c4 = arith.constant 4 : index
    %19 = memref.load %arg0[%c4] : memref<8xi32, #tpu.memory_space<smem>>
    %20 = arith.index_cast %19 : i32 to index
    %c0_11 = arith.constant 0 : index
    %21 = vector.load %arg2[%20, %c0_11] : memref<256x128xf32, #tpu.memory_space<vmem>>, vector<1x128xf32>
    %c5 = arith.constant 5 : index
    %22 = memref.load %arg0[%c5] : memref<8xi32, #tpu.memory_space<smem>>
    %23 = arith.index_cast %22 : i32 to index
    %c0_12 = arith.constant 0 : index
    %24 = vector.load %arg2[%23, %c0_12] : memref<256x128xf32, #tpu.memory_space<vmem>>, vector<1x128xf32>
    %c6 = arith.constant 6 : index
    %25 = memref.load %arg0[%c6] : memref<8xi32, #tpu.memory_space<smem>>
    %26 = arith.index_cast %25 : i32 to index
    %c0_13 = arith.constant 0 : index
    %27 = vector.load %arg2[%26, %c0_13] : memref<256x128xf32, #tpu.memory_space<vmem>>, vector<1x128xf32>
    %c7 = arith.constant 7 : index
    %28 = memref.load %arg0[%c7] : memref<8xi32, #tpu.memory_space<smem>>
    %29 = arith.index_cast %28 : i32 to index
    %c0_14 = arith.constant 0 : index
    %30 = vector.load %arg2[%29, %c0_14] : memref<256x128xf32, #tpu.memory_space<vmem>>, vector<1x128xf32>
    %31 = tpu.concatenate %9, %12, %15, %18, %21, %24, %27, %30 in 0 : vector<1x128xf32>, vector<1x128xf32>, vector<1x128xf32>, vector<1x128xf32>, vector<1x128xf32>, vector<1x128xf32>, vector<1x128xf32>, vector<1x128xf32> -> vector<8x128xf32>
    %32 = arith.truncf %31 : vector<8x128xf32> to vector<8x128xbf16>
    %c0_15 = arith.constant 0 : index
    %c0_16 = arith.constant 0 : index
    %33 = vector.load %arg3[%c0_15, %c0_16] : memref<128x384xbf16, #tpu.memory_space<vmem>>, vector<128x384xbf16>
    %cst_17 = arith.constant dense<0.000000e+00> : vector<8x384xf32>
    %34 = tpu.matmul %32, %33, %cst_17 {dimension_numbers = #tpu.dot_dimension_numbers<[1], [0], [0], [1], [0, 0, 1, 1], [], []>} : vector<8x128xbf16>, vector<128x384xbf16>, vector<8x384xf32> -> vector<8x384xf32>
    %c0_18 = arith.constant 0 : index
    %c0_19 = arith.constant 0 : index
    %35 = vector.load %arg5[%c0_18, %c0_19] : memref<1x384xf32, #tpu.memory_space<vmem>>, vector<1x384xf32>
    %36 = vector.broadcast %35 : vector<1x384xf32> to vector<8x384xf32>
    %37 = arith.addf %34, %36 : vector<8x384xf32>
    %c0_20 = arith.constant 0 : index
    %c0_21 = arith.constant 0 : index
    %38 = vector.load %arg6[%c0_20, %c0_21] : memref<1x384xf32, #tpu.memory_space<vmem>>, vector<1x384xf32>
    %cst_22 = arith.constant 0.000000e+00 : f32
    %39 = vector.broadcast %cst_22 : f32 to vector<1x128xf32>
    %40 = arith.truncf %39 : vector<1x128xf32> to vector<1x128xbf16>
    %c0_23 = arith.constant 0 : index
    %c0_24 = arith.constant 0 : index
    %41 = vector.load %arg4[%c0_23, %c0_24] : memref<128x384xbf16, #tpu.memory_space<vmem>>, vector<128x384xbf16>
    %cst_25 = arith.constant dense<0.000000e+00> : vector<1x384xf32>
    %42 = tpu.matmul %40, %41, %cst_25 {dimension_numbers = #tpu.dot_dimension_numbers<[1], [0], [0], [1], [0, 0, 1, 1], [], []>} : vector<1x128xbf16>, vector<128x384xbf16>, vector<1x384xf32> -> vector<1x384xf32>
    %43 = arith.addf %42, %38 : vector<1x384xf32>
    %44 = vector.extract_strided_slice %37 {offsets = [0, 0], sizes = [1, 384], strides = [1, 1]} : vector<8x384xf32> to vector<1x384xf32>
    %45 = vector.extract_strided_slice %44 {offsets = [0, 0], sizes = [1, 128], strides = [1, 1]} : vector<1x384xf32> to vector<1x128xf32>
    %46 = vector.extract_strided_slice %43 {offsets = [0, 0], sizes = [1, 128], strides = [1, 1]} : vector<1x384xf32> to vector<1x128xf32>
    %47 = arith.addf %45, %46 : vector<1x128xf32>
    %48 = arith.negf %47 : vector<1x128xf32>
    %49 = math.exp %48 : vector<1x128xf32>
    %cst_26 = arith.constant 1.000000e+00 : f32
    %50 = vector.broadcast %cst_26 : f32 to vector<1x128xf32>
    %51 = arith.addf %50, %49 : vector<1x128xf32>
    %52 = arith.divf %50, %51 : vector<1x128xf32>
    %53 = vector.extract_strided_slice %44 {offsets = [0, 128], sizes = [1, 128], strides = [1, 1]} : vector<1x384xf32> to vector<1x128xf32>
    %54 = vector.extract_strided_slice %43 {offsets = [0, 128], sizes = [1, 128], strides = [1, 1]} : vector<1x384xf32> to vector<1x128xf32>
    %55 = arith.addf %53, %54 : vector<1x128xf32>
    %56 = arith.negf %55 : vector<1x128xf32>
    %57 = math.exp %56 : vector<1x128xf32>
    %cst_27 = arith.constant 1.000000e+00 : f32
    %58 = vector.broadcast %cst_27 : f32 to vector<1x128xf32>
    %59 = arith.addf %58, %57 : vector<1x128xf32>
    %60 = arith.divf %58, %59 : vector<1x128xf32>
    %61 = vector.extract_strided_slice %44 {offsets = [0, 256], sizes = [1, 128], strides = [1, 1]} : vector<1x384xf32> to vector<1x128xf32>
    %62 = vector.extract_strided_slice %43 {offsets = [0, 256], sizes = [1, 128], strides = [1, 1]} : vector<1x384xf32> to vector<1x128xf32>
    %63 = arith.mulf %52, %62 : vector<1x128xf32>
    %64 = arith.addf %61, %63 : vector<1x128xf32>
    %65 = math.tanh %64 : vector<1x128xf32>
    %cst_28 = arith.constant 1.000000e+00 : f32
    %66 = vector.broadcast %cst_28 : f32 to vector<1x128xf32>
    %67 = arith.subf %66, %60 : vector<1x128xf32>
    %68 = arith.mulf %67, %65 : vector<1x128xf32>
    %69 = arith.mulf %60, %39 : vector<1x128xf32>
    %70 = arith.addf %68, %69 : vector<1x128xf32>
    %c0_i32 = arith.constant 0 : i32
    %71 = arith.cmpi sgt, %0, %c0_i32 : i32
    %cst_29 = arith.constant 0.000000e+00 : f32
    %72 = vector.broadcast %cst_29 : f32 to vector<1x128xf32>
    %73 = arith.select %71, %70, %72 : vector<1x128xf32>
    %74 = arith.select %71, %70, %39 : vector<1x128xf32>
    %75 = arith.truncf %74 : vector<1x128xf32> to vector<1x128xbf16>
    %c0_30 = arith.constant 0 : index
    %c0_31 = arith.constant 0 : index
    %76 = vector.load %arg4[%c0_30, %c0_31] : memref<128x384xbf16, #tpu.memory_space<vmem>>, vector<128x384xbf16>
    %cst_32 = arith.constant dense<0.000000e+00> : vector<1x384xf32>
    %77 = tpu.matmul %75, %76, %cst_32 {dimension_numbers = #tpu.dot_dimension_numbers<[1], [0], [0], [1], [0, 0, 1, 1], [], []>} : vector<1x128xbf16>, vector<128x384xbf16>, vector<1x384xf32> -> vector<1x384xf32>
    %78 = arith.addf %77, %38 : vector<1x384xf32>
    %79 = vector.extract_strided_slice %37 {offsets = [1, 0], sizes = [1, 384], strides = [1, 1]} : vector<8x384xf32> to vector<1x384xf32>
    %80 = vector.extract_strided_slice %79 {offsets = [0, 0], sizes = [1, 128], strides = [1, 1]} : vector<1x384xf32> to vector<1x128xf32>
    %81 = vector.extract_strided_slice %78 {offsets = [0, 0], sizes = [1, 128], strides = [1, 1]} : vector<1x384xf32> to vector<1x128xf32>
    %82 = arith.addf %80, %81 : vector<1x128xf32>
    %83 = arith.negf %82 : vector<1x128xf32>
    %84 = math.exp %83 : vector<1x128xf32>
    %cst_33 = arith.constant 1.000000e+00 : f32
    %85 = vector.broadcast %cst_33 : f32 to vector<1x128xf32>
    %86 = arith.addf %85, %84 : vector<1x128xf32>
    %87 = arith.divf %85, %86 : vector<1x128xf32>
    %88 = vector.extract_strided_slice %79 {offsets = [0, 128], sizes = [1, 128], strides = [1, 1]} : vector<1x384xf32> to vector<1x128xf32>
    %89 = vector.extract_strided_slice %78 {offsets = [0, 128], sizes = [1, 128], strides = [1, 1]} : vector<1x384xf32> to vector<1x128xf32>
    %90 = arith.addf %88, %89 : vector<1x128xf32>
    %91 = arith.negf %90 : vector<1x128xf32>
    %92 = math.exp %91 : vector<1x128xf32>
    %cst_34 = arith.constant 1.000000e+00 : f32
    %93 = vector.broadcast %cst_34 : f32 to vector<1x128xf32>
    %94 = arith.addf %93, %92 : vector<1x128xf32>
    %95 = arith.divf %93, %94 : vector<1x128xf32>
    %96 = vector.extract_strided_slice %79 {offsets = [0, 256], sizes = [1, 128], strides = [1, 1]} : vector<1x384xf32> to vector<1x128xf32>
    %97 = vector.extract_strided_slice %78 {offsets = [0, 256], sizes = [1, 128], strides = [1, 1]} : vector<1x384xf32> to vector<1x128xf32>
    %98 = arith.mulf %87, %97 : vector<1x128xf32>
    %99 = arith.addf %96, %98 : vector<1x128xf32>
    %100 = math.tanh %99 : vector<1x128xf32>
    %cst_35 = arith.constant 1.000000e+00 : f32
    %101 = vector.broadcast %cst_35 : f32 to vector<1x128xf32>
    %102 = arith.subf %101, %95 : vector<1x128xf32>
    %103 = arith.mulf %102, %100 : vector<1x128xf32>
    %104 = arith.mulf %95, %74 : vector<1x128xf32>
    %105 = arith.addf %103, %104 : vector<1x128xf32>
    %c1_i32 = arith.constant 1 : i32
    %106 = arith.cmpi sgt, %0, %c1_i32 : i32
    %cst_36 = arith.constant 0.000000e+00 : f32
    %107 = vector.broadcast %cst_36 : f32 to vector<1x128xf32>
    %108 = arith.select %106, %105, %107 : vector<1x128xf32>
    %109 = arith.select %106, %105, %74 : vector<1x128xf32>
    %110 = arith.truncf %109 : vector<1x128xf32> to vector<1x128xbf16>
    %c0_37 = arith.constant 0 : index
    %c0_38 = arith.constant 0 : index
    %111 = vector.load %arg4[%c0_37, %c0_38] : memref<128x384xbf16, #tpu.memory_space<vmem>>, vector<128x384xbf16>
    %cst_39 = arith.constant dense<0.000000e+00> : vector<1x384xf32>
    %112 = tpu.matmul %110, %111, %cst_39 {dimension_numbers = #tpu.dot_dimension_numbers<[1], [0], [0], [1], [0, 0, 1, 1], [], []>} : vector<1x128xbf16>, vector<128x384xbf16>, vector<1x384xf32> -> vector<1x384xf32>
    %113 = arith.addf %112, %38 : vector<1x384xf32>
    %114 = vector.extract_strided_slice %37 {offsets = [2, 0], sizes = [1, 384], strides = [1, 1]} : vector<8x384xf32> to vector<1x384xf32>
    %115 = vector.extract_strided_slice %114 {offsets = [0, 0], sizes = [1, 128], strides = [1, 1]} : vector<1x384xf32> to vector<1x128xf32>
    %116 = vector.extract_strided_slice %113 {offsets = [0, 0], sizes = [1, 128], strides = [1, 1]} : vector<1x384xf32> to vector<1x128xf32>
    %117 = arith.addf %115, %116 : vector<1x128xf32>
    %118 = arith.negf %117 : vector<1x128xf32>
    %119 = math.exp %118 : vector<1x128xf32>
    %cst_40 = arith.constant 1.000000e+00 : f32
    %120 = vector.broadcast %cst_40 : f32 to vector<1x128xf32>
    %121 = arith.addf %120, %119 : vector<1x128xf32>
    %122 = arith.divf %120, %121 : vector<1x128xf32>
    %123 = vector.extract_strided_slice %114 {offsets = [0, 128], sizes = [1, 128], strides = [1, 1]} : vector<1x384xf32> to vector<1x128xf32>
    %124 = vector.extract_strided_slice %113 {offsets = [0, 128], sizes = [1, 128], strides = [1, 1]} : vector<1x384xf32> to vector<1x128xf32>
    %125 = arith.addf %123, %124 : vector<1x128xf32>
    %126 = arith.negf %125 : vector<1x128xf32>
    %127 = math.exp %126 : vector<1x128xf32>
    %cst_41 = arith.constant 1.000000e+00 : f32
    %128 = vector.broadcast %cst_41 : f32 to vector<1x128xf32>
    %129 = arith.addf %128, %127 : vector<1x128xf32>
    %130 = arith.divf %128, %129 : vector<1x128xf32>
    %131 = vector.extract_strided_slice %114 {offsets = [0, 256], sizes = [1, 128], strides = [1, 1]} : vector<1x384xf32> to vector<1x128xf32>
    %132 = vector.extract_strided_slice %113 {offsets = [0, 256], sizes = [1, 128], strides = [1, 1]} : vector<1x384xf32> to vector<1x128xf32>
    %133 = arith.mulf %122, %132 : vector<1x128xf32>
    %134 = arith.addf %131, %133 : vector<1x128xf32>
    %135 = math.tanh %134 : vector<1x128xf32>
    %cst_42 = arith.constant 1.000000e+00 : f32
    %136 = vector.broadcast %cst_42 : f32 to vector<1x128xf32>
    %137 = arith.subf %136, %130 : vector<1x128xf32>
    %138 = arith.mulf %137, %135 : vector<1x128xf32>
    %139 = arith.mulf %130, %109 : vector<1x128xf32>
    %140 = arith.addf %138, %139 : vector<1x128xf32>
    %c2_i32 = arith.constant 2 : i32
    %141 = arith.cmpi sgt, %0, %c2_i32 : i32
    %cst_43 = arith.constant 0.000000e+00 : f32
    %142 = vector.broadcast %cst_43 : f32 to vector<1x128xf32>
    %143 = arith.select %141, %140, %142 : vector<1x128xf32>
    %144 = arith.select %141, %140, %109 : vector<1x128xf32>
    %145 = arith.truncf %144 : vector<1x128xf32> to vector<1x128xbf16>
    %c0_44 = arith.constant 0 : index
    %c0_45 = arith.constant 0 : index
    %146 = vector.load %arg4[%c0_44, %c0_45] : memref<128x384xbf16, #tpu.memory_space<vmem>>, vector<128x384xbf16>
    %cst_46 = arith.constant dense<0.000000e+00> : vector<1x384xf32>
    %147 = tpu.matmul %145, %146, %cst_46 {dimension_numbers = #tpu.dot_dimension_numbers<[1], [0], [0], [1], [0, 0, 1, 1], [], []>} : vector<1x128xbf16>, vector<128x384xbf16>, vector<1x384xf32> -> vector<1x384xf32>
    %148 = arith.addf %147, %38 : vector<1x384xf32>
    %149 = vector.extract_strided_slice %37 {offsets = [3, 0], sizes = [1, 384], strides = [1, 1]} : vector<8x384xf32> to vector<1x384xf32>
    %150 = vector.extract_strided_slice %149 {offsets = [0, 0], sizes = [1, 128], strides = [1, 1]} : vector<1x384xf32> to vector<1x128xf32>
    %151 = vector.extract_strided_slice %148 {offsets = [0, 0], sizes = [1, 128], strides = [1, 1]} : vector<1x384xf32> to vector<1x128xf32>
    %152 = arith.addf %150, %151 : vector<1x128xf32>
    %153 = arith.negf %152 : vector<1x128xf32>
    %154 = math.exp %153 : vector<1x128xf32>
    %cst_47 = arith.constant 1.000000e+00 : f32
    %155 = vector.broadcast %cst_47 : f32 to vector<1x128xf32>
    %156 = arith.addf %155, %154 : vector<1x128xf32>
    %157 = arith.divf %155, %156 : vector<1x128xf32>
    %158 = vector.extract_strided_slice %149 {offsets = [0, 128], sizes = [1, 128], strides = [1, 1]} : vector<1x384xf32> to vector<1x128xf32>
    %159 = vector.extract_strided_slice %148 {offsets = [0, 128], sizes = [1, 128], strides = [1, 1]} : vector<1x384xf32> to vector<1x128xf32>
    %160 = arith.addf %158, %159 : vector<1x128xf32>
    %161 = arith.negf %160 : vector<1x128xf32>
    %162 = math.exp %161 : vector<1x128xf32>
    %cst_48 = arith.constant 1.000000e+00 : f32
    %163 = vector.broadcast %cst_48 : f32 to vector<1x128xf32>
    %164 = arith.addf %163, %162 : vector<1x128xf32>
    %165 = arith.divf %163, %164 : vector<1x128xf32>
    %166 = vector.extract_strided_slice %149 {offsets = [0, 256], sizes = [1, 128], strides = [1, 1]} : vector<1x384xf32> to vector<1x128xf32>
    %167 = vector.extract_strided_slice %148 {offsets = [0, 256], sizes = [1, 128], strides = [1, 1]} : vector<1x384xf32> to vector<1x128xf32>
    %168 = arith.mulf %157, %167 : vector<1x128xf32>
    %169 = arith.addf %166, %168 : vector<1x128xf32>
    %170 = math.tanh %169 : vector<1x128xf32>
    %cst_49 = arith.constant 1.000000e+00 : f32
    %171 = vector.broadcast %cst_49 : f32 to vector<1x128xf32>
    %172 = arith.subf %171, %165 : vector<1x128xf32>
    %173 = arith.mulf %172, %170 : vector<1x128xf32>
    %174 = arith.mulf %165, %144 : vector<1x128xf32>
    %175 = arith.addf %173, %174 : vector<1x128xf32>
    %c3_i32 = arith.constant 3 : i32
    %176 = arith.cmpi sgt, %0, %c3_i32 : i32
    %cst_50 = arith.constant 0.000000e+00 : f32
    %177 = vector.broadcast %cst_50 : f32 to vector<1x128xf32>
    %178 = arith.select %176, %175, %177 : vector<1x128xf32>
    %179 = arith.select %176, %175, %144 : vector<1x128xf32>
    %180 = arith.truncf %179 : vector<1x128xf32> to vector<1x128xbf16>
    %c0_51 = arith.constant 0 : index
    %c0_52 = arith.constant 0 : index
    %181 = vector.load %arg4[%c0_51, %c0_52] : memref<128x384xbf16, #tpu.memory_space<vmem>>, vector<128x384xbf16>
    %cst_53 = arith.constant dense<0.000000e+00> : vector<1x384xf32>
    %182 = tpu.matmul %180, %181, %cst_53 {dimension_numbers = #tpu.dot_dimension_numbers<[1], [0], [0], [1], [0, 0, 1, 1], [], []>} : vector<1x128xbf16>, vector<128x384xbf16>, vector<1x384xf32> -> vector<1x384xf32>
    %183 = arith.addf %182, %38 : vector<1x384xf32>
    %184 = vector.extract_strided_slice %37 {offsets = [4, 0], sizes = [1, 384], strides = [1, 1]} : vector<8x384xf32> to vector<1x384xf32>
    %185 = vector.extract_strided_slice %184 {offsets = [0, 0], sizes = [1, 128], strides = [1, 1]} : vector<1x384xf32> to vector<1x128xf32>
    %186 = vector.extract_strided_slice %183 {offsets = [0, 0], sizes = [1, 128], strides = [1, 1]} : vector<1x384xf32> to vector<1x128xf32>
    %187 = arith.addf %185, %186 : vector<1x128xf32>
    %188 = arith.negf %187 : vector<1x128xf32>
    %189 = math.exp %188 : vector<1x128xf32>
    %cst_54 = arith.constant 1.000000e+00 : f32
    %190 = vector.broadcast %cst_54 : f32 to vector<1x128xf32>
    %191 = arith.addf %190, %189 : vector<1x128xf32>
    %192 = arith.divf %190, %191 : vector<1x128xf32>
    %193 = vector.extract_strided_slice %184 {offsets = [0, 128], sizes = [1, 128], strides = [1, 1]} : vector<1x384xf32> to vector<1x128xf32>
    %194 = vector.extract_strided_slice %183 {offsets = [0, 128], sizes = [1, 128], strides = [1, 1]} : vector<1x384xf32> to vector<1x128xf32>
    %195 = arith.addf %193, %194 : vector<1x128xf32>
    %196 = arith.negf %195 : vector<1x128xf32>
    %197 = math.exp %196 : vector<1x128xf32>
    %cst_55 = arith.constant 1.000000e+00 : f32
    %198 = vector.broadcast %cst_55 : f32 to vector<1x128xf32>
    %199 = arith.addf %198, %197 : vector<1x128xf32>
    %200 = arith.divf %198, %199 : vector<1x128xf32>
    %201 = vector.extract_strided_slice %184 {offsets = [0, 256], sizes = [1, 128], strides = [1, 1]} : vector<1x384xf32> to vector<1x128xf32>
    %202 = vector.extract_strided_slice %183 {offsets = [0, 256], sizes = [1, 128], strides = [1, 1]} : vector<1x384xf32> to vector<1x128xf32>
    %203 = arith.mulf %192, %202 : vector<1x128xf32>
    %204 = arith.addf %201, %203 : vector<1x128xf32>
    %205 = math.tanh %204 : vector<1x128xf32>
    %cst_56 = arith.constant 1.000000e+00 : f32
    %206 = vector.broadcast %cst_56 : f32 to vector<1x128xf32>
    %207 = arith.subf %206, %200 : vector<1x128xf32>
    %208 = arith.mulf %207, %205 : vector<1x128xf32>
    %209 = arith.mulf %200, %179 : vector<1x128xf32>
    %210 = arith.addf %208, %209 : vector<1x128xf32>
    %c4_i32 = arith.constant 4 : i32
    %211 = arith.cmpi sgt, %0, %c4_i32 : i32
    %cst_57 = arith.constant 0.000000e+00 : f32
    %212 = vector.broadcast %cst_57 : f32 to vector<1x128xf32>
    %213 = arith.select %211, %210, %212 : vector<1x128xf32>
    %214 = arith.select %211, %210, %179 : vector<1x128xf32>
    %215 = arith.truncf %214 : vector<1x128xf32> to vector<1x128xbf16>
    %c0_58 = arith.constant 0 : index
    %c0_59 = arith.constant 0 : index
    %216 = vector.load %arg4[%c0_58, %c0_59] : memref<128x384xbf16, #tpu.memory_space<vmem>>, vector<128x384xbf16>
    %cst_60 = arith.constant dense<0.000000e+00> : vector<1x384xf32>
    %217 = tpu.matmul %215, %216, %cst_60 {dimension_numbers = #tpu.dot_dimension_numbers<[1], [0], [0], [1], [0, 0, 1, 1], [], []>} : vector<1x128xbf16>, vector<128x384xbf16>, vector<1x384xf32> -> vector<1x384xf32>
    %218 = arith.addf %217, %38 : vector<1x384xf32>
    %219 = vector.extract_strided_slice %37 {offsets = [5, 0], sizes = [1, 384], strides = [1, 1]} : vector<8x384xf32> to vector<1x384xf32>
    %220 = vector.extract_strided_slice %219 {offsets = [0, 0], sizes = [1, 128], strides = [1, 1]} : vector<1x384xf32> to vector<1x128xf32>
    %221 = vector.extract_strided_slice %218 {offsets = [0, 0], sizes = [1, 128], strides = [1, 1]} : vector<1x384xf32> to vector<1x128xf32>
    %222 = arith.addf %220, %221 : vector<1x128xf32>
    %223 = arith.negf %222 : vector<1x128xf32>
    %224 = math.exp %223 : vector<1x128xf32>
    %cst_61 = arith.constant 1.000000e+00 : f32
    %225 = vector.broadcast %cst_61 : f32 to vector<1x128xf32>
    %226 = arith.addf %225, %224 : vector<1x128xf32>
    %227 = arith.divf %225, %226 : vector<1x128xf32>
    %228 = vector.extract_strided_slice %219 {offsets = [0, 128], sizes = [1, 128], strides = [1, 1]} : vector<1x384xf32> to vector<1x128xf32>
    %229 = vector.extract_strided_slice %218 {offsets = [0, 128], sizes = [1, 128], strides = [1, 1]} : vector<1x384xf32> to vector<1x128xf32>
    %230 = arith.addf %228, %229 : vector<1x128xf32>
    %231 = arith.negf %230 : vector<1x128xf32>
    %232 = math.exp %231 : vector<1x128xf32>
    %cst_62 = arith.constant 1.000000e+00 : f32
    %233 = vector.broadcast %cst_62 : f32 to vector<1x128xf32>
    %234 = arith.addf %233, %232 : vector<1x128xf32>
    %235 = arith.divf %233, %234 : vector<1x128xf32>
    %236 = vector.extract_strided_slice %219 {offsets = [0, 256], sizes = [1, 128], strides = [1, 1]} : vector<1x384xf32> to vector<1x128xf32>
    %237 = vector.extract_strided_slice %218 {offsets = [0, 256], sizes = [1, 128], strides = [1, 1]} : vector<1x384xf32> to vector<1x128xf32>
    %238 = arith.mulf %227, %237 : vector<1x128xf32>
    %239 = arith.addf %236, %238 : vector<1x128xf32>
    %240 = math.tanh %239 : vector<1x128xf32>
    %cst_63 = arith.constant 1.000000e+00 : f32
    %241 = vector.broadcast %cst_63 : f32 to vector<1x128xf32>
    %242 = arith.subf %241, %235 : vector<1x128xf32>
    %243 = arith.mulf %242, %240 : vector<1x128xf32>
    %244 = arith.mulf %235, %214 : vector<1x128xf32>
    %245 = arith.addf %243, %244 : vector<1x128xf32>
    %c5_i32 = arith.constant 5 : i32
    %246 = arith.cmpi sgt, %0, %c5_i32 : i32
    %cst_64 = arith.constant 0.000000e+00 : f32
    %247 = vector.broadcast %cst_64 : f32 to vector<1x128xf32>
    %248 = arith.select %246, %245, %247 : vector<1x128xf32>
    %249 = arith.select %246, %245, %214 : vector<1x128xf32>
    %250 = arith.truncf %249 : vector<1x128xf32> to vector<1x128xbf16>
    %c0_65 = arith.constant 0 : index
    %c0_66 = arith.constant 0 : index
    %251 = vector.load %arg4[%c0_65, %c0_66] : memref<128x384xbf16, #tpu.memory_space<vmem>>, vector<128x384xbf16>
    %cst_67 = arith.constant dense<0.000000e+00> : vector<1x384xf32>
    %252 = tpu.matmul %250, %251, %cst_67 {dimension_numbers = #tpu.dot_dimension_numbers<[1], [0], [0], [1], [0, 0, 1, 1], [], []>} : vector<1x128xbf16>, vector<128x384xbf16>, vector<1x384xf32> -> vector<1x384xf32>
    %253 = arith.addf %252, %38 : vector<1x384xf32>
    %254 = vector.extract_strided_slice %37 {offsets = [6, 0], sizes = [1, 384], strides = [1, 1]} : vector<8x384xf32> to vector<1x384xf32>
    %255 = vector.extract_strided_slice %254 {offsets = [0, 0], sizes = [1, 128], strides = [1, 1]} : vector<1x384xf32> to vector<1x128xf32>
    %256 = vector.extract_strided_slice %253 {offsets = [0, 0], sizes = [1, 128], strides = [1, 1]} : vector<1x384xf32> to vector<1x128xf32>
    %257 = arith.addf %255, %256 : vector<1x128xf32>
    %258 = arith.negf %257 : vector<1x128xf32>
    %259 = math.exp %258 : vector<1x128xf32>
    %cst_68 = arith.constant 1.000000e+00 : f32
    %260 = vector.broadcast %cst_68 : f32 to vector<1x128xf32>
    %261 = arith.addf %260, %259 : vector<1x128xf32>
    %262 = arith.divf %260, %261 : vector<1x128xf32>
    %263 = vector.extract_strided_slice %254 {offsets = [0, 128], sizes = [1, 128], strides = [1, 1]} : vector<1x384xf32> to vector<1x128xf32>
    %264 = vector.extract_strided_slice %253 {offsets = [0, 128], sizes = [1, 128], strides = [1, 1]} : vector<1x384xf32> to vector<1x128xf32>
    %265 = arith.addf %263, %264 : vector<1x128xf32>
    %266 = arith.negf %265 : vector<1x128xf32>
    %267 = math.exp %266 : vector<1x128xf32>
    %cst_69 = arith.constant 1.000000e+00 : f32
    %268 = vector.broadcast %cst_69 : f32 to vector<1x128xf32>
    %269 = arith.addf %268, %267 : vector<1x128xf32>
    %270 = arith.divf %268, %269 : vector<1x128xf32>
    %271 = vector.extract_strided_slice %254 {offsets = [0, 256], sizes = [1, 128], strides = [1, 1]} : vector<1x384xf32> to vector<1x128xf32>
    %272 = vector.extract_strided_slice %253 {offsets = [0, 256], sizes = [1, 128], strides = [1, 1]} : vector<1x384xf32> to vector<1x128xf32>
    %273 = arith.mulf %262, %272 : vector<1x128xf32>
    %274 = arith.addf %271, %273 : vector<1x128xf32>
    %275 = math.tanh %274 : vector<1x128xf32>
    %cst_70 = arith.constant 1.000000e+00 : f32
    %276 = vector.broadcast %cst_70 : f32 to vector<1x128xf32>
    %277 = arith.subf %276, %270 : vector<1x128xf32>
    %278 = arith.mulf %277, %275 : vector<1x128xf32>
    %279 = arith.mulf %270, %249 : vector<1x128xf32>
    %280 = arith.addf %278, %279 : vector<1x128xf32>
    %c6_i32 = arith.constant 6 : i32
    %281 = arith.cmpi sgt, %0, %c6_i32 : i32
    %cst_71 = arith.constant 0.000000e+00 : f32
    %282 = vector.broadcast %cst_71 : f32 to vector<1x128xf32>
    %283 = arith.select %281, %280, %282 : vector<1x128xf32>
    %284 = arith.select %281, %280, %249 : vector<1x128xf32>
    %285 = arith.truncf %284 : vector<1x128xf32> to vector<1x128xbf16>
    %c0_72 = arith.constant 0 : index
    %c0_73 = arith.constant 0 : index
    %286 = vector.load %arg4[%c0_72, %c0_73] : memref<128x384xbf16, #tpu.memory_space<vmem>>, vector<128x384xbf16>
    %cst_74 = arith.constant dense<0.000000e+00> : vector<1x384xf32>
    %287 = tpu.matmul %285, %286, %cst_74 {dimension_numbers = #tpu.dot_dimension_numbers<[1], [0], [0], [1], [0, 0, 1, 1], [], []>} : vector<1x128xbf16>, vector<128x384xbf16>, vector<1x384xf32> -> vector<1x384xf32>
    %288 = arith.addf %287, %38 : vector<1x384xf32>
    %289 = vector.extract_strided_slice %37 {offsets = [7, 0], sizes = [1, 384], strides = [1, 1]} : vector<8x384xf32> to vector<1x384xf32>
    %290 = vector.extract_strided_slice %289 {offsets = [0, 0], sizes = [1, 128], strides = [1, 1]} : vector<1x384xf32> to vector<1x128xf32>
    %291 = vector.extract_strided_slice %288 {offsets = [0, 0], sizes = [1, 128], strides = [1, 1]} : vector<1x384xf32> to vector<1x128xf32>
    %292 = arith.addf %290, %291 : vector<1x128xf32>
    %293 = arith.negf %292 : vector<1x128xf32>
    %294 = math.exp %293 : vector<1x128xf32>
    %cst_75 = arith.constant 1.000000e+00 : f32
    %295 = vector.broadcast %cst_75 : f32 to vector<1x128xf32>
    %296 = arith.addf %295, %294 : vector<1x128xf32>
    %297 = arith.divf %295, %296 : vector<1x128xf32>
    %298 = vector.extract_strided_slice %289 {offsets = [0, 128], sizes = [1, 128], strides = [1, 1]} : vector<1x384xf32> to vector<1x128xf32>
    %299 = vector.extract_strided_slice %288 {offsets = [0, 128], sizes = [1, 128], strides = [1, 1]} : vector<1x384xf32> to vector<1x128xf32>
    %300 = arith.addf %298, %299 : vector<1x128xf32>
    %301 = arith.negf %300 : vector<1x128xf32>
    %302 = math.exp %301 : vector<1x128xf32>
    %cst_76 = arith.constant 1.000000e+00 : f32
    %303 = vector.broadcast %cst_76 : f32 to vector<1x128xf32>
    %304 = arith.addf %303, %302 : vector<1x128xf32>
    %305 = arith.divf %303, %304 : vector<1x128xf32>
    %306 = vector.extract_strided_slice %289 {offsets = [0, 256], sizes = [1, 128], strides = [1, 1]} : vector<1x384xf32> to vector<1x128xf32>
    %307 = vector.extract_strided_slice %288 {offsets = [0, 256], sizes = [1, 128], strides = [1, 1]} : vector<1x384xf32> to vector<1x128xf32>
    %308 = arith.mulf %297, %307 : vector<1x128xf32>
    %309 = arith.addf %306, %308 : vector<1x128xf32>
    %310 = math.tanh %309 : vector<1x128xf32>
    %cst_77 = arith.constant 1.000000e+00 : f32
    %311 = vector.broadcast %cst_77 : f32 to vector<1x128xf32>
    %312 = arith.subf %311, %305 : vector<1x128xf32>
    %313 = arith.mulf %312, %310 : vector<1x128xf32>
    %314 = arith.mulf %305, %284 : vector<1x128xf32>
    %315 = arith.addf %313, %314 : vector<1x128xf32>
    %c7_i32 = arith.constant 7 : i32
    %316 = arith.cmpi sgt, %0, %c7_i32 : i32
    %cst_78 = arith.constant 0.000000e+00 : f32
    %317 = vector.broadcast %cst_78 : f32 to vector<1x128xf32>
    %318 = arith.select %316, %315, %317 : vector<1x128xf32>
    %319 = arith.select %316, %315, %284 : vector<1x128xf32>
    %320 = tpu.concatenate %73, %108, %143, %178, %213, %248, %283, %318 in 0 : vector<1x128xf32>, vector<1x128xf32>, vector<1x128xf32>, vector<1x128xf32>, vector<1x128xf32>, vector<1x128xf32>, vector<1x128xf32>, vector<1x128xf32> -> vector<8x128xf32>
    %c0_79 = arith.constant 0 : index
    %c0_80 = arith.constant 0 : index
    %321 = vector.load %arg9[%c0_79, %c0_80] : memref<1x384xf32, #tpu.memory_space<vmem>>, vector<1x384xf32>
    %c0_81 = arith.constant 0 : index
    %c0_82 = arith.constant 0 : index
    %322 = vector.load %arg10[%c0_81, %c0_82] : memref<1x384xf32, #tpu.memory_space<vmem>>, vector<1x384xf32>
    %c0_83 = arith.constant 0 : index
    %c0_84 = arith.constant 0 : index
    %323 = vector.load %arg12[%c0_83, %c0_84] : memref<1x128xf32, #tpu.memory_space<vmem>>, vector<1x128xf32>
    %c0_85 = arith.constant 0 : index
    %c0_86 = arith.constant 0 : index
    %324 = vector.load %arg14[%c0_85, %c0_86] : memref<1x256xf32, #tpu.memory_space<vmem>>, vector<1x256xf32>
    %325 = tpu.iota {dimensions = array<i32: 1>} : vector<1x256xi32>
    %c1_87 = arith.constant 1 : index
    %c0_88 = arith.constant 0 : index
    %326 = vector.load %arg17[%c1_87, %c0_88] : memref<256x384xbf16, #tpu.memory_space<vmem>>, vector<1x384xbf16>
    %327 = arith.extf %326 : vector<1x384xbf16> to vector<1x384xf32>
    %328 = arith.addf %327, %321 : vector<1x384xf32>
    %c0_i32_89 = arith.constant 0 : i32
    %c10_i32 = arith.constant 10 : i32
    %329 = arith.addi %c0_i32_89, %c10_i32 : i32
    %c1_i32_90 = arith.constant 1 : i32
    %330:2 = scf.for %arg18 = %c0_i32_89 to %329 step %c1_i32_90 iter_args(%arg19 = %319, %arg20 = %328) -> (vector<1x128xf32>, vector<1x384xf32>)  : i32 {
      %331 = arith.truncf %arg19 : vector<1x128xf32> to vector<1x128xbf16>
      %c0_92 = arith.constant 0 : index
      %c0_93 = arith.constant 0 : index
      %332 = vector.load %arg8[%c0_92, %c0_93] : memref<128x384xbf16, #tpu.memory_space<vmem>>, vector<128x384xbf16>
      %cst_94 = arith.constant dense<0.000000e+00> : vector<1x384xf32>
      %333 = tpu.matmul %331, %332, %cst_94 {dimension_numbers = #tpu.dot_dimension_numbers<[1], [0], [0], [1], [0, 0, 1, 1], [], []>} : vector<1x128xbf16>, vector<128x384xbf16>, vector<1x384xf32> -> vector<1x384xf32>
      %334 = arith.addf %333, %322 : vector<1x384xf32>
      %335 = vector.extract_strided_slice %arg20 {offsets = [0, 0], sizes = [1, 128], strides = [1, 1]} : vector<1x384xf32> to vector<1x128xf32>
      %336 = vector.extract_strided_slice %334 {offsets = [0, 0], sizes = [1, 128], strides = [1, 1]} : vector<1x384xf32> to vector<1x128xf32>
      %337 = arith.addf %335, %336 : vector<1x128xf32>
      %338 = arith.negf %337 : vector<1x128xf32>
      %339 = math.exp %338 : vector<1x128xf32>
      %cst_95 = arith.constant 1.000000e+00 : f32
      %340 = vector.broadcast %cst_95 : f32 to vector<1x128xf32>
      %341 = arith.addf %340, %339 : vector<1x128xf32>
      %342 = arith.divf %340, %341 : vector<1x128xf32>
      %343 = vector.extract_strided_slice %arg20 {offsets = [0, 128], sizes = [1, 128], strides = [1, 1]} : vector<1x384xf32> to vector<1x128xf32>
      %344 = vector.extract_strided_slice %334 {offsets = [0, 128], sizes = [1, 128], strides = [1, 1]} : vector<1x384xf32> to vector<1x128xf32>
      %345 = arith.addf %343, %344 : vector<1x128xf32>
      %346 = arith.negf %345 : vector<1x128xf32>
      %347 = math.exp %346 : vector<1x128xf32>
      %cst_96 = arith.constant 1.000000e+00 : f32
      %348 = vector.broadcast %cst_96 : f32 to vector<1x128xf32>
      %349 = arith.addf %348, %347 : vector<1x128xf32>
      %350 = arith.divf %348, %349 : vector<1x128xf32>
      %351 = vector.extract_strided_slice %arg20 {offsets = [0, 256], sizes = [1, 128], strides = [1, 1]} : vector<1x384xf32> to vector<1x128xf32>
      %352 = vector.extract_strided_slice %334 {offsets = [0, 256], sizes = [1, 128], strides = [1, 1]} : vector<1x384xf32> to vector<1x128xf32>
      %353 = arith.mulf %342, %352 : vector<1x128xf32>
      %354 = arith.addf %351, %353 : vector<1x128xf32>
      %355 = math.tanh %354 : vector<1x128xf32>
      %cst_97 = arith.constant 1.000000e+00 : f32
      %356 = vector.broadcast %cst_97 : f32 to vector<1x128xf32>
      %357 = arith.subf %356, %350 : vector<1x128xf32>
      %358 = arith.mulf %357, %355 : vector<1x128xf32>
      %359 = arith.mulf %350, %arg19 : vector<1x128xf32>
      %360 = arith.addf %358, %359 : vector<1x128xf32>
      %361 = vector.broadcast %360 : vector<1x128xf32> to vector<8x128xf32>
      %362 = arith.mulf %320, %361 : vector<8x128xf32>
      %cst_98 = arith.constant dense<0.000000e+00> : vector<8xf32>
      %363 = vector.multi_reduction <add>, %362, %cst_98 [1] : vector<8x128xf32> to vector<8xf32>
      %364 = vector.shape_cast %363 : vector<8xf32> to vector<8x1xf32>
      %cst_99 = arith.constant dense<0xFF800000> : vector<1xf32>
      %365 = vector.multi_reduction <maximumf>, %364, %cst_99 [0] : vector<8x1xf32> to vector<1xf32>
      %366 = vector.shape_cast %365 : vector<1xf32> to vector<1x1xf32>
      %367 = vector.broadcast %366 : vector<1x1xf32> to vector<8x1xf32>
      %368 = arith.subf %364, %367 : vector<8x1xf32>
      %369 = math.exp %368 : vector<8x1xf32>
      %cst_100 = arith.constant dense<0.000000e+00> : vector<1xf32>
      %370 = vector.multi_reduction <add>, %369, %cst_100 [0] : vector<8x1xf32> to vector<1xf32>
      %371 = vector.shape_cast %370 : vector<1xf32> to vector<1x1xf32>
      %372 = tpu.reciprocal %371 {approx = true} : vector<1x1xf32> -> vector<1x1xf32>
      %373 = vector.broadcast %372 : vector<1x1xf32> to vector<8x1xf32>
      %374 = arith.mulf %369, %373 : vector<8x1xf32>
      %375 = vector.broadcast %374 : vector<8x1xf32> to vector<8x128xf32>
      %376 = arith.mulf %375, %320 : vector<8x128xf32>
      %cst_101 = arith.constant dense<0.000000e+00> : vector<128xf32>
      %377 = vector.multi_reduction <add>, %376, %cst_101 [0] : vector<8x128xf32> to vector<128xf32>
      %378 = vector.shape_cast %377 : vector<128xf32> to vector<1x128xf32>
      %379 = tpu.concatenate %360, %378 in 1 : vector<1x128xf32>, vector<1x128xf32> -> vector<1x256xf32>
      %380 = arith.truncf %379 : vector<1x256xf32> to vector<1x256xbf16>
      %c0_102 = arith.constant 0 : index
      %c0_103 = arith.constant 0 : index
      %381 = vector.load %arg11[%c0_102, %c0_103] : memref<256x128xbf16, #tpu.memory_space<vmem>>, vector<256x128xbf16>
      %cst_104 = arith.constant dense<0.000000e+00> : vector<1x128xf32>
      %382 = tpu.matmul %380, %381, %cst_104 {dimension_numbers = #tpu.dot_dimension_numbers<[1], [0], [0], [1], [0, 0, 1, 1], [], []>} : vector<1x256xbf16>, vector<256x128xbf16>, vector<1x128xf32> -> vector<1x128xf32>
      %383 = arith.addf %382, %323 : vector<1x128xf32>
      %384 = math.tanh %383 : vector<1x128xf32>
      %385 = arith.truncf %384 : vector<1x128xf32> to vector<1x128xbf16>
      %c0_105 = arith.constant 0 : index
      %c0_106 = arith.constant 0 : index
      %386 = vector.load %arg13[%c0_105, %c0_106] : memref<128x256xbf16, #tpu.memory_space<vmem>>, vector<128x256xbf16>
      %cst_107 = arith.constant dense<0.000000e+00> : vector<1x256xf32>
      %387 = tpu.matmul %385, %386, %cst_107 {dimension_numbers = #tpu.dot_dimension_numbers<[1], [0], [0], [1], [0, 0, 1, 1], [], []>} : vector<1x128xbf16>, vector<128x256xbf16>, vector<1x256xf32> -> vector<1x256xf32>
      %388 = arith.addf %387, %324 : vector<1x256xf32>
      %cst_108 = arith.constant dense<0xFF800000> : vector<1xf32>
      %389 = vector.multi_reduction <maximumf>, %388, %cst_108 [1] : vector<1x256xf32> to vector<1xf32>
      %390 = vector.shape_cast %389 : vector<1xf32> to vector<1x1xf32>
      %391 = vector.broadcast %390 : vector<1x1xf32> to vector<1x256xf32>
      %392 = arith.subf %388, %391 : vector<1x256xf32>
      %393 = math.exp %392 : vector<1x256xf32>
      %cst_109 = arith.constant dense<0.000000e+00> : vector<1xf32>
      %394 = vector.multi_reduction <add>, %393, %cst_109 [1] : vector<1x256xf32> to vector<1xf32>
      %395 = vector.shape_cast %394 : vector<1xf32> to vector<1x1xf32>
      %396 = vector.broadcast %390 : vector<1x1xf32> to vector<1x256xf32>
      %397 = arith.cmpf oeq, %388, %396 : vector<1x256xf32>
      %c256_i32 = arith.constant 256 : i32
      %398 = vector.broadcast %c256_i32 : i32 to vector<1x256xi32>
      %399 = arith.select %397, %325, %398 : vector<1x256xi1>, vector<1x256xi32>
      %cst_110 = arith.constant dense<2147483647> : vector<1xi32>
      %400 = vector.multi_reduction <minsi>, %399, %cst_110 [1] : vector<1x256xi32> to vector<1xi32>
      %401 = vector.shape_cast %400 : vector<1xi32> to vector<1x1xi32>
      %402 = vector.extract %401[0, 0] : i32 from vector<1x1xi32>
      %403 = arith.index_cast %arg18 : i32 to index
      %404 = memref.load %arg15[%403] : memref<10xi32, #tpu.memory_space<smem>>
      memref.store %402, %arg15[%403] : memref<10xi32, #tpu.memory_space<smem>>
      %cst_111 = arith.constant 1.000000e+00 : f32
      %405 = vector.broadcast %cst_111 : f32 to vector<1x1xf32>
      %406 = arith.divf %405, %395 : vector<1x1xf32>
      %407 = vector.extract %406[0, 0] : f32 from vector<1x1xf32>
      %408 = arith.index_cast %arg18 : i32 to index
      %409 = memref.load %arg16[%408] : memref<10xf32, #tpu.memory_space<smem>>
      memref.store %407, %arg16[%408] : memref<10xf32, #tpu.memory_space<smem>>
      %410 = vector.broadcast %401 : vector<1x1xi32> to vector<1x256xi32>
      %411 = arith.cmpi eq, %325, %410 : vector<1x256xi32>
      %412 = arith.extui %411 : vector<1x256xi1> to vector<1x256xi32>
      %413 = arith.sitofp %412 : vector<1x256xi32> to vector<1x256xf32>
      %414 = arith.truncf %413 : vector<1x256xf32> to vector<1x256xbf16>
      %c0_112 = arith.constant 0 : index
      %c0_113 = arith.constant 0 : index
      %415 = vector.load %arg17[%c0_112, %c0_113] : memref<256x384xbf16, #tpu.memory_space<vmem>>, vector<256x384xbf16>
      %cst_114 = arith.constant dense<0.000000e+00> : vector<1x384xf32>
      %416 = tpu.matmul %414, %415, %cst_114 {dimension_numbers = #tpu.dot_dimension_numbers<[1], [0], [0], [1], [0, 0, 1, 1], [], []>} : vector<1x256xbf16>, vector<256x384xbf16>, vector<1x384xf32> -> vector<1x384xf32>
      %417 = arith.addf %416, %321 : vector<1x384xf32>
      scf.yield %360, %417 : vector<1x128xf32>, vector<1x384xf32>
    }
    %c10_i32_91 = arith.constant 10 : i32
    return
  }
}

</mosaic_0001>

<llo_original>
// kernel: tpu_custom_call.1
$region0: #{tpu_custom_call.1}
  #allocation0 [shape = 'u32[]', space=smem, size = 0x4, offset = 0x4, fixed_abs, tag = 'smem constant byte address 0x4 - core index']
  #allocation1 [shape = 'u32[72,128]{1,0:T(1,128)}', space=vmem, size = 0x9000, scoped, tag = 'internal scratch']
  #allocation2 [shape = 'bf16[256,384]{1,0:T(8,128)(2,1)}', space=vmem, size = 0x30000, scoped, tag = 'scratch operand']
  #allocation3 [shape = 's32[1]{0:T(128)S(6)}', space=smem, size = 0x200, scoped, tag = 'scoped memory for tpu_custom_call.1']
  %s0 = inlined_call_operand.hbm [shape: s32[8], index: 0, kind: input, shape index: {}]
  %s1 = inlined_call_operand.<no memory space> [shape: s32[1], index: 1, kind: input, shape index: {}]
  %s2 = inlined_call_operand.hbm [shape: f32[256,128], index: 2, kind: input, shape index: {}]
  %s3 = inlined_call_operand.hbm [shape: bf16[128,384], index: 3, kind: input, shape index: {}]
  %s4 = inlined_call_operand.hbm [shape: bf16[128,384], index: 4, kind: input, shape index: {}]
  %s5 = inlined_call_operand.vmem [shape: f32[1,384], index: 5, kind: input, shape index: {}]
  %s6 = inlined_call_operand.vmem [shape: f32[1,384], index: 6, kind: input, shape index: {}]
  %s7 = inlined_call_operand.hbm [shape: bf16[128,384], index: 7, kind: input, shape index: {}]
  %s8 = inlined_call_operand.hbm [shape: bf16[128,384], index: 8, kind: input, shape index: {}]
  %s9 = inlined_call_operand.vmem [shape: f32[1,384], index: 9, kind: input, shape index: {}]
  %s10 = inlined_call_operand.hbm [shape: f32[1,384], index: 10, kind: input, shape index: {}]
  %s11 = inlined_call_operand.hbm [shape: bf16[256,128], index: 11, kind: input, shape index: {}]
  %s12 = inlined_call_operand.vmem [shape: f32[1,128], index: 12, kind: input, shape index: {}]
  %s13 = inlined_call_operand.hbm [shape: bf16[128,256], index: 13, kind: input, shape index: {}]
  %s14 = inlined_call_operand.vmem [shape: f32[1,256], index: 14, kind: input, shape index: {}]
  %s15 = inlined_call_operand.hbm [shape: s32[10], index: 15, kind: output, shape index: {0}]
  %s16 = inlined_call_operand.hbm [shape: f32[10], index: 16, kind: output, shape index: {1}]
  %17 = xla_tuple %s15, %s16
  %s18 = sld [smem:[#allocation0]]
  $region121: #{tpu_custom_call.1} parent=0
    _
  %s20 = ssub.s32 1, %s18
  %s21 = scalar_select 0, %s20, %s18
  %22 = sst [smem:[#allocation3]] %s1
  $region1: #{tpu_custom_call.1} parent=0
    #allocation4 [shape = 'u8[512]{0}', space=smem, size = 0x200, scoped, tag = 'input window, operand 0, single buffered']
    #allocation5 [shape = 's32[1]{0}', space=sflag, size = 0x4, scoped, tag = 'scoped memory for tpu_custom_call.1']
    #allocation6 [shape = 's32[1]{0}', space=sflag, size = 0x4, scoped, tag = 'scoped memory for tpu_custom_call.1']
    #allocation7 [shape = 's32[1]{0}', space=sflag, size = 0x4, scoped, tag = 'scoped memory for tpu_custom_call.1']
    #allocation8 [shape = 'u8[131072]{0}', space=vmem, size = 0x20000, scoped, tag = 'input window, operand 2, single buffered']
    #allocation9 [shape = 'u8[98304]{0}', space=vmem, size = 0x18000, scoped, tag = 'input window, operand 3, single buffered']
    #allocation10 [shape = 's32[1]{0}', space=sflag, size = 0x4, scoped, tag = 'scoped memory for tpu_custom_call.1']
    #allocation11 [shape = 'u8[98304]{0}', space=vmem, size = 0x18000, scoped, tag = 'input window, operand 4, single buffered']
    #allocation12 [shape = 'u8[98304]{0}', space=vmem, size = 0x18000, scoped, tag = 'input window, operand 7, single buffered']
    #allocation13 [shape = 's32[1]{0}', space=sflag, size = 0x4, scoped, tag = 'scoped memory for tpu_custom_call.1']
    #allocation14 [shape = 'u8[98304]{0}', space=vmem, size = 0x18000, scoped, tag = 'input window, operand 8, single buffered']
    #allocation15 [shape = 'u8[1536]{0}', space=vmem, size = 0x800, scoped, tag = 'input window, operand 10, single buffered']
    #allocation16 [shape = 's32[1]{0}', space=sflag, size = 0x4, scoped, tag = 'scoped memory for tpu_custom_call.1']
    #allocation17 [shape = 'u8[65536]{0}', space=vmem, size = 0x10000, scoped, tag = 'input window, operand 11, single buffered']
    #allocation18 [shape = 'u8[65536]{0}', space=vmem, size = 0x10000, scoped, tag = 'input window, operand 13, single buffered']
    #allocation19 [shape = 's32[1]{0}', space=sflag, size = 0x4, scoped, tag = 'scoped memory for tpu_custom_call.1']
    #allocation20 [shape = 'u8[512]{0}', space=smem, size = 0x200, scoped, tag = 'output window, operand 0, single buffered']
    #allocation21 [shape = 'u8[512]{0}', space=smem, size = 0x200, scoped, tag = 'output window, operand 1, single buffered']
    #allocation22 [shape = 's32[1]{0}', space=sflag, size = 0x4, scoped, tag = 'scoped memory for tpu_custom_call.1']
    %23 = vsyncpa [#allocation6], 0
    %24 = vsyncpa [#allocation5], 0
    %25 = vsyncpa [#allocation10], 0
    %26 = vsyncpa [#allocation13], 0
    %27 = vsyncpa [#allocation16], 0
    %28 = vsyncpa [#allocation19], 0
    %29 = vsyncpa [#allocation7], 0
    %30 = vsyncpa [#allocation22], 0
    // Predicated region
    $region2: #{tpu_custom_call.1} parent=1 // pred_check
      _
    $region3: #{tpu_custom_call.1} parent=1 // pred_check_branch
      %32 = sbr.rel (0) target = $region5
    $region4: #{tpu_custom_call.1} parent=1 // pred_region
      %34 = vsyncadd [#allocation6], 0
      %s36 = sshll.u32 %s0, 4
      %s37 = int_to_ptr.hbm [resolvable:$true] %s36
      %39 = dma.hbm_to_smem %s37, 16, [#allocation4], [#allocation6]
    $region5: #{tpu_custom_call.1} parent=1 // pred_fallthru
      _
    // Predicated region
    $region6: #{tpu_custom_call.1} parent=1 // pred_check
      _
    $region7: #{tpu_custom_call.1} parent=1 // pred_check_branch
      %41 = sbr.rel (0) target = $region9
    $region8: #{tpu_custom_call.1} parent=1 // pred_region
      _
    $region9: #{tpu_custom_call.1} parent=1 // pred_fallthru
      _
    // Predicated region
    $region10: #{tpu_custom_call.1} parent=1 // pred_check
      _
    $region11: #{tpu_custom_call.1} parent=1 // pred_check_branch
      %43 = sbr.rel (0) target = $region13
    $region12: #{tpu_custom_call.1} parent=1 // pred_region
      %45 = vsyncadd [#allocation5], 0
      %s46 = sshll.u32 %s2, 4
      %s47 = int_to_ptr.hbm [resolvable:$true] %s46
      %s48 = sshll.u32 [#allocation8], 4
      %s49 = int_to_ptr.vmem [resolvable:$true] %s48
      %54 = dma.hbm_to_vmem [thread:$0]  %s47, 4096, %s49, [#allocation5], 128, 128, 8
    $region13: #{tpu_custom_call.1} parent=1 // pred_fallthru
      _
    // Predicated region
    $region14: #{tpu_custom_call.1} parent=1 // pred_check
      _
    $region15: #{tpu_custom_call.1} parent=1 // pred_check_branch
      %56 = sbr.rel (0) target = $region17
    $region16: #{tpu_custom_call.1} parent=1 // pred_region
      %58 = vsyncadd [#allocation10], 0
      %s59 = sshll.u32 %s3, 4
      %s60 = int_to_ptr.hbm [resolvable:$true] %s59
      %s61 = sshll.u32 [#allocation9], 4
      %s62 = int_to_ptr.vmem [resolvable:$true] %s61
      %67 = dma.hbm_to_vmem [thread:$0]  %s60, 3072, %s62, [#allocation10], 192, 192, 12
    $region17: #{tpu_custom_call.1} parent=1 // pred_fallthru
      _
    // Predicated region
    $region18: #{tpu_custom_call.1} parent=1 // pred_check
      _
    $region19: #{tpu_custom_call.1} parent=1 // pred_check_branch
      %69 = sbr.rel (0) target = $region21
    $region20: #{tpu_custom_call.1} parent=1 // pred_region
      %71 = vsyncadd [#allocation10], 0
      %s72 = sshll.u32 %s4, 4
      %s73 = int_to_ptr.hbm [resolvable:$true] %s72
      %s74 = sshll.u32 [#allocation11], 4
      %s75 = int_to_ptr.vmem [resolvable:$true] %s74
      %80 = dma.hbm_to_vmem [thread:$0]  %s73, 3072, %s75, [#allocation10], 192, 192, 12
    $region21: #{tpu_custom_call.1} parent=1 // pred_fallthru
      _
    // Predicated region
    $region22: #{tpu_custom_call.1} parent=1 // pred_check
      _
    $region23: #{tpu_custom_call.1} parent=1 // pred_check_branch
      %82 = sbr.rel (0) target = $region25
    $region24: #{tpu_custom_call.1} parent=1 // pred_region
      _
    $region25: #{tpu_custom_call.1} parent=1 // pred_fallthru
      _
    // Predicated region
    $region26: #{tpu_custom_call.1} parent=1 // pred_check
      _
    $region27: #{tpu_custom_call.1} parent=1 // pred_check_branch
      %84 = sbr.rel (0) target = $region29
    $region28: #{tpu_custom_call.1} parent=1 // pred_region
      _
    $region29: #{tpu_custom_call.1} parent=1 // pred_fallthru
      _
    // Predicated region
    $region30: #{tpu_custom_call.1} parent=1 // pred_check
      _
    $region31: #{tpu_custom_call.1} parent=1 // pred_check_branch
      %86 = sbr.rel (0) target = $region33
    $region32: #{tpu_custom_call.1} parent=1 // pred_region
      %88 = vsyncadd [#allocation13], 0
      %s89 = sshll.u32 %s7, 4
      %s90 = int_to_ptr.hbm [resolvable:$true] %s89
      %s91 = sshll.u32 [#allocation12], 4
      %s92 = int_to_ptr.vmem [resolvable:$true] %s91
      %97 = dma.hbm_to_vmem [thread:$0]  %s90, 3072, %s92, [#allocation13], 192, 192, 12
    $region33: #{tpu_custom_call.1} parent=1 // pred_fallthru
      _
    // Predicated region
    $region34: #{tpu_custom_call.1} parent=1 // pred_check
      _
    $region35: #{tpu_custom_call.1} parent=1 // pred_check_branch
      %99 = sbr.rel (0) target = $region37
    $region36: #{tpu_custom_call.1} parent=1 // pred_region
      %101 = vsyncadd [#allocation13], 0
      %s102 = sshll.u32 %s8, 4
      %s103 = int_to_ptr.hbm [resolvable:$true] %s102
      %s104 = sshll.u32 [#allocation14], 4
      %s105 = int_to_ptr.vmem [resolvable:$true] %s104
      %110 = dma.hbm_to_vmem [thread:$0]  %s103, 3072, %s105, [#allocation13], 192, 192, 12
    $region37: #{tpu_custom_call.1} parent=1 // pred_fallthru
      _
    // Predicated region
    $region38: #{tpu_custom_call.1} parent=1 // pred_check
      _
    $region39: #{tpu_custom_call.1} parent=1 // pred_check_branch
      %112 = sbr.rel (0) target = $region41
    $region40: #{tpu_custom_call.1} parent=1 // pred_region
      _
    $region41: #{tpu_custom_call.1} parent=1 // pred_fallthru
      _
    // Predicated region
    $region42: #{tpu_custom_call.1} parent=1 // pred_check
      _
    $region43: #{tpu_custom_call.1} parent=1 // pred_check_branch
      %114 = sbr.rel (0) target = $region45
    $region44: #{tpu_custom_call.1} parent=1 // pred_region
      %116 = vsyncadd [#allocation16], 0
      %s118 = sshll.u32 %s10, 4
      %s119 = int_to_ptr.hbm [resolvable:$true] %s118
      %s120 = sshll.u32 [#allocation15], 4
      %s121 = int_to_ptr.vmem [resolvable:$true] %s120
      %123 = dma.hbm_to_vmem [thread:$0]  %s119, 48, %s121, [#allocation16]
    $region45: #{tpu_custom_call.1} parent=1 // pred_fallthru
      _
    // Predicated region
    $region46: #{tpu_custom_call.1} parent=1 // pred_check
      _
    $region47: #{tpu_custom_call.1} parent=1 // pred_check_branch
      %125 = sbr.rel (0) target = $region49
    $region48: #{tpu_custom_call.1} parent=1 // pred_region
      %127 = vsyncadd [#allocation16], 0
      %s128 = sshll.u32 %s11, 4
      %s129 = int_to_ptr.hbm [resolvable:$true] %s128
      %s130 = sshll.u32 [#allocation17], 4
      %s131 = int_to_ptr.vmem [resolvable:$true] %s130
      %136 = dma.hbm_to_vmem [thread:$0]  %s129, 2048, %s131, [#allocation16], 64, 64, 4
    $region49: #{tpu_custom_call.1} parent=1 // pred_fallthru
      _
    // Predicated region
    $region50: #{tpu_custom_call.1} parent=1 // pred_check
      _
    $region51: #{tpu_custom_call.1} parent=1 // pred_check_branch
      %138 = sbr.rel (0) target = $region53
    $region52: #{tpu_custom_call.1} parent=1 // pred_region
      _
    $region53: #{tpu_custom_call.1} parent=1 // pred_fallthru
      _
    // Predicated region
    $region54: #{tpu_custom_call.1} parent=1 // pred_check
      _
    $region55: #{tpu_custom_call.1} parent=1 // pred_check_branch
      %140 = sbr.rel (0) target = $region57
    $region56: #{tpu_custom_call.1} parent=1 // pred_region
      %142 = vsyncadd [#allocation19], 0
      %s143 = sshll.u32 %s13, 4
      %s144 = int_to_ptr.hbm [resolvable:$true] %s143
      %s145 = sshll.u32 [#allocation18], 4
      %s146 = int_to_ptr.vmem [resolvable:$true] %s145
      %151 = dma.hbm_to_vmem [thread:$0]  %s144, 2048, %s146, [#allocation19], 128, 128, 8
    $region57: #{tpu_custom_call.1} parent=1 // pred_fallthru
      _
    // Predicated region
    $region58: #{tpu_custom_call.1} parent=1 // pred_check
      _
    $region59: #{tpu_custom_call.1} parent=1 // pred_check_branch
      %153 = sbr.rel (0) target = $region61
    $region60: #{tpu_custom_call.1} parent=1 // pred_region
      _
    $region61: #{tpu_custom_call.1} parent=1 // pred_fallthru
      _
    // Predicated region
    $region62: #{tpu_custom_call.1} parent=1 // pred_check
      _
    $region63: #{tpu_custom_call.1} parent=1 // pred_check_branch
      %155 = sbr.rel (0) target = $region65
    $region64: #{tpu_custom_call.1} parent=1 // pred_region
      %157 = dma.done [#allocation6], 16
    $region65: #{tpu_custom_call.1} parent=1 // pred_fallthru
      _
    // Predicated region
    $region66: #{tpu_custom_call.1} parent=1 // pred_check
      _
    $region67: #{tpu_custom_call.1} parent=1 // pred_check_branch
      %159 = sbr.rel (0) target = $region69
    $region68: #{tpu_custom_call.1} parent=1 // pred_region
      %161 = dma.done [#allocation5], 4096
    $region69: #{tpu_custom_call.1} parent=1 // pred_fallthru
      _
    // Predicated region
    $region70: #{tpu_custom_call.1} parent=1 // pred_check
      _
    $region71: #{tpu_custom_call.1} parent=1 // pred_check_branch
      %163 = sbr.rel (0) target = $region73
    $region72: #{tpu_custom_call.1} parent=1 // pred_region
      %165 = dma.done [#allocation10], 3072
    $region73: #{tpu_custom_call.1} parent=1 // pred_fallthru
      _
    // Predicated region
    $region74: #{tpu_custom_call.1} parent=1 // pred_check
      _
    $region75: #{tpu_custom_call.1} parent=1 // pred_check_branch
      %167 = sbr.rel (0) target = $region77
    $region76: #{tpu_custom_call.1} parent=1 // pred_region
      %169 = dma.done [#allocation10], 3072
    $region77: #{tpu_custom_call.1} parent=1 // pred_fallthru
      _
    // Predicated region
    $region78: #{tpu_custom_call.1} parent=1 // pred_check
      _
    $region79: #{tpu_custom_call.1} parent=1 // pred_check_branch
      %171 = sbr.rel (0) target = $region81
    $region80: #{tpu_custom_call.1} parent=1 // pred_region
      %173 = dma.done [#allocation13], 3072
    $region81: #{tpu_custom_call.1} parent=1 // pred_fallthru
      _
    // Predicated region
    $region82: #{tpu_custom_call.1} parent=1 // pred_check
      _
    $region83: #{tpu_custom_call.1} parent=1 // pred_check_branch
      %175 = sbr.rel (0) target = $region85
    $region84: #{tpu_custom_call.1} parent=1 // pred_region
      %177 = dma.done [#allocation13], 3072
    $region85: #{tpu_custom_call.1} parent=1 // pred_fallthru
      _
    // Predicated region
    $region86: #{tpu_custom_call.1} parent=1 // pred_check
      _
    $region87: #{tpu_custom_call.1} parent=1 // pred_check_branch
      %179 = sbr.rel (0) target = $region89
    $region88: #{tpu_custom_call.1} parent=1 // pred_region
      %181 = dma.done [#allocation16], 48
    $region89: #{tpu_custom_call.1} parent=1 // pred_fallthru
      _
    // Predicated region
    $region90: #{tpu_custom_call.1} parent=1 // pred_check
      _
    $region91: #{tpu_custom_call.1} parent=1 // pred_check_branch
      %183 = sbr.rel (0) target = $region93
    $region92: #{tpu_custom_call.1} parent=1 // pred_region
      %185 = dma.done [#allocation16], 2048
    $region93: #{tpu_custom_call.1} parent=1 // pred_fallthru
      _
    // Predicated region
    $region94: #{tpu_custom_call.1} parent=1 // pred_check
      _
    $region95: #{tpu_custom_call.1} parent=1 // pred_check_branch
      %187 = sbr.rel (0) target = $region97
    $region96: #{tpu_custom_call.1} parent=1 // pred_region
      %189 = dma.done [#allocation19], 2048
    $region97: #{tpu_custom_call.1} parent=1 // pred_fallthru
      _
    %190 = sfence
    %s192 = sld [smem:[#allocation3]]
    %v193 = vld [vmem:[#allocation8] sm:$0xff]
    %v194 = vld [vmem:[#allocation8 + $0x8] sm:$0xff]
    %v195 = vld [vmem:[#allocation8 + $0x10] sm:$0xff]
    %v196 = vld [vmem:[#allocation8 + $0x18] sm:$0xff]
    %v197 = vld [vmem:[#allocation8 + $0x20] sm:$0xff]
    %v198 = vld [vmem:[#allocation8 + $0x28] sm:$0xff]
    %v199 = vld [vmem:[#allocation8 + $0x30] sm:$0xff]
    %v200 = vld [vmem:[#allocation8 + $0x38] sm:$0xff]
    %v201 = vld [vmem:[#allocation8 + $0x40] sm:$0xff]
    %v202 = vld [vmem:[#allocation8 + $0x48] sm:$0xff]
    %v203 = vld [vmem:[#allocation8 + $0x50] sm:$0xff]
    %v204 = vld [vmem:[#allocation8 + $0x58] sm:$0xff]
    %v205 = vld [vmem:[#allocation8 + $0x60] sm:$0xff]
    %v206 = vld [vmem:[#allocation8 + $0x68] sm:$0xff]
    %v207 = vld [vmem:[#allocation8 + $0x70] sm:$0xff]
    %v208 = vld [vmem:[#allocation8 + $0x78] sm:$0xff]
    %v209 = vld [vmem:[#allocation8 + $0x80] sm:$0xff]
    %v210 = vld [vmem:[#allocation8 + $0x88] sm:$0xff]
    %v211 = vld [vmem:[#allocation8 + $0x90] sm:$0xff]
    %v212 = vld [vmem:[#allocation8 + $0x98] sm:$0xff]
    %v213 = vld [vmem:[#allocation8 + $0xa0] sm:$0xff]
    %v214 = vld [vmem:[#allocation8 + $0xa8] sm:$0xff]
    %v215 = vld [vmem:[#allocation8 + $0xb0] sm:$0xff]
    %v216 = vld [vmem:[#allocation8 + $0xb8] sm:$0xff]
    %v217 = vld [vmem:[#allocation8 + $0xc0] sm:$0xff]
    %v218 = vld [vmem:[#allocation8 + $0xc8] sm:$0xff]
    %v219 = vld [vmem:[#allocation8 + $0xd0] sm:$0xff]
    %v220 = vld [vmem:[#allocation8 + $0xd8] sm:$0xff]
    %v221 = vld [vmem:[#allocation8 + $0xe0] sm:$0xff]
    %v222 = vld [vmem:[#allocation8 + $0xe8] sm:$0xff]
    %v223 = vld [vmem:[#allocation8 + $0xf0] sm:$0xff]
    %v224 = vld [vmem:[#allocation8 + $0xf8] sm:$0xff]
    %v225 = vpack.c.bf16 %v194, %v193
    %v226 = vpack.c.bf16 %v196, %v195
    %v227 = vpack.c.bf16 %v198, %v197
    %v228 = vpack.c.bf16 %v200, %v199
    %v229 = vpack.c.bf16 %v202, %v201
    %v230 = vpack.c.bf16 %v204, %v203
    %v231 = vpack.c.bf16 %v206, %v205
    %v232 = vpack.c.bf16 %v208, %v207
    %v233 = vpack.c.bf16 %v210, %v209
    %v234 = vpack.c.bf16 %v212, %v211
    %v235 = vpack.c.bf16 %v214, %v213
    %v236 = vpack.c.bf16 %v216, %v215
    %v237 = vpack.c.bf16 %v218, %v217
    %v238 = vpack.c.bf16 %v220, %v219
    %v239 = vpack.c.bf16 %v222, %v221
    %v240 = vpack.c.bf16 %v224, %v223
    %v241 = vld [vmem:[#allocation12] sm:$0xff]
    %v242 = vld [vmem:[#allocation12 + $0x8] sm:$0xf]
    %v243 = vld [vmem:[#allocation12 + $0xc] sm:$0xff]
    %v244 = vld [vmem:[#allocation12 + $0x14] sm:$0xf]
    %v245 = vld [vmem:[#allocation12 + $0x18] sm:$0xff]
    %v246 = vld [vmem:[#allocation12 + $0x20] sm:$0xf]
    %v247 = vld [vmem:[#allocation12 + $0x24] sm:$0xff]
    %v248 = vld [vmem:[#allocation12 + $0x2c] sm:$0xf]
    %v249 = vld [vmem:[#allocation12 + $0x30] sm:$0xff]
    %v250 = vld [vmem:[#allocation12 + $0x38] sm:$0xf]
    %v251 = vld [vmem:[#allocation12 + $0x3c] sm:$0xff]
    %v252 = vld [vmem:[#allocation12 + $0x44] sm:$0xf]
    %v253 = vld [vmem:[#allocation12 + $0x48] sm:$0xff]
    %v254 = vld [vmem:[#allocation12 + $0x50] sm:$0xf]
    %v255 = vld [vmem:[#allocation12 + $0x54] sm:$0xff]
    %v256 = vld [vmem:[#allocation12 + $0x5c] sm:$0xf]
    %v257 = vld [vmem:[#allocation12 + $0x60] sm:$0xff]
    %v258 = vld [vmem:[#allocation12 + $0x68] sm:$0xf]
    %v259 = vld [vmem:[#allocation12 + $0x6c] sm:$0xff]
    %v260 = vld [vmem:[#allocation12 + $0x74] sm:$0xf]
    %v261 = vld [vmem:[#allocation12 + $0x78] sm:$0xff]
    %v262 = vld [vmem:[#allocation12 + $0x80] sm:$0xf]
    %v263 = vld [vmem:[#allocation12 + $0x84] sm:$0xff]
    %v264 = vld [vmem:[#allocation12 + $0x8c] sm:$0xf]
    %v265 = vld [vmem:[#allocation12 + $0x90] sm:$0xff]
    %v266 = vld [vmem:[#allocation12 + $0x98] sm:$0xf]
    %v267 = vld [vmem:[#allocation12 + $0x9c] sm:$0xff]
    %v268 = vld [vmem:[#allocation12 + $0xa4] sm:$0xf]
    %v269 = vld [vmem:[#allocation12 + $0xa8] sm:$0xff]
    %v270 = vld [vmem:[#allocation12 + $0xb0] sm:$0xf]
    %v271 = vld [vmem:[#allocation12 + $0xb4] sm:$0xff]
    %v272 = vld [vmem:[#allocation12 + $0xbc] sm:$0xf]
    %v305 = vunpack.c.l.b16 %v241
    %v306 = vunpack.c.h.b16 %v241
    %v307 = vunpack.c.l.b16 %v242
    %v308 = vunpack.c.l.b16 %v243
    %v309 = vunpack.c.h.b16 %v243
    %v310 = vunpack.c.l.b16 %v244
    %v311 = vunpack.c.l.b16 %v245
    %v312 = vunpack.c.h.b16 %v245
    %v313 = vunpack.c.l.b16 %v246
    %v314 = vunpack.c.l.b16 %v247
    %v315 = vunpack.c.h.b16 %v247
    %v316 = vunpack.c.l.b16 %v248
    %v317 = vunpack.c.l.b16 %v249
    %v318 = vunpack.c.h.b16 %v249
    %v319 = vunpack.c.l.b16 %v250
    %v320 = vunpack.c.l.b16 %v251
    %v321 = vunpack.c.h.b16 %v251
    %v322 = vunpack.c.l.b16 %v252
    %v323 = vunpack.c.l.b16 %v253
    %v324 = vunpack.c.h.b16 %v253
    %v325 = vunpack.c.l.b16 %v254
    %v326 = vunpack.c.l.b16 %v255
    %v327 = vunpack.c.h.b16 %v255
    %v328 = vunpack.c.l.b16 %v256
    %v329 = vunpack.c.l.b16 %v257
    %v330 = vunpack.c.h.b16 %v257
    %v331 = vunpack.c.l.b16 %v258
    %v332 = vunpack.c.l.b16 %v259
    %v333 = vunpack.c.h.b16 %v259
    %v334 = vunpack.c.l.b16 %v260
    %v335 = vunpack.c.l.b16 %v261
    %v336 = vunpack.c.h.b16 %v261
    %v337 = vunpack.c.l.b16 %v262
    %v338 = vunpack.c.l.b16 %v263
    %v339 = vunpack.c.h.b16 %v263
    %v340 = vunpack.c.l.b16 %v264
    %v341 = vunpack.c.l.b16 %v265
    %v342 = vunpack.c.h.b16 %v265
    %v343 = vunpack.c.l.b16 %v266
    %v344 = vunpack.c.l.b16 %v267
    %v345 = vunpack.c.h.b16 %v267
    %v346 = vunpack.c.l.b16 %v268
    %v347 = vunpack.c.l.b16 %v269
    %v348 = vunpack.c.h.b16 %v269
    %v349 = vunpack.c.l.b16 %v270
    %v350 = vunpack.c.l.b16 %v271
    %v351 = vunpack.c.h.b16 %v271
    %v352 = vunpack.c.l.b16 %v272
    %v353 = vpack.c.b16 %v308, %v305
    %v354 = vpack.c.b16 %v309, %v306
    %v355 = vpack.c.b16 %v310, %v307
    %v356 = vpack.c.b16 %v314, %v311
    %v357 = vpack.c.b16 %v315, %v312
    %v358 = vpack.c.b16 %v316, %v313
    %v359 = vpack.c.b16 %v320, %v317
    %v360 = vpack.c.b16 %v321, %v318
    %v361 = vpack.c.b16 %v322, %v319
    %v362 = vpack.c.b16 %v326, %v323
    %v363 = vpack.c.b16 %v327, %v324
    %v364 = vpack.c.b16 %v328, %v325
    %v365 = vpack.c.b16 %v332, %v329
    %v366 = vpack.c.b16 %v333, %v330
    %v367 = vpack.c.b16 %v334, %v331
    %v368 = vpack.c.b16 %v338, %v335
    %v369 = vpack.c.b16 %v339, %v336
    %v370 = vpack.c.b16 %v340, %v337
    %v371 = vpack.c.b16 %v344, %v341
    %v372 = vpack.c.b16 %v345, %v342
    %v373 = vpack.c.b16 %v346, %v343
    %v374 = vpack.c.b16 %v350, %v347
    %v375 = vpack.c.b16 %v351, %v348
    %v376 = vpack.c.b16 %v352, %v349
    %401 = vmatpush.bf16.msra.mxu0 %v374
    %402 = vmatpush.bf16.msra.mxu0 %v371
    %403 = vmatpush.bf16.msra.mxu0 %v368
    %404 = vmatpush.bf16.msra.mxu0 %v365
    %405 = vmatpush.bf16.msra.mxu0 %v362
    %406 = vmatpush.bf16.msra.mxu0 %v359
    %407 = vmatpush.bf16.msra.mxu0 %v356
    %408 = vmatpush.bf16.msra.mxu0 %v353
    %409 = vmatmul.bf16.gmra.mxu0 %v225
    %v410 = vpop.f32.mrf.mxu0
    %v411 = vadd.f32 0.0, %v410
    %v412 = vpop.f32.mrf.mxu0
    %v413 = vadd.f32 0.0, %v412
    %414 = vmatmul.bf16.gmra.mxu0 %v226
    %v415 = vpop.f32.mrf.mxu0
    %v416 = vadd.f32 0.0, %v415
    %v417 = vpop.f32.mrf.mxu0
    %v418 = vadd.f32 0.0, %v417
    %419 = vmatmul.bf16.gmra.mxu0 %v227
    %v420 = vpop.f32.mrf.mxu0
    %v421 = vadd.f32 0.0, %v420
    %v422 = vpop.f32.mrf.mxu0
    %v423 = vadd.f32 0.0, %v422
    %424 = vmatmul.bf16.gmra.mxu0 %v228
    %v425 = vpop.f32.mrf.mxu0
    %v426 = vadd.f32 0.0, %v425
    %v427 = vpop.f32.mrf.mxu0
    %v428 = vadd.f32 0.0, %v427
    %429 = vmatmul.bf16.gmra.mxu0 %v229
    %v430 = vpop.f32.mrf.mxu0
    %v431 = vadd.f32 0.0, %v430
    %v432 = vpop.f32.mrf.mxu0
    %v433 = vadd.f32 0.0, %v432
    %434 = vmatmul.bf16.gmra.mxu0 %v230
    %v435 = vpop.f32.mrf.mxu0
    %v436 = vadd.f32 0.0, %v435
    %v437 = vpop.f32.mrf.mxu0
    %v438 = vadd.f32 0.0, %v437
    %439 = vmatmul.bf16.gmra.mxu0 %v231
    %v440 = vpop.f32.mrf.mxu0
    %v441 = vadd.f32 0.0, %v440
    %v442 = vpop.f32.mrf.mxu0
    %v443 = vadd.f32 0.0, %v442
    %444 = vmatmul.bf16.gmra.mxu0 %v232
    %v445 = vpop.f32.mrf.mxu0
    %v446 = vadd.f32 0.0, %v445
    %v447 = vpop.f32.mrf.mxu0
    %v448 = vadd.f32 0.0, %v447
    %449 = vmatmul.bf16.gmra.mxu0 %v233
    %v450 = vpop.f32.mrf.mxu0
    %v451 = vadd.f32 0.0, %v450
    %v452 = vpop.f32.mrf.mxu0
    %v453 = vadd.f32 0.0, %v452
    %454 = vmatmul.bf16.gmra.mxu0 %v234
    %v455 = vpop.f32.mrf.mxu0
    %v456 = vadd.f32 0.0, %v455
    %v457 = vpop.f32.mrf.mxu0
    %v458 = vadd.f32 0.0, %v457
    %459 = vmatmul.bf16.gmra.mxu0 %v235
    %v460 = vpop.f32.mrf.mxu0
    %v461 = vadd.f32 0.0, %v460
    %v462 = vpop.f32.mrf.mxu0
    %v463 = vadd.f32 0.0, %v462
    %464 = vmatmul.bf16.gmra.mxu0 %v236
    %v465 = vpop.f32.mrf.mxu0
    %v466 = vadd.f32 0.0, %v465
    %v467 = vpop.f32.mrf.mxu0
    %v468 = vadd.f32 0.0, %v467
    %469 = vmatmul.bf16.gmra.mxu0 %v237
    %v470 = vpop.f32.mrf.mxu0
    %v471 = vadd.f32 0.0, %v470
    %v472 = vpop.f32.mrf.mxu0
    %v473 = vadd.f32 0.0, %v472
    %474 = vmatmul.bf16.gmra.mxu0 %v238
    %v475 = vpop.f32.mrf.mxu0
    %v476 = vadd.f32 0.0, %v475
    %v477 = vpop.f32.mrf.mxu0
    %v478 = vadd.f32 0.0, %v477
    %479 = vmatmul.bf16.gmra.mxu0 %v239
    %v480 = vpop.f32.mrf.mxu0
    %v481 = vadd.f32 0.0, %v480
    %v482 = vpop.f32.mrf.mxu0
    %v483 = vadd.f32 0.0, %v482
    %484 = vmatmul.bf16.gmra.mxu0 %v240
    %v485 = vpop.f32.mrf.mxu0
    %v486 = vadd.f32 0.0, %v485
    %v487 = vpop.f32.mrf.mxu0
    %v488 = vadd.f32 0.0, %v487
    %489 = vdwg.mxu0
    %490 = vmatpush.bf16.msra.mxu0 %v375
    %491 = vmatpush.bf16.msra.mxu0 %v372
    %492 = vmatpush.bf16.msra.mxu0 %v369
    %493 = vmatpush.bf16.msra.mxu0 %v366
    %494 = vmatpush.bf16.msra.mxu0 %v363
    %495 = vmatpush.bf16.msra.mxu0 %v360
    %496 = vmatpush.bf16.msra.mxu0 %v357
    %497 = vmatpush.bf16.msra.mxu0 %v354
    %498 = vmatmul.bf16.gmra.mxu0 %v225
    %v499 = vpop.f32.mrf.mxu0
    %v500 = vadd.f32 0.0, %v499
    %v501 = vpop.f32.mrf.mxu0
    %v502 = vadd.f32 0.0, %v501
    %503 = vmatmul.bf16.gmra.mxu0 %v226
    %v504 = vpop.f32.mrf.mxu0
    %v505 = vadd.f32 0.0, %v504
    %v506 = vpop.f32.mrf.mxu0
    %v507 = vadd.f32 0.0, %v506
    %508 = vmatmul.bf16.gmra.mxu0 %v227
    %v509 = vpop.f32.mrf.mxu0
    %v510 = vadd.f32 0.0, %v509
    %v511 = vpop.f32.mrf.mxu0
    %v512 = vadd.f32 0.0, %v511
    %513 = vmatmul.bf16.gmra.mxu0 %v228
    %v514 = vpop.f32.mrf.mxu0
    %v515 = vadd.f32 0.0, %v514
    %v516 = vpop.f32.mrf.mxu0
    %v517 = vadd.f32 0.0, %v516
    %518 = vmatmul.bf16.gmra.mxu0 %v229
    %v519 = vpop.f32.mrf.mxu0
    %v520 = vadd.f32 0.0, %v519
    %v521 = vpop.f32.mrf.mxu0
    %v522 = vadd.f32 0.0, %v521
    %523 = vmatmul.bf16.gmra.mxu0 %v230
    %v524 = vpop.f32.mrf.mxu0
    %v525 = vadd.f32 0.0, %v524
    %v526 = vpop.f32.mrf.mxu0
    %v527 = vadd.f32 0.0, %v526
    %528 = vmatmul.bf16.gmra.mxu0 %v231
    %v529 = vpop.f32.mrf.mxu0
    %v530 = vadd.f32 0.0, %v529
    %v531 = vpop.f32.mrf.mxu0
    %v532 = vadd.f32 0.0, %v531
    %533 = vmatmul.bf16.gmra.mxu0 %v232
    %v534 = vpop.f32.mrf.mxu0
    %v535 = vadd.f32 0.0, %v534
    %v536 = vpop.f32.mrf.mxu0
    %v537 = vadd.f32 0.0, %v536
    %538 = vmatmul.bf16.gmra.mxu0 %v233
    %v539 = vpop.f32.mrf.mxu0
    %v540 = vadd.f32 0.0, %v539
    %v541 = vpop.f32.mrf.mxu0
    %v542 = vadd.f32 0.0, %v541
    %543 = vmatmul.bf16.gmra.mxu0 %v234
    %v544 = vpop.f32.mrf.mxu0
    %v545 = vadd.f32 0.0, %v544
    %v546 = vpop.f32.mrf.mxu0
    %v547 = vadd.f32 0.0, %v546
    %548 = vmatmul.bf16.gmra.mxu0 %v235
    %v549 = vpop.f32.mrf.mxu0
    %v550 = vadd.f32 0.0, %v549
    %v551 = vpop.f32.mrf.mxu0
    %v552 = vadd.f32 0.0, %v551
    %553 = vmatmul.bf16.gmra.mxu0 %v236
    %v554 = vpop.f32.mrf.mxu0
    %v555 = vadd.f32 0.0, %v554
    %v556 = vpop.f32.mrf.mxu0
    %v557 = vadd.f32 0.0, %v556
    %558 = vmatmul.bf16.gmra.mxu0 %v237
    %v559 = vpop.f32.mrf.mxu0
    %v560 = vadd.f32 0.0, %v559
    %v561 = vpop.f32.mrf.mxu0
    %v562 = vadd.f32 0.0, %v561
    %563 = vmatmul.bf16.gmra.mxu0 %v238
    %v564 = vpop.f32.mrf.mxu0
    %v565 = vadd.f32 0.0, %v564
    %v566 = vpop.f32.mrf.mxu0
    %v567 = vadd.f32 0.0, %v566
    %568 = vmatmul.bf16.gmra.mxu0 %v239
    %v569 = vpop.f32.mrf.mxu0
    %v570 = vadd.f32 0.0, %v569
    %v571 = vpop.f32.mrf.mxu0
    %v572 = vadd.f32 0.0, %v571
    %573 = vmatmul.bf16.gmra.mxu0 %v240
    %v574 = vpop.f32.mrf.mxu0
    %v575 = vadd.f32 0.0, %v574
    %v576 = vpop.f32.mrf.mxu0
    %v577 = vadd.f32 0.0, %v576
    %578 = vdwg.mxu0
    %579 = vmatpush.bf16.msra.mxu0 %v376
    %580 = vmatpush.bf16.msra.mxu0 %v373
    %581 = vmatpush.bf16.msra.mxu0 %v370
    %582 = vmatpush.bf16.msra.mxu0 %v367
    %583 = vmatpush.bf16.msra.mxu0 %v364
    %584 = vmatpush.bf16.msra.mxu0 %v361
    %585 = vmatpush.bf16.msra.mxu0 %v358
    %586 = vmatpush.bf16.msra.mxu0 %v355
    %587 = vmatmul.bf16.gmra.mxu0 %v225
    %v588 = vpop.f32.mrf.mxu0
    %v589 = vadd.f32 0.0, %v588
    %v590 = vpop.f32.mrf.mxu0
    %v591 = vadd.f32 0.0, %v590
    %592 = vmatmul.bf16.gmra.mxu0 %v226
    %v593 = vpop.f32.mrf.mxu0
    %v594 = vadd.f32 0.0, %v593
    %v595 = vpop.f32.mrf.mxu0
    %v596 = vadd.f32 0.0, %v595
    %597 = vmatmul.bf16.gmra.mxu0 %v227
    %v598 = vpop.f32.mrf.mxu0
    %v599 = vadd.f32 0.0, %v598
    %v600 = vpop.f32.mrf.mxu0
    %v601 = vadd.f32 0.0, %v600
    %602 = vmatmul.bf16.gmra.mxu0 %v228
    %v603 = vpop.f32.mrf.mxu0
    %v604 = vadd.f32 0.0, %v603
    %v605 = vpop.f32.mrf.mxu0
    %v606 = vadd.f32 0.0, %v605
    %607 = vmatmul.bf16.gmra.mxu0 %v229
    %v608 = vpop.f32.mrf.mxu0
    %v609 = vadd.f32 0.0, %v608
    %v610 = vpop.f32.mrf.mxu0
    %v611 = vadd.f32 0.0, %v610
    %612 = vmatmul.bf16.gmra.mxu0 %v230
    %v613 = vpop.f32.mrf.mxu0
    %v614 = vadd.f32 0.0, %v613
    %v615 = vpop.f32.mrf.mxu0
    %v616 = vadd.f32 0.0, %v615
    %617 = vmatmul.bf16.gmra.mxu0 %v231
    %v618 = vpop.f32.mrf.mxu0
    %v619 = vadd.f32 0.0, %v618
    %v620 = vpop.f32.mrf.mxu0
    %v621 = vadd.f32 0.0, %v620
    %622 = vmatmul.bf16.gmra.mxu0 %v232
    %v623 = vpop.f32.mrf.mxu0
    %v624 = vadd.f32 0.0, %v623
    %v625 = vpop.f32.mrf.mxu0
    %v626 = vadd.f32 0.0, %v625
    %627 = vmatmul.bf16.gmra.mxu0 %v233
    %v628 = vpop.f32.mrf.mxu0
    %v629 = vadd.f32 0.0, %v628
    %v630 = vpop.f32.mrf.mxu0
    %v631 = vadd.f32 0.0, %v630
    %632 = vmatmul.bf16.gmra.mxu0 %v234
    %v633 = vpop.f32.mrf.mxu0
    %v634 = vadd.f32 0.0, %v633
    %v635 = vpop.f32.mrf.mxu0
    %v636 = vadd.f32 0.0, %v635
    %637 = vmatmul.bf16.gmra.mxu0 %v235
    %v638 = vpop.f32.mrf.mxu0
    %v639 = vadd.f32 0.0, %v638
    %v640 = vpop.f32.mrf.mxu0
    %v641 = vadd.f32 0.0, %v640
    %642 = vmatmul.bf16.gmra.mxu0 %v236
    %v643 = vpop.f32.mrf.mxu0
    %v644 = vadd.f32 0.0, %v643
    %v645 = vpop.f32.mrf.mxu0
    %v646 = vadd.f32 0.0, %v645
    %647 = vmatmul.bf16.gmra.mxu0 %v237
    %v648 = vpop.f32.mrf.mxu0
    %v649 = vadd.f32 0.0, %v648
    %v650 = vpop.f32.mrf.mxu0
    %v651 = vadd.f32 0.0, %v650
    %652 = vmatmul.bf16.gmra.mxu0 %v238
    %v653 = vpop.f32.mrf.mxu0
    %v654 = vadd.f32 0.0, %v653
    %v655 = vpop.f32.mrf.mxu0
    %v656 = vadd.f32 0.0, %v655
    %657 = vmatmul.bf16.gmra.mxu0 %v239
    %v658 = vpop.f32.mrf.mxu0
    %v659 = vadd.f32 0.0, %v658
    %v660 = vpop.f32.mrf.mxu0
    %v661 = vadd.f32 0.0, %v660
    %662 = vmatmul.bf16.gmra.mxu0 %v240
    %v663 = vpop.f32.mrf.mxu0
    %v664 = vadd.f32 0.0, %v663
    %v665 = vpop.f32.mrf.mxu0
    %v666 = vadd.f32 0.0, %v665
    %667 = vdwg.mxu0
    %v668 = vpack.c.bf16 %v500, %v411
    %v669 = vpack.c.bf16 %v589, %v589
    %v670 = vpack.c.bf16 %v502, %v413
    %v671 = vpack.c.bf16 %v591, %v591
    %v672 = vpack.c.bf16 %v505, %v416
    %v673 = vpack.c.bf16 %v594, %v594
    %v674 = vpack.c.bf16 %v507, %v418
    %v675 = vpack.c.bf16 %v596, %v596
    %v676 = vpack.c.bf16 %v510, %v421
    %v677 = vpack.c.bf16 %v599, %v599
    %v678 = vpack.c.bf16 %v512, %v423
    %v679 = vpack.c.bf16 %v601, %v601
    %v680 = vpack.c.bf16 %v515, %v426
    %v681 = vpack.c.bf16 %v604, %v604
    %v682 = vpack.c.bf16 %v517, %v428
    %v683 = vpack.c.bf16 %v606, %v606
    %v684 = vpack.c.bf16 %v520, %v431
    %v685 = vpack.c.bf16 %v609, %v609
    %v686 = vpack.c.bf16 %v522, %v433
    %v687 = vpack.c.bf16 %v611, %v611
    %v688 = vpack.c.bf16 %v525, %v436
    %v689 = vpack.c.bf16 %v614, %v614
    %v690 = vpack.c.bf16 %v527, %v438
    %v691 = vpack.c.bf16 %v616, %v616
    %v692 = vpack.c.bf16 %v530, %v441
    %v693 = vpack.c.bf16 %v619, %v619
    %v694 = vpack.c.bf16 %v532, %v443
    %v695 = vpack.c.bf16 %v621, %v621
    %v696 = vpack.c.bf16 %v535, %v446
    %v697 = vpack.c.bf16 %v624, %v624
    %v698 = vpack.c.bf16 %v537, %v448
    %v699 = vpack.c.bf16 %v626, %v626
    %v700 = vpack.c.bf16 %v540, %v451
    %v701 = vpack.c.bf16 %v629, %v629
    %v702 = vpack.c.bf16 %v542, %v453
    %v703 = vpack.c.bf16 %v631, %v631
    %v704 = vpack.c.bf16 %v545, %v456
    %v705 = vpack.c.bf16 %v634, %v634
    %v706 = vpack.c.bf16 %v547, %v458
    %v707 = vpack.c.bf16 %v636, %v636
    %v708 = vpack.c.bf16 %v550, %v461
    %v709 = vpack.c.bf16 %v639, %v639
    %v710 = vpack.c.bf16 %v552, %v463
    %v711 = vpack.c.bf16 %v641, %v641
    %v712 = vpack.c.bf16 %v555, %v466
    %v713 = vpack.c.bf16 %v644, %v644
    %v714 = vpack.c.bf16 %v557, %v468
    %v715 = vpack.c.bf16 %v646, %v646
    %v716 = vpack.c.bf16 %v560, %v471
    %v717 = vpack.c.bf16 %v649, %v649
    %v718 = vpack.c.bf16 %v562, %v473
    %v719 = vpack.c.bf16 %v651, %v651
    %v720 = vpack.c.bf16 %v565, %v476
    %v721 = vpack.c.bf16 %v654, %v654
    %v722 = vpack.c.bf16 %v567, %v478
    %v723 = vpack.c.bf16 %v656, %v656
    %v724 = vpack.c.bf16 %v570, %v481
    %v725 = vpack.c.bf16 %v659, %v659
    %v726 = vpack.c.bf16 %v572, %v483
    %v727 = vpack.c.bf16 %v661, %v661
    %v728 = vpack.c.bf16 %v575, %v486
    %v729 = vpack.c.bf16 %v664, %v664
    %v730 = vpack.c.bf16 %v577, %v488
    %v731 = vpack.c.bf16 %v666, %v666
    %732 = vst [vmem:[#allocation2] sm:$0xff] %v668
    %733 = vst [vmem:[#allocation2 + $0x8] sm:$0xf] %v669
    %734 = vst [vmem:[#allocation2 + $0xc] sm:$0xff] %v670
    %735 = vst [vmem:[#allocation2 + $0x14] sm:$0xf] %v671
    %736 = vst [vmem:[#allocation2 + $0x18] sm:$0xff] %v672
    %737 = vst [vmem:[#allocation2 + $0x20] sm:$0xf] %v673
    %738 = vst [vmem:[#allocation2 + $0x24] sm:$0xff] %v674
    %739 = vst [vmem:[#allocation2 + $0x2c] sm:$0xf] %v675
    %740 = vst [vmem:[#allocation2 + $0x30] sm:$0xff] %v676
    %741 = vst [vmem:[#allocation2 + $0x38] sm:$0xf] %v677
    %742 = vst [vmem:[#allocation2 + $0x3c] sm:$0xff] %v678
    %743 = vst [vmem:[#allocation2 + $0x44] sm:$0xf] %v679
    %744 = vst [vmem:[#allocation2 + $0x48] sm:$0xff] %v680
    %745 = vst [vmem:[#allocation2 + $0x50] sm:$0xf] %v681
    %746 = vst [vmem:[#allocation2 + $0x54] sm:$0xff] %v682
    %747 = vst [vmem:[#allocation2 + $0x5c] sm:$0xf] %v683
    %748 = vst [vmem:[#allocation2 + $0x60] sm:$0xff] %v684
    %749 = vst [vmem:[#allocation2 + $0x68] sm:$0xf] %v685
    %750 = vst [vmem:[#allocation2 + $0x6c] sm:$0xff] %v686
    %751 = vst [vmem:[#allocation2 + $0x74] sm:$0xf] %v687
    %752 = vst [vmem:[#allocation2 + $0x78] sm:$0xff] %v688
    %753 = vst [vmem:[#allocation2 + $0x80] sm:$0xf] %v689
    %754 = vst [vmem:[#allocation2 + $0x84] sm:$0xff] %v690
    %755 = vst [vmem:[#allocation2 + $0x8c] sm:$0xf] %v691
    %756 = vst [vmem:[#allocation2 + $0x90] sm:$0xff] %v692
    %757 = vst [vmem:[#allocation2 + $0x98] sm:$0xf] %v693
    %758 = vst [vmem:[#allocation2 + $0x9c] sm:$0xff] %v694
    %759 = vst [vmem:[#allocation2 + $0xa4] sm:$0xf] %v695
    %760 = vst [vmem:[#allocation2 + $0xa8] sm:$0xff] %v696
    %761 = vst [vmem:[#allocation2 + $0xb0] sm:$0xf] %v697
    %762 = vst [vmem:[#allocation2 + $0xb4] sm:$0xff] %v698
    %763 = vst [vmem:[#allocation2 + $0xbc] sm:$0xf] %v699
    %764 = vst [vmem:[#allocation2 + $0xc0] sm:$0xff] %v700
    %765 = vst [vmem:[#allocation2 + $0xc8] sm:$0xf] %v701
    %766 = vst [vmem:[#allocation2 + $0xcc] sm:$0xff] %v702
    %767 = vst [vmem:[#allocation2 + $0xd4] sm:$0xf] %v703
    %768 = vst [vmem:[#allocation2 + $0xd8] sm:$0xff] %v704
    %769 = vst [vmem:[#allocation2 + $0xe0] sm:$0xf] %v705
    %770 = vst [vmem:[#allocation2 + $0xe4] sm:$0xff] %v706
    %771 = vst [vmem:[#allocation2 + $0xec] sm:$0xf] %v707
    %772 = vst [vmem:[#allocation2 + $0xf0] sm:$0xff] %v708
    %773 = vst [vmem:[#allocation2 + $0xf8] sm:$0xf] %v709
    %774 = vst [vmem:[#allocation2 + $0xfc] sm:$0xff] %v710
    %775 = vst [vmem:[#allocation2 + $0x104] sm:$0xf] %v711
    %776 = vst [vmem:[#allocation2 + $0x108] sm:$0xff] %v712
    %777 = vst [vmem:[#allocation2 + $0x110] sm:$0xf] %v713
    %778 = vst [vmem:[#allocation2 + $0x114] sm:$0xff] %v714
    %779 = vst [vmem:[#allocation2 + $0x11c] sm:$0xf] %v715
    %780 = vst [vmem:[#allocation2 + $0x120] sm:$0xff] %v716
    %781 = vst [vmem:[#allocation2 + $0x128] sm:$0xf] %v717
    %782 = vst [vmem:[#allocation2 + $0x12c] sm:$0xff] %v718
    %783 = vst [vmem:[#allocation2 + $0x134] sm:$0xf] %v719
    %784 = vst [vmem:[#allocation2 + $0x138] sm:$0xff] %v720
    %785 = vst [vmem:[#allocation2 + $0x140] sm:$0xf] %v721
    %786 = vst [vmem:[#allocation2 + $0x144] sm:$0xff] %v722
    %787 = vst [vmem:[#allocation2 + $0x14c] sm:$0xf] %v723
    %788 = vst [vmem:[#allocation2 + $0x150] sm:$0xff] %v724
    %789 = vst [vmem:[#allocation2 + $0x158] sm:$0xf] %v725
    %790 = vst [vmem:[#allocation2 + $0x15c] sm:$0xff] %v726
    %791 = vst [vmem:[#allocation2 + $0x164] sm:$0xf] %v727
    %792 = vst [vmem:[#allocation2 + $0x168] sm:$0xff] %v728
    %793 = vst [vmem:[#allocation2 + $0x170] sm:$0xf] %v729
    %794 = vst [vmem:[#allocation2 + $0x174] sm:$0xff] %v730
    %795 = vst [vmem:[#allocation2 + $0x17c] sm:$0xf] %v731
    %s796 = sld [smem:[#allocation4]]
    %s797 = scalar_lea.vmem [#allocation8], %s796
    %v798 = vld [vmem:[%s797] sm:$0x1]
    %s799 = sld [smem:[#allocation4 + $0x1]]
    %s800 = scalar_lea.vmem [#allocation8], %s799
    %v801 = vld [vmem:[%s800] sm:$0x1]
    %s802 = sld [smem:[#allocation4 + $0x2]]
    %s803 = scalar_lea.vmem [#allocation8], %s802
    %v804 = vld [vmem:[%s803] sm:$0x1]
    %s805 = sld [smem:[#allocation4 + $0x3]]
    %s806 = scalar_lea.vmem [#allocation8], %s805
    %v807 = vld [vmem:[%s806] sm:$0x1]
    %s808 = sld [smem:[#allocation4 + $0x4]]
    %s809 = scalar_lea.vmem [#allocation8], %s808
    %v810 = vld [vmem:[%s809] sm:$0x1]
    %s811 = sld [smem:[#allocation4 + $0x5]]
    %s812 = scalar_lea.vmem [#allocation8], %s811
    %v813 = vld [vmem:[%s812] sm:$0x1]
    %s814 = sld [smem:[#allocation4 + $0x6]]
    %s815 = scalar_lea.vmem [#allocation8], %s814
    %v816 = vld [vmem:[%s815] sm:$0x1]
    %s817 = sld [smem:[#allocation4 + $0x7]]
    %s818 = scalar_lea.vmem [#allocation8], %s817
    %v819 = vld [vmem:[%s818] sm:$0x1]
    %v821 = vrot.slane %v801, 7
    %v824 = vrot.slane %v804, 6
    %v827 = vrot.slane %v807, 5
    %v830 = vrot.slane %v810, 4
    %v833 = vrot.slane %v813, 3
    %v836 = vrot.slane %v816, 2
    %v839 = vrot.slane %v819, 1
    %vm841 = vcmask 1040384
    %v842 = vsel %vm841, %v798, %v821
    %vm843 = vcmask 1041408
    %v844 = vsel %vm843, %v842, %v824
    %vm845 = vcmask 1042432
    %v846 = vsel %vm845, %v844, %v827
    %vm847 = vcmask 1043456
    %v848 = vsel %vm847, %v846, %v830
    %vm849 = vcmask 1044480
    %v850 = vsel %vm849, %v848, %v833
    %vm851 = vcmask 1045504
    %v852 = vsel %vm851, %v850, %v836
    %vm853 = vcmask 1046528
    %v854 = vsel %vm853, %v852, %v839
    %v855 = vpack.c.bf16 %v854, %v854
    %v856 = vld [vmem:[#allocation9] sm:$0xff]
    %v857 = vld [vmem:[#allocation9 + $0x8] sm:$0xf]
    %v858 = vld [vmem:[#allocation9 + $0xc] sm:$0xff]
    %v859 = vld [vmem:[#allocation9 + $0x14] sm:$0xf]
    %v860 = vld [vmem:[#allocation9 + $0x18] sm:$0xff]
    %v861 = vld [vmem:[#allocation9 + $0x20] sm:$0xf]
    %v862 = vld [vmem:[#allocation9 + $0x24] sm:$0xff]
    %v863 = vld [vmem:[#allocation9 + $0x2c] sm:$0xf]
    %v864 = vld [vmem:[#allocation9 + $0x30] sm:$0xff]
    %v865 = vld [vmem:[#allocation9 + $0x38] sm:$0xf]
    %v866 = vld [vmem:[#allocation9 + $0x3c] sm:$0xff]
    %v867 = vld [vmem:[#allocation9 + $0x44] sm:$0xf]
    %v868 = vld [vmem:[#allocation9 + $0x48] sm:$0xff]
    %v869 = vld [vmem:[#allocation9 + $0x50] sm:$0xf]
    %v870 = vld [vmem:[#allocation9 + $0x54] sm:$0xff]
    %v871 = vld [vmem:[#allocation9 + $0x5c] sm:$0xf]
    %v872 = vld [vmem:[#allocation9 + $0x60] sm:$0xff]
    %v873 = vld [vmem:[#allocation9 + $0x68] sm:$0xf]
    %v874 = vld [vmem:[#allocation9 + $0x6c] sm:$0xff]
    %v875 = vld [vmem:[#allocation9 + $0x74] sm:$0xf]
    %v876 = vld [vmem:[#allocation9 + $0x78] sm:$0xff]
    %v877 = vld [vmem:[#allocation9 + $0x80] sm:$0xf]
    %v878 = vld [vmem:[#allocation9 + $0x84] sm:$0xff]
    %v879 = vld [vmem:[#allocation9 + $0x8c] sm:$0xf]
    %v880 = vld [vmem:[#allocation9 + $0x90] sm:$0xff]
    %v881 = vld [vmem:[#allocation9 + $0x98] sm:$0xf]
    %v882 = vld [vmem:[#allocation9 + $0x9c] sm:$0xff]
    %v883 = vld [vmem:[#allocation9 + $0xa4] sm:$0xf]
    %v884 = vld [vmem:[#allocation9 + $0xa8] sm:$0xff]
    %v885 = vld [vmem:[#allocation9 + $0xb0] sm:$0xf]
    %v886 = vld [vmem:[#allocation9 + $0xb4] sm:$0xff]
    %v887 = vld [vmem:[#allocation9 + $0xbc] sm:$0xf]
    %v888 = vld [vmem:[%s5] sm:$0x7]
    %v890 = vperm.slane %v888, 0
    %v891 = vperm.slane %v888, 1
    %v892 = vperm.slane %v888, 2
    %v928 = vunpack.c.l.b16 %v856
    %v929 = vunpack.c.h.b16 %v856
    %v930 = vunpack.c.l.b16 %v857
    %v931 = vunpack.c.l.b16 %v858
    %v932 = vunpack.c.h.b16 %v858
    %v933 = vunpack.c.l.b16 %v859
    %v934 = vunpack.c.l.b16 %v860
    %v935 = vunpack.c.h.b16 %v860
    %v936 = vunpack.c.l.b16 %v861
    %v937 = vunpack.c.l.b16 %v862
    %v938 = vunpack.c.h.b16 %v862
    %v939 = vunpack.c.l.b16 %v863
    %v940 = vunpack.c.l.b16 %v864
    %v941 = vunpack.c.h.b16 %v864
    %v942 = vunpack.c.l.b16 %v865
    %v943 = vunpack.c.l.b16 %v866
    %v944 = vunpack.c.h.b16 %v866
    %v945 = vunpack.c.l.b16 %v867
    %v946 = vunpack.c.l.b16 %v868
    %v947 = vunpack.c.h.b16 %v868
    %v948 = vunpack.c.l.b16 %v869
    %v949 = vunpack.c.l.b16 %v870
    %v950 = vunpack.c.h.b16 %v870
    %v951 = vunpack.c.l.b16 %v871
    %v952 = vunpack.c.l.b16 %v872
    %v953 = vunpack.c.h.b16 %v872
    %v954 = vunpack.c.l.b16 %v873
    %v955 = vunpack.c.l.b16 %v874
    %v956 = vunpack.c.h.b16 %v874
    %v957 = vunpack.c.l.b16 %v875
    %v958 = vunpack.c.l.b16 %v876
    %v959 = vunpack.c.h.b16 %v876
    %v960 = vunpack.c.l.b16 %v877
    %v961 = vunpack.c.l.b16 %v878
    %v962 = vunpack.c.h.b16 %v878
    %v963 = vunpack.c.l.b16 %v879
    %v964 = vunpack.c.l.b16 %v880
    %v965 = vunpack.c.h.b16 %v880
    %v966 = vunpack.c.l.b16 %v881
    %v967 = vunpack.c.l.b16 %v882
    %v968 = vunpack.c.h.b16 %v882
    %v969 = vunpack.c.l.b16 %v883
    %v970 = vunpack.c.l.b16 %v884
    %v971 = vunpack.c.h.b16 %v884
    %v972 = vunpack.c.l.b16 %v885
    %v973 = vunpack.c.l.b16 %v886
    %v974 = vunpack.c.h.b16 %v886
    %v975 = vunpack.c.l.b16 %v887
    %v976 = vpack.c.b16 %v931, %v928
    %v977 = vpack.c.b16 %v932, %v929
    %v978 = vpack.c.b16 %v933, %v930
    %v979 = vpack.c.b16 %v937, %v934
    %v980 = vpack.c.b16 %v938, %v935
    %v981 = vpack.c.b16 %v939, %v936
    %v982 = vpack.c.b16 %v943, %v940
    %v983 = vpack.c.b16 %v944, %v941
    %v984 = vpack.c.b16 %v945, %v942
    %v985 = vpack.c.b16 %v949, %v946
    %v986 = vpack.c.b16 %v950, %v947
    %v987 = vpack.c.b16 %v951, %v948
    %v988 = vpack.c.b16 %v955, %v952
    %v989 = vpack.c.b16 %v956, %v953
    %v990 = vpack.c.b16 %v957, %v954
    %v991 = vpack.c.b16 %v961, %v958
    %v992 = vpack.c.b16 %v962, %v959
    %v993 = vpack.c.b16 %v963, %v960
    %v994 = vpack.c.b16 %v967, %v964
    %v995 = vpack.c.b16 %v968, %v965
    %v996 = vpack.c.b16 %v969, %v966
    %v997 = vpack.c.b16 %v973, %v970
    %v998 = vpack.c.b16 %v974, %v971
    %v999 = vpack.c.b16 %v975, %v972
    %1024 = vmatpush.bf16.msra.mxu0 %v997
    %1025 = vmatpush.bf16.msra.mxu0 %v994
    %1026 = vmatpush.bf16.msra.mxu0 %v991
    %1027 = vmatpush.bf16.msra.mxu0 %v988
    %1028 = vmatpush.bf16.msra.mxu0 %v985
    %1029 = vmatpush.bf16.msra.mxu0 %v982
    %1030 = vmatpush.bf16.msra.mxu0 %v979
    %1031 = vmatpush.bf16.msra.mxu0 %v976
    %1032 = vmatmul.bf16.gmra.mxu0 %v855
    %v1033 = vpop.f32.mrf.mxu0
    %v1034 = vadd.f32 %v890, %v1033
    %v1035 = vpop.f32.mrf.mxu0
    %1036 = vdwg.mxu0
    %1037 = vmatpush.bf16.msra.mxu0 %v998
    %1038 = vmatpush.bf16.msra.mxu0 %v995
    %1039 = vmatpush.bf16.msra.mxu0 %v992
    %1040 = vmatpush.bf16.msra.mxu0 %v989
    %1041 = vmatpush.bf16.msra.mxu0 %v986
    %1042 = vmatpush.bf16.msra.mxu0 %v983
    %1043 = vmatpush.bf16.msra.mxu0 %v980
    %1044 = vmatpush.bf16.msra.mxu0 %v977
    %1045 = vmatmul.bf16.gmra.mxu0 %v855
    %v1046 = vpop.f32.mrf.mxu0
    %v1047 = vadd.f32 %v891, %v1046
    %v1048 = vpop.f32.mrf.mxu0
    %1049 = vdwg.mxu0
    %1050 = vmatpush.bf16.msra.mxu0 %v999
    %1051 = vmatpush.bf16.msra.mxu0 %v996
    %1052 = vmatpush.bf16.msra.mxu0 %v993
    %1053 = vmatpush.bf16.msra.mxu0 %v990
    %1054 = vmatpush.bf16.msra.mxu0 %v987
    %1055 = vmatpush.bf16.msra.mxu0 %v984
    %1056 = vmatpush.bf16.msra.mxu0 %v981
    %1057 = vmatpush.bf16.msra.mxu0 %v978
    %1058 = vmatmul.bf16.gmra.mxu0 %v855
    %v1059 = vpop.f32.mrf.mxu0
    %v1060 = vadd.f32 %v892, %v1059
    %v1061 = vpop.f32.mrf.mxu0
    %1062 = vdwg.mxu0
    %v1063 = vld [vmem:[%s6] sm:$0x7]
    %v1064 = vld [vmem:[#allocation11] sm:$0xff]
    %v1065 = vld [vmem:[#allocation11 + $0x8] sm:$0xf]
    %v1066 = vld [vmem:[#allocation11 + $0xc] sm:$0xff]
    %v1067 = vld [vmem:[#allocation11 + $0x14] sm:$0xf]
    %v1068 = vld [vmem:[#allocation11 + $0x18] sm:$0xff]
    %v1069 = vld [vmem:[#allocation11 + $0x20] sm:$0xf]
    %v1070 = vld [vmem:[#allocation11 + $0x24] sm:$0xff]
    %v1071 = vld [vmem:[#allocation11 + $0x2c] sm:$0xf]
    %v1072 = vld [vmem:[#allocation11 + $0x30] sm:$0xff]
    %v1073 = vld [vmem:[#allocation11 + $0x38] sm:$0xf]
    %v1074 = vld [vmem:[#allocation11 + $0x3c] sm:$0xff]
    %v1075 = vld [vmem:[#allocation11 + $0x44] sm:$0xf]
    %v1076 = vld [vmem:[#allocation11 + $0x48] sm:$0xff]
    %v1077 = vld [vmem:[#allocation11 + $0x50] sm:$0xf]
    %v1078 = vld [vmem:[#allocation11 + $0x54] sm:$0xff]
    %v1079 = vld [vmem:[#allocation11 + $0x5c] sm:$0xf]
    %v1080 = vld [vmem:[#allocation11 + $0x60] sm:$0xff]
    %v1081 = vld [vmem:[#allocation11 + $0x68] sm:$0xf]
    %v1082 = vld [vmem:[#allocation11 + $0x6c] sm:$0xff]
    %v1083 = vld [vmem:[#allocation11 + $0x74] sm:$0xf]
    %v1084 = vld [vmem:[#allocation11 + $0x78] sm:$0xff]
    %v1085 = vld [vmem:[#allocation11 + $0x80] sm:$0xf]
    %v1086 = vld [vmem:[#allocation11 + $0x84] sm:$0xff]
    %v1087 = vld [vmem:[#allocation11 + $0x8c] sm:$0xf]
    %v1088 = vld [vmem:[#allocation11 + $0x90] sm:$0xff]
    %v1089 = vld [vmem:[#allocation11 + $0x98] sm:$0xf]
    %v1090 = vld [vmem:[#allocation11 + $0x9c] sm:$0xff]
    %v1091 = vld [vmem:[#allocation11 + $0xa4] sm:$0xf]
    %v1092 = vld [vmem:[#allocation11 + $0xa8] sm:$0xff]
    %v1093 = vld [vmem:[#allocation11 + $0xb0] sm:$0xf]
    %v1094 = vld [vmem:[#allocation11 + $0xb4] sm:$0xff]
    %v1095 = vld [vmem:[#allocation11 + $0xbc] sm:$0xf]
    %v1128 = vunpack.c.l.b16 %v1064
    %v1129 = vunpack.c.h.b16 %v1064
    %v1130 = vunpack.c.l.b16 %v1065
    %v1131 = vunpack.c.l.b16 %v1066
    %v1132 = vunpack.c.h.b16 %v1066
    %v1133 = vunpack.c.l.b16 %v1067
    %v1134 = vunpack.c.l.b16 %v1068
    %v1135 = vunpack.c.h.b16 %v1068
    %v1136 = vunpack.c.l.b16 %v1069
    %v1137 = vunpack.c.l.b16 %v1070
    %v1138 = vunpack.c.h.b16 %v1070
    %v1139 = vunpack.c.l.b16 %v1071
    %v1140 = vunpack.c.l.b16 %v1072
    %v1141 = vunpack.c.h.b16 %v1072
    %v1142 = vunpack.c.l.b16 %v1073
    %v1143 = vunpack.c.l.b16 %v1074
    %v1144 = vunpack.c.h.b16 %v1074
    %v1145 = vunpack.c.l.b16 %v1075
    %v1146 = vunpack.c.l.b16 %v1076
    %v1147 = vunpack.c.h.b16 %v1076
    %v1148 = vunpack.c.l.b16 %v1077
    %v1149 = vunpack.c.l.b16 %v1078
    %v1150 = vunpack.c.h.b16 %v1078
    %v1151 = vunpack.c.l.b16 %v1079
    %v1152 = vunpack.c.l.b16 %v1080
    %v1153 = vunpack.c.h.b16 %v1080
    %v1154 = vunpack.c.l.b16 %v1081
    %v1155 = vunpack.c.l.b16 %v1082
    %v1156 = vunpack.c.h.b16 %v1082
    %v1157 = vunpack.c.l.b16 %v1083
    %v1158 = vunpack.c.l.b16 %v1084
    %v1159 = vunpack.c.h.b16 %v1084
    %v1160 = vunpack.c.l.b16 %v1085
    %v1161 = vunpack.c.l.b16 %v1086
    %v1162 = vunpack.c.h.b16 %v1086
    %v1163 = vunpack.c.l.b16 %v1087
    %v1164 = vunpack.c.l.b16 %v1088
    %v1165 = vunpack.c.h.b16 %v1088
    %v1166 = vunpack.c.l.b16 %v1089
    %v1167 = vunpack.c.l.b16 %v1090
    %v1168 = vunpack.c.h.b16 %v1090
    %v1169 = vunpack.c.l.b16 %v1091
    %v1170 = vunpack.c.l.b16 %v1092
    %v1171 = vunpack.c.h.b16 %v1092
    %v1172 = vunpack.c.l.b16 %v1093
    %v1173 = vunpack.c.l.b16 %v1094
    %v1174 = vunpack.c.h.b16 %v1094
    %v1175 = vunpack.c.l.b16 %v1095
    %v1176 = vpack.c.b16 %v1131, %v1128
    %v1177 = vpack.c.b16 %v1132, %v1129
    %v1178 = vpack.c.b16 %v1133, %v1130
    %v1179 = vpack.c.b16 %v1137, %v1134
    %v1180 = vpack.c.b16 %v1138, %v1135
    %v1181 = vpack.c.b16 %v1139, %v1136
    %v1182 = vpack.c.b16 %v1143, %v1140
    %v1183 = vpack.c.b16 %v1144, %v1141
    %v1184 = vpack.c.b16 %v1145, %v1142
    %v1185 = vpack.c.b16 %v1149, %v1146
    %v1186 = vpack.c.b16 %v1150, %v1147
    %v1187 = vpack.c.b16 %v1151, %v1148
    %v1188 = vpack.c.b16 %v1155, %v1152
    %v1189 = vpack.c.b16 %v1156, %v1153
    %v1190 = vpack.c.b16 %v1157, %v1154
    %v1191 = vpack.c.b16 %v1161, %v1158
    %v1192 = vpack.c.b16 %v1162, %v1159
    %v1193 = vpack.c.b16 %v1163, %v1160
    %v1194 = vpack.c.b16 %v1167, %v1164
    %v1195 = vpack.c.b16 %v1168, %v1165
    %v1196 = vpack.c.b16 %v1169, %v1166
    %v1197 = vpack.c.b16 %v1173, %v1170
    %v1198 = vpack.c.b16 %v1174, %v1171
    %v1199 = vpack.c.b16 %v1175, %v1172
    %v1225 = vperm.slane %v1063, 0
    %v1226 = vperm.slane %v1063, 1
    %v1227 = vperm.slane %v1063, 2
    %1231 = vmatpush.bf16.msra.mxu0 %v1197
    %1232 = vmatpush.bf16.msra.mxu0 %v1194
    %1233 = vmatpush.bf16.msra.mxu0 %v1191
    %1234 = vmatpush.bf16.msra.mxu0 %v1188
    %1235 = vmatpush.bf16.msra.mxu0 %v1185
    %1236 = vmatpush.bf16.msra.mxu0 %v1182
    %1237 = vmatpush.bf16.msra.mxu0 %v1179
    %1238 = vmatpush.bf16.msra.mxu0 %v1176
    %1239 = vmatmul.bf16.gmra.mxu0 0
    %v1240 = vpop.f32.mrf.mxu0
    %v1241 = vadd.f32 %v1225, %v1240
    %v1242 = vpop.f32.mrf.mxu0
    %1243 = vdwg.mxu0
    %1244 = vmatpush.bf16.msra.mxu0 %v1198
    %1245 = vmatpush.bf16.msra.mxu0 %v1195
    %1246 = vmatpush.bf16.msra.mxu0 %v1192
    %1247 = vmatpush.bf16.msra.mxu0 %v1189
    %1248 = vmatpush.bf16.msra.mxu0 %v1186
    %1249 = vmatpush.bf16.msra.mxu0 %v1183
    %1250 = vmatpush.bf16.msra.mxu0 %v1180
    %1251 = vmatpush.bf16.msra.mxu0 %v1177
    %1252 = vmatmul.bf16.gmra.mxu0 0
    %v1253 = vpop.f32.mrf.mxu0
    %v1254 = vadd.f32 %v1226, %v1253
    %v1255 = vpop.f32.mrf.mxu0
    %1256 = vdwg.mxu0
    %1257 = vmatpush.bf16.msra.mxu0 %v1199
    %1258 = vmatpush.bf16.msra.mxu0 %v1196
    %1259 = vmatpush.bf16.msra.mxu0 %v1193
    %1260 = vmatpush.bf16.msra.mxu0 %v1190
    %1261 = vmatpush.bf16.msra.mxu0 %v1187
    %1262 = vmatpush.bf16.msra.mxu0 %v1184
    %1263 = vmatpush.bf16.msra.mxu0 %v1181
    %1264 = vmatpush.bf16.msra.mxu0 %v1178
    %1265 = vmatmul.bf16.gmra.mxu0 0
    %v1266 = vpop.f32.mrf.mxu0
    %v1267 = vadd.f32 %v1227, %v1266
    %v1268 = vpop.f32.mrf.mxu0
    %1269 = vdwg.mxu0
    %v1270 = vadd.f32 %v1034, %v1241
    %v1271 = vxor.u32 %v1270, 2147483648
    %v1272 = vmul.f32 %v1271, 1.442695
    %v1273 = vpow.pop %v1272
    %v1274 = vadd.f32 %v1273, 1.0
    %v1275 = vrcp.pop %v1274
    %v1276 = vmul.f32 %v1274, %v1275
    %v1277 = vsub.f32 1.0, %v1276
    %v1278 = vmul.f32 %v1275, %v1277
    %v1279 = vadd.f32 %v1275, %v1278
    %vm1280 = vweird.f32 %v1274
    %vm1281 = vweird.f32 %v1275
    %vm1282 = vmor %vm1280, %vm1281
    %v1283 = vsel %vm1282, %v1275, %v1279
    %v1284 = vand.u32 2147483647, %v1274
    %vm1285 = vcmp.eq.f32.partialorder %v1284, 8.507059e+37
    %v1286 = vand.u32 %v1274, 2147483648
    %v1287 = vor.u32 1.1754944e-38, %v1286
    %v1288 = vsel %vm1285, %v1287, %v1283
    %v1289 = vmul.f32 1.0, %v1288
    %v1290 = vadd.f32 %v1047, %v1254
    %v1291 = vxor.u32 %v1290, 2147483648
    %v1292 = vmul.f32 %v1291, 1.442695
    %v1293 = vpow.pop %v1292
    %v1294 = vadd.f32 %v1293, 1.0
    %v1295 = vrcp.pop %v1294
    %v1296 = vmul.f32 %v1294, %v1295
    %v1297 = vsub.f32 1.0, %v1296
    %v1298 = vmul.f32 %v1295, %v1297
    %v1299 = vadd.f32 %v1295, %v1298
    %vm1300 = vweird.f32 %v1294
    %vm1301 = vweird.f32 %v1295
    %vm1302 = vmor %vm1300, %vm1301
    %v1303 = vsel %vm1302, %v1295, %v1299
    %v1304 = vand.u32 2147483647, %v1294
    %vm1305 = vcmp.eq.f32.partialorder %v1304, 8.507059e+37
    %v1306 = vand.u32 %v1294, 2147483648
    %v1307 = vor.u32 1.1754944e-38, %v1306
    %v1308 = vsel %vm1305, %v1307, %v1303
    %v1309 = vmul.f32 1.0, %v1308
    %v1310 = vmul.f32 %v1289, %v1267
    %v1311 = vadd.f32 %v1060, %v1310
    %v1312 = vtanh.pop %v1311
    %v1313 = vsub.f32 1.0, %v1309
    %v1314 = vmul.f32 %v1313, %v1312
    %v1315 = vmul.f32 %v1309, 0.0
    %v1316 = vadd.f32 %v1314, %v1315
    %p1317 = scmp.gt.s32.totalorder %s192, 0
    %s1318 = scalar_select %p1317, 1, 0
    %v1319 = vstv %s1318
    %vm1320 = vcmp.eq.s32.totalorder %v1319, 1
    %v1321 = vsel %vm1320, %v1316, 0.0
    %v1322 = vpack.c.bf16 %v1321, %v1321
    %1323 = vmatpush.bf16.msra.mxu0 %v1197
    %1324 = vmatpush.bf16.msra.mxu0 %v1194
    %1325 = vmatpush.bf16.msra.mxu0 %v1191
    %1326 = vmatpush.bf16.msra.mxu0 %v1188
    %1327 = vmatpush.bf16.msra.mxu0 %v1185
    %1328 = vmatpush.bf16.msra.mxu0 %v1182
    %1329 = vmatpush.bf16.msra.mxu0 %v1179
    %1330 = vmatpush.bf16.msra.mxu0 %v1176
    %1331 = vmatmul.bf16.gmra.mxu0 %v1322
    %v1332 = vpop.f32.mrf.mxu0
    %v1333 = vadd.f32 %v1225, %v1332
    %v1334 = vpop.f32.mrf.mxu0
    %1335 = vdwg.mxu0
    %1336 = vmatpush.bf16.msra.mxu0 %v1198
    %1337 = vmatpush.bf16.msra.mxu0 %v1195
    %1338 = vmatpush.bf16.msra.mxu0 %v1192
    %1339 = vmatpush.bf16.msra.mxu0 %v1189
    %1340 = vmatpush.bf16.msra.mxu0 %v1186
    %1341 = vmatpush.bf16.msra.mxu0 %v1183
    %1342 = vmatpush.bf16.msra.mxu0 %v1180
    %1343 = vmatpush.bf16.msra.mxu0 %v1177
    %1344 = vmatmul.bf16.gmra.mxu0 %v1322
    %v1345 = vpop.f32.mrf.mxu0
    %v1346 = vadd.f32 %v1226, %v1345
    %v1347 = vpop.f32.mrf.mxu0
    %1348 = vdwg.mxu0
    %1349 = vmatpush.bf16.msra.mxu0 %v1199
    %1350 = vmatpush.bf16.msra.mxu0 %v1196
    %1351 = vmatpush.bf16.msra.mxu0 %v1193
    %1352 = vmatpush.bf16.msra.mxu0 %v1190
    %1353 = vmatpush.bf16.msra.mxu0 %v1187
    %1354 = vmatpush.bf16.msra.mxu0 %v1184
    %1355 = vmatpush.bf16.msra.mxu0 %v1181
    %1356 = vmatpush.bf16.msra.mxu0 %v1178
    %1357 = vmatmul.bf16.gmra.mxu0 %v1322
    %v1358 = vpop.f32.mrf.mxu0
    %v1359 = vadd.f32 %v1227, %v1358
    %v1360 = vpop.f32.mrf.mxu0
    %1361 = vdwg.mxu0
    %v1363 = vrot.slane %v1333, 7
    %v1365 = vadd.f32 %v1034, %v1363
    %v1366 = vxor.u32 %v1365, 2147483648
    %v1367 = vmul.f32 %v1366, 1.442695
    %v1368 = vpow.pop %v1367
    %v1369 = vadd.f32 %v1368, 1.0
    %v1370 = vrcp.pop %v1369
    %v1371 = vmul.f32 %v1369, %v1370
    %v1372 = vsub.f32 1.0, %v1371
    %v1373 = vmul.f32 %v1370, %v1372
    %v1374 = vadd.f32 %v1370, %v1373
    %vm1375 = vweird.f32 %v1369
    %vm1376 = vweird.f32 %v1370
    %vm1377 = vmor %vm1375, %vm1376
    %v1378 = vsel %vm1377, %v1370, %v1374
    %v1379 = vand.u32 2147483647, %v1369
    %vm1380 = vcmp.eq.f32.partialorder %v1379, 8.507059e+37
    %v1381 = vand.u32 %v1369, 2147483648
    %v1382 = vor.u32 1.1754944e-38, %v1381
    %v1383 = vsel %vm1380, %v1382, %v1378
    %v1384 = vmul.f32 1.0, %v1383
    %v1386 = vrot.slane %v1346, 7
    %v1388 = vadd.f32 %v1047, %v1386
    %v1389 = vxor.u32 %v1388, 2147483648
    %v1390 = vmul.f32 %v1389, 1.442695
    %v1391 = vpow.pop %v1390
    %v1392 = vadd.f32 %v1391, 1.0
    %v1393 = vrcp.pop %v1392
    %v1394 = vmul.f32 %v1392, %v1393
    %v1395 = vsub.f32 1.0, %v1394
    %v1396 = vmul.f32 %v1393, %v1395
    %v1397 = vadd.f32 %v1393, %v1396
    %vm1398 = vweird.f32 %v1392
    %vm1399 = vweird.f32 %v1393
    %vm1400 = vmor %vm1398, %vm1399
    %v1401 = vsel %vm1400, %v1393, %v1397
    %v1402 = vand.u32 2147483647, %v1392
    %vm1403 = vcmp.eq.f32.partialorder %v1402, 8.507059e+37
    %v1404 = vand.u32 %v1392, 2147483648
    %v1405 = vor.u32 1.1754944e-38, %v1404
    %v1406 = vsel %vm1403, %v1405, %v1401
    %v1407 = vmul.f32 1.0, %v1406
    %v1409 = vrot.slane %v1359, 7
    %v1411 = vmul.f32 %v1384, %v1409
    %v1412 = vadd.f32 %v1060, %v1411
    %v1413 = vtanh.pop %v1412
    %v1414 = vsub.f32 1.0, %v1407
    %v1415 = vmul.f32 %v1414, %v1413
    %v1417 = vrot.slane %v1321, 7
    %v1419 = vmul.f32 %v1407, %v1417
    %v1420 = vadd.f32 %v1415, %v1419
    %p1421 = scmp.gt.s32.totalorder %s192, 1
    %s1422 = scalar_select %p1421, 1, 0
    %v1423 = vstv %s1422
    %vm1424 = vcmp.eq.s32.totalorder %v1423, 1
    %v1425 = vsel %vm1424, %v1420, 0.0
    %v1426 = vsel %vm1424, %v1420, %v1417
    %v1427 = vpack.c.bf16 %v1426, %v1426
    %v1429 = vshrl.u32 %v1427, 16
    %1432 = vmatpush.bf16.msra.mxu0 %v1197
    %1433 = vmatpush.bf16.msra.mxu0 %v1194
    %1434 = vmatpush.bf16.msra.mxu0 %v1191
    %1435 = vmatpush.bf16.msra.mxu0 %v1188
    %1436 = vmatpush.bf16.msra.mxu0 %v1185
    %1437 = vmatpush.bf16.msra.mxu0 %v1182
    %1438 = vmatpush.bf16.msra.mxu0 %v1179
    %1439 = vmatpush.bf16.msra.mxu0 %v1176
    %1440 = vmatmul.bf16.gmra.mxu0 %v1429
    %v1441 = vpop.f32.mrf.mxu0
    %v1442 = vadd.f32 %v1225, %v1441
    %v1443 = vpop.f32.mrf.mxu0
    %1444 = vdwg.mxu0
    %1445 = vmatpush.bf16.msra.mxu0 %v1198
    %1446 = vmatpush.bf16.msra.mxu0 %v1195
    %1447 = vmatpush.bf16.msra.mxu0 %v1192
    %1448 = vmatpush.bf16.msra.mxu0 %v1189
    %1449 = vmatpush.bf16.msra.mxu0 %v1186
    %1450 = vmatpush.bf16.msra.mxu0 %v1183
    %1451 = vmatpush.bf16.msra.mxu0 %v1180
    %1452 = vmatpush.bf16.msra.mxu0 %v1177
    %1453 = vmatmul.bf16.gmra.mxu0 %v1429
    %v1454 = vpop.f32.mrf.mxu0
    %v1455 = vadd.f32 %v1226, %v1454
    %v1456 = vpop.f32.mrf.mxu0
    %1457 = vdwg.mxu0
    %1458 = vmatpush.bf16.msra.mxu0 %v1199
    %1459 = vmatpush.bf16.msra.mxu0 %v1196
    %1460 = vmatpush.bf16.msra.mxu0 %v1193
    %1461 = vmatpush.bf16.msra.mxu0 %v1190
    %1462 = vmatpush.bf16.msra.mxu0 %v1187
    %1463 = vmatpush.bf16.msra.mxu0 %v1184
    %1464 = vmatpush.bf16.msra.mxu0 %v1181
    %1465 = vmatpush.bf16.msra.mxu0 %v1178
    %1466 = vmatmul.bf16.gmra.mxu0 %v1429
    %v1467 = vpop.f32.mrf.mxu0
    %v1468 = vadd.f32 %v1227, %v1467
    %v1469 = vpop.f32.mrf.mxu0
    %1470 = vdwg.mxu0
    %v1472 = vrot.slane %v1442, 6
    %v1474 = vadd.f32 %v1034, %v1472
    %v1475 = vxor.u32 %v1474, 2147483648
    %v1476 = vmul.f32 %v1475, 1.442695
    %v1477 = vpow.pop %v1476
    %v1478 = vadd.f32 %v1477, 1.0
    %v1479 = vrcp.pop %v1478
    %v1480 = vmul.f32 %v1478, %v1479
    %v1481 = vsub.f32 1.0, %v1480
    %v1482 = vmul.f32 %v1479, %v1481
    %v1483 = vadd.f32 %v1479, %v1482
    %vm1484 = vweird.f32 %v1478
    %vm1485 = vweird.f32 %v1479
    %vm1486 = vmor %vm1484, %vm1485
    %v1487 = vsel %vm1486, %v1479, %v1483
    %v1488 = vand.u32 2147483647, %v1478
    %vm1489 = vcmp.eq.f32.partialorder %v1488, 8.507059e+37
    %v1490 = vand.u32 %v1478, 2147483648
    %v1491 = vor.u32 1.1754944e-38, %v1490
    %v1492 = vsel %vm1489, %v1491, %v1487
    %v1493 = vmul.f32 1.0, %v1492
    %v1495 = vrot.slane %v1455, 6
    %v1497 = vadd.f32 %v1047, %v1495
    %v1498 = vxor.u32 %v1497, 2147483648
    %v1499 = vmul.f32 %v1498, 1.442695
    %v1500 = vpow.pop %v1499
    %v1501 = vadd.f32 %v1500, 1.0
    %v1502 = vrcp.pop %v1501
    %v1503 = vmul.f32 %v1501, %v1502
    %v1504 = vsub.f32 1.0, %v1503
    %v1505 = vmul.f32 %v1502, %v1504
    %v1506 = vadd.f32 %v1502, %v1505
    %vm1507 = vweird.f32 %v1501
    %vm1508 = vweird.f32 %v1502
    %vm1509 = vmor %vm1507, %vm1508
    %v1510 = vsel %vm1509, %v1502, %v1506
    %v1511 = vand.u32 2147483647, %v1501
    %vm1512 = vcmp.eq.f32.partialorder %v1511, 8.507059e+37
    %v1513 = vand.u32 %v1501, 2147483648
    %v1514 = vor.u32 1.1754944e-38, %v1513
    %v1515 = vsel %vm1512, %v1514, %v1510
    %v1516 = vmul.f32 1.0, %v1515
    %v1518 = vrot.slane %v1468, 6
    %v1520 = vmul.f32 %v1493, %v1518
    %v1521 = vadd.f32 %v1060, %v1520
    %v1522 = vtanh.pop %v1521
    %v1523 = vsub.f32 1.0, %v1516
    %v1524 = vmul.f32 %v1523, %v1522
    %v1526 = vrot.slane %v1426, 7
    %v1528 = vmul.f32 %v1516, %v1526
    %v1529 = vadd.f32 %v1524, %v1528
    %p1530 = scmp.gt.s32.totalorder %s192, 2
    %s1531 = scalar_select %p1530, 1, 0
    %v1532 = vstv %s1531
    %vm1533 = vcmp.eq.s32.totalorder %v1532, 1
    %v1534 = vsel %vm1533, %v1529, 0.0
    %v1535 = vsel %vm1533, %v1529, %v1526
    %v1536 = vpack.c.bf16 %v1535, %v1535
    %v1538 = vrot.slane %v1536, 1
    %1540 = vmatpush.bf16.msra.mxu0 %v1197
    %1541 = vmatpush.bf16.msra.mxu0 %v1194
    %1542 = vmatpush.bf16.msra.mxu0 %v1191
    %1543 = vmatpush.bf16.msra.mxu0 %v1188
    %1544 = vmatpush.bf16.msra.mxu0 %v1185
    %1545 = vmatpush.bf16.msra.mxu0 %v1182
    %1546 = vmatpush.bf16.msra.mxu0 %v1179
    %1547 = vmatpush.bf16.msra.mxu0 %v1176
    %1548 = vmatmul.bf16.gmra.mxu0 %v1538
    %v1549 = vpop.f32.mrf.mxu0
    %v1550 = vadd.f32 %v1225, %v1549
    %v1551 = vpop.f32.mrf.mxu0
    %1552 = vdwg.mxu0
    %1553 = vmatpush.bf16.msra.mxu0 %v1198
    %1554 = vmatpush.bf16.msra.mxu0 %v1195
    %1555 = vmatpush.bf16.msra.mxu0 %v1192
    %1556 = vmatpush.bf16.msra.mxu0 %v1189
    %1557 = vmatpush.bf16.msra.mxu0 %v1186
    %1558 = vmatpush.bf16.msra.mxu0 %v1183
    %1559 = vmatpush.bf16.msra.mxu0 %v1180
    %1560 = vmatpush.bf16.msra.mxu0 %v1177
    %1561 = vmatmul.bf16.gmra.mxu0 %v1538
    %v1562 = vpop.f32.mrf.mxu0
    %v1563 = vadd.f32 %v1226, %v1562
    %v1564 = vpop.f32.mrf.mxu0
    %1565 = vdwg.mxu0
    %1566 = vmatpush.bf16.msra.mxu0 %v1199
    %1567 = vmatpush.bf16.msra.mxu0 %v1196
    %1568 = vmatpush.bf16.msra.mxu0 %v1193
    %1569 = vmatpush.bf16.msra.mxu0 %v1190
    %1570 = vmatpush.bf16.msra.mxu0 %v1187
    %1571 = vmatpush.bf16.msra.mxu0 %v1184
    %1572 = vmatpush.bf16.msra.mxu0 %v1181
    %1573 = vmatpush.bf16.msra.mxu0 %v1178
    %1574 = vmatmul.bf16.gmra.mxu0 %v1538
    %v1575 = vpop.f32.mrf.mxu0
    %v1576 = vadd.f32 %v1227, %v1575
    %v1577 = vpop.f32.mrf.mxu0
    %1578 = vdwg.mxu0
    %v1580 = vrot.slane %v1550, 5
    %v1582 = vadd.f32 %v1034, %v1580
    %v1583 = vxor.u32 %v1582, 2147483648
    %v1584 = vmul.f32 %v1583, 1.442695
    %v1585 = vpow.pop %v1584
    %v1586 = vadd.f32 %v1585, 1.0
    %v1587 = vrcp.pop %v1586
    %v1588 = vmul.f32 %v1586, %v1587
    %v1589 = vsub.f32 1.0, %v1588
    %v1590 = vmul.f32 %v1587, %v1589
    %v1591 = vadd.f32 %v1587, %v1590
    %vm1592 = vweird.f32 %v1586
    %vm1593 = vweird.f32 %v1587
    %vm1594 = vmor %vm1592, %vm1593
    %v1595 = vsel %vm1594, %v1587, %v1591
    %v1596 = vand.u32 2147483647, %v1586
    %vm1597 = vcmp.eq.f32.partialorder %v1596, 8.507059e+37
    %v1598 = vand.u32 %v1586, 2147483648
    %v1599 = vor.u32 1.1754944e-38, %v1598
    %v1600 = vsel %vm1597, %v1599, %v1595
    %v1601 = vmul.f32 1.0, %v1600
    %v1603 = vrot.slane %v1563, 5
    %v1605 = vadd.f32 %v1047, %v1603
    %v1606 = vxor.u32 %v1605, 2147483648
    %v1607 = vmul.f32 %v1606, 1.442695
    %v1608 = vpow.pop %v1607
    %v1609 = vadd.f32 %v1608, 1.0
    %v1610 = vrcp.pop %v1609
    %v1611 = vmul.f32 %v1609, %v1610
    %v1612 = vsub.f32 1.0, %v1611
    %v1613 = vmul.f32 %v1610, %v1612
    %v1614 = vadd.f32 %v1610, %v1613
    %vm1615 = vweird.f32 %v1609
    %vm1616 = vweird.f32 %v1610
    %vm1617 = vmor %vm1615, %vm1616
    %v1618 = vsel %vm1617, %v1610, %v1614
    %v1619 = vand.u32 2147483647, %v1609
    %vm1620 = vcmp.eq.f32.partialorder %v1619, 8.507059e+37
    %v1621 = vand.u32 %v1609, 2147483648
    %v1622 = vor.u32 1.1754944e-38, %v1621
    %v1623 = vsel %vm1620, %v1622, %v1618
    %v1624 = vmul.f32 1.0, %v1623
    %v1626 = vrot.slane %v1576, 5
    %v1628 = vmul.f32 %v1601, %v1626
    %v1629 = vadd.f32 %v1060, %v1628
    %v1630 = vtanh.pop %v1629
    %v1631 = vsub.f32 1.0, %v1624
    %v1632 = vmul.f32 %v1631, %v1630
    %v1634 = vrot.slane %v1535, 7
    %v1636 = vmul.f32 %v1624, %v1634
    %v1637 = vadd.f32 %v1632, %v1636
    %p1638 = scmp.gt.s32.totalorder %s192, 3
    %s1639 = scalar_select %p1638, 1, 0
    %v1640 = vstv %s1639
    %vm1641 = vcmp.eq.s32.totalorder %v1640, 1
    %v1642 = vsel %vm1641, %v1637, 0.0
    %v1643 = vsel %vm1641, %v1637, %v1634
    %v1644 = vpack.c.bf16 %v1643, %v1643
    %v1646 = vshrl.u32 %v1644, 16
    %v1648 = vrot.slane %v1646, 1
    %1650 = vmatpush.bf16.msra.mxu0 %v1197
    %1651 = vmatpush.bf16.msra.mxu0 %v1194
    %1652 = vmatpush.bf16.msra.mxu0 %v1191
    %1653 = vmatpush.bf16.msra.mxu0 %v1188
    %1654 = vmatpush.bf16.msra.mxu0 %v1185
    %1655 = vmatpush.bf16.msra.mxu0 %v1182
    %1656 = vmatpush.bf16.msra.mxu0 %v1179
    %1657 = vmatpush.bf16.msra.mxu0 %v1176
    %1658 = vmatmul.bf16.gmra.mxu0 %v1648
    %v1659 = vpop.f32.mrf.mxu0
    %v1660 = vadd.f32 %v1225, %v1659
    %v1661 = vpop.f32.mrf.mxu0
    %1662 = vdwg.mxu0
    %1663 = vmatpush.bf16.msra.mxu0 %v1198
    %1664 = vmatpush.bf16.msra.mxu0 %v1195
    %1665 = vmatpush.bf16.msra.mxu0 %v1192
    %1666 = vmatpush.bf16.msra.mxu0 %v1189
    %1667 = vmatpush.bf16.msra.mxu0 %v1186
    %1668 = vmatpush.bf16.msra.mxu0 %v1183
    %1669 = vmatpush.bf16.msra.mxu0 %v1180
    %1670 = vmatpush.bf16.msra.mxu0 %v1177
    %1671 = vmatmul.bf16.gmra.mxu0 %v1648
    %v1672 = vpop.f32.mrf.mxu0
    %v1673 = vadd.f32 %v1226, %v1672
    %v1674 = vpop.f32.mrf.mxu0
    %1675 = vdwg.mxu0
    %1676 = vmatpush.bf16.msra.mxu0 %v1199
    %1677 = vmatpush.bf16.msra.mxu0 %v1196
    %1678 = vmatpush.bf16.msra.mxu0 %v1193
    %1679 = vmatpush.bf16.msra.mxu0 %v1190
    %1680 = vmatpush.bf16.msra.mxu0 %v1187
    %1681 = vmatpush.bf16.msra.mxu0 %v1184
    %1682 = vmatpush.bf16.msra.mxu0 %v1181
    %1683 = vmatpush.bf16.msra.mxu0 %v1178
    %1684 = vmatmul.bf16.gmra.mxu0 %v1648
    %v1685 = vpop.f32.mrf.mxu0
    %v1686 = vadd.f32 %v1227, %v1685
    %v1687 = vpop.f32.mrf.mxu0
    %1688 = vdwg.mxu0
    %v1690 = vrot.slane %v1660, 4
    %v1692 = vadd.f32 %v1034, %v1690
    %v1693 = vxor.u32 %v1692, 2147483648
    %v1694 = vmul.f32 %v1693, 1.442695
    %v1695 = vpow.pop %v1694
    %v1696 = vadd.f32 %v1695, 1.0
    %v1697 = vrcp.pop %v1696
    %v1698 = vmul.f32 %v1696, %v1697
    %v1699 = vsub.f32 1.0, %v1698
    %v1700 = vmul.f32 %v1697, %v1699
    %v1701 = vadd.f32 %v1697, %v1700
    %vm1702 = vweird.f32 %v1696
    %vm1703 = vweird.f32 %v1697
    %vm1704 = vmor %vm1702, %vm1703
    %v1705 = vsel %vm1704, %v1697, %v1701
    %v1706 = vand.u32 2147483647, %v1696
    %vm1707 = vcmp.eq.f32.partialorder %v1706, 8.507059e+37
    %v1708 = vand.u32 %v1696, 2147483648
    %v1709 = vor.u32 1.1754944e-38, %v1708
    %v1710 = vsel %vm1707, %v1709, %v1705
    %v1711 = vmul.f32 1.0, %v1710
    %v1713 = vrot.slane %v1673, 4
    %v1715 = vadd.f32 %v1047, %v1713
    %v1716 = vxor.u32 %v1715, 2147483648
    %v1717 = vmul.f32 %v1716, 1.442695
    %v1718 = vpow.pop %v1717
    %v1719 = vadd.f32 %v1718, 1.0
    %v1720 = vrcp.pop %v1719
    %v1721 = vmul.f32 %v1719, %v1720
    %v1722 = vsub.f32 1.0, %v1721
    %v1723 = vmul.f32 %v1720, %v1722
    %v1724 = vadd.f32 %v1720, %v1723
    %vm1725 = vweird.f32 %v1719
    %vm1726 = vweird.f32 %v1720
    %vm1727 = vmor %vm1725, %vm1726
    %v1728 = vsel %vm1727, %v1720, %v1724
    %v1729 = vand.u32 2147483647, %v1719
    %vm1730 = vcmp.eq.f32.partialorder %v1729, 8.507059e+37
    %v1731 = vand.u32 %v1719, 2147483648
    %v1732 = vor.u32 1.1754944e-38, %v1731
    %v1733 = vsel %vm1730, %v1732, %v1728
    %v1734 = vmul.f32 1.0, %v1733
    %v1736 = vrot.slane %v1686, 4
    %v1738 = vmul.f32 %v1711, %v1736
    %v1739 = vadd.f32 %v1060, %v1738
    %v1740 = vtanh.pop %v1739
    %v1741 = vsub.f32 1.0, %v1734
    %v1742 = vmul.f32 %v1741, %v1740
    %v1744 = vrot.slane %v1643, 7
    %v1746 = vmul.f32 %v1734, %v1744
    %v1747 = vadd.f32 %v1742, %v1746
    %p1748 = scmp.gt.s32.totalorder %s192, 4
    %s1749 = scalar_select %p1748, 1, 0
    %v1750 = vstv %s1749
    %vm1751 = vcmp.eq.s32.totalorder %v1750, 1
    %v1752 = vsel %vm1751, %v1747, 0.0
    %v1753 = vsel %vm1751, %v1747, %v1744
    %v1754 = vpack.c.bf16 %v1753, %v1753
    %v1756 = vrot.slane %v1754, 2
    %1758 = vmatpush.bf16.msra.mxu0 %v1197
    %1759 = vmatpush.bf16.msra.mxu0 %v1194
    %1760 = vmatpush.bf16.msra.mxu0 %v1191
    %1761 = vmatpush.bf16.msra.mxu0 %v1188
    %1762 = vmatpush.bf16.msra.mxu0 %v1185
    %1763 = vmatpush.bf16.msra.mxu0 %v1182
    %1764 = vmatpush.bf16.msra.mxu0 %v1179
    %1765 = vmatpush.bf16.msra.mxu0 %v1176
    %1766 = vmatmul.bf16.gmra.mxu0 %v1756
    %v1767 = vpop.f32.mrf.mxu0
    %v1768 = vadd.f32 %v1225, %v1767
    %v1769 = vpop.f32.mrf.mxu0
    %1770 = vdwg.mxu0
    %1771 = vmatpush.bf16.msra.mxu0 %v1198
    %1772 = vmatpush.bf16.msra.mxu0 %v1195
    %1773 = vmatpush.bf16.msra.mxu0 %v1192
    %1774 = vmatpush.bf16.msra.mxu0 %v1189
    %1775 = vmatpush.bf16.msra.mxu0 %v1186
    %1776 = vmatpush.bf16.msra.mxu0 %v1183
    %1777 = vmatpush.bf16.msra.mxu0 %v1180
    %1778 = vmatpush.bf16.msra.mxu0 %v1177
    %1779 = vmatmul.bf16.gmra.mxu0 %v1756
    %v1780 = vpop.f32.mrf.mxu0
    %v1781 = vadd.f32 %v1226, %v1780
    %v1782 = vpop.f32.mrf.mxu0
    %1783 = vdwg.mxu0
    %1784 = vmatpush.bf16.msra.mxu0 %v1199
    %1785 = vmatpush.bf16.msra.mxu0 %v1196
    %1786 = vmatpush.bf16.msra.mxu0 %v1193
    %1787 = vmatpush.bf16.msra.mxu0 %v1190
    %1788 = vmatpush.bf16.msra.mxu0 %v1187
    %1789 = vmatpush.bf16.msra.mxu0 %v1184
    %1790 = vmatpush.bf16.msra.mxu0 %v1181
    %1791 = vmatpush.bf16.msra.mxu0 %v1178
    %1792 = vmatmul.bf16.gmra.mxu0 %v1756
    %v1793 = vpop.f32.mrf.mxu0
    %v1794 = vadd.f32 %v1227, %v1793
    %v1795 = vpop.f32.mrf.mxu0
    %1796 = vdwg.mxu0
    %v1798 = vrot.slane %v1768, 3
    %v1800 = vadd.f32 %v1034, %v1798
    %v1801 = vxor.u32 %v1800, 2147483648
    %v1802 = vmul.f32 %v1801, 1.442695
    %v1803 = vpow.pop %v1802
    %v1804 = vadd.f32 %v1803, 1.0
    %v1805 = vrcp.pop %v1804
    %v1806 = vmul.f32 %v1804, %v1805
    %v1807 = vsub.f32 1.0, %v1806
    %v1808 = vmul.f32 %v1805, %v1807
    %v1809 = vadd.f32 %v1805, %v1808
    %vm1810 = vweird.f32 %v1804
    %vm1811 = vweird.f32 %v1805
    %vm1812 = vmor %vm1810, %vm1811
    %v1813 = vsel %vm1812, %v1805, %v1809
    %v1814 = vand.u32 2147483647, %v1804
    %vm1815 = vcmp.eq.f32.partialorder %v1814, 8.507059e+37
    %v1816 = vand.u32 %v1804, 2147483648
    %v1817 = vor.u32 1.1754944e-38, %v1816
    %v1818 = vsel %vm1815, %v1817, %v1813
    %v1819 = vmul.f32 1.0, %v1818
    %v1821 = vrot.slane %v1781, 3
    %v1823 = vadd.f32 %v1047, %v1821
    %v1824 = vxor.u32 %v1823, 2147483648
    %v1825 = vmul.f32 %v1824, 1.442695
    %v1826 = vpow.pop %v1825
    %v1827 = vadd.f32 %v1826, 1.0
    %v1828 = vrcp.pop %v1827
    %v1829 = vmul.f32 %v1827, %v1828
    %v1830 = vsub.f32 1.0, %v1829
    %v1831 = vmul.f32 %v1828, %v1830
    %v1832 = vadd.f32 %v1828, %v1831
    %vm1833 = vweird.f32 %v1827
    %vm1834 = vweird.f32 %v1828
    %vm1835 = vmor %vm1833, %vm1834
    %v1836 = vsel %vm1835, %v1828, %v1832
    %v1837 = vand.u32 2147483647, %v1827
    %vm1838 = vcmp.eq.f32.partialorder %v1837, 8.507059e+37
    %v1839 = vand.u32 %v1827, 2147483648
    %v1840 = vor.u32 1.1754944e-38, %v1839
    %v1841 = vsel %vm1838, %v1840, %v1836
    %v1842 = vmul.f32 1.0, %v1841
    %v1844 = vrot.slane %v1794, 3
    %v1846 = vmul.f32 %v1819, %v1844
    %v1847 = vadd.f32 %v1060, %v1846
    %v1848 = vtanh.pop %v1847
    %v1849 = vsub.f32 1.0, %v1842
    %v1850 = vmul.f32 %v1849, %v1848
    %v1852 = vrot.slane %v1753, 7
    %v1854 = vmul.f32 %v1842, %v1852
    %v1855 = vadd.f32 %v1850, %v1854
    %p1856 = scmp.gt.s32.totalorder %s192, 5
    %s1857 = scalar_select %p1856, 1, 0
    %v1858 = vstv %s1857
    %vm1859 = vcmp.eq.s32.totalorder %v1858, 1
    %v1860 = vsel %vm1859, %v1855, 0.0
    %v1861 = vsel %vm1859, %v1855, %v1852
    %v1862 = vpack.c.bf16 %v1861, %v1861
    %v1864 = vshrl.u32 %v1862, 16
    %v1866 = vrot.slane %v1864, 2
    %1868 = vmatpush.bf16.msra.mxu0 %v1197
    %1869 = vmatpush.bf16.msra.mxu0 %v1194
    %1870 = vmatpush.bf16.msra.mxu0 %v1191
    %1871 = vmatpush.bf16.msra.mxu0 %v1188
    %1872 = vmatpush.bf16.msra.mxu0 %v1185
    %1873 = vmatpush.bf16.msra.mxu0 %v1182
    %1874 = vmatpush.bf16.msra.mxu0 %v1179
    %1875 = vmatpush.bf16.msra.mxu0 %v1176
    %1876 = vmatmul.bf16.gmra.mxu0 %v1866
    %v1877 = vpop.f32.mrf.mxu0
    %v1878 = vadd.f32 %v1225, %v1877
    %v1879 = vpop.f32.mrf.mxu0
    %1880 = vdwg.mxu0
    %1881 = vmatpush.bf16.msra.mxu0 %v1198
    %1882 = vmatpush.bf16.msra.mxu0 %v1195
    %1883 = vmatpush.bf16.msra.mxu0 %v1192
    %1884 = vmatpush.bf16.msra.mxu0 %v1189
    %1885 = vmatpush.bf16.msra.mxu0 %v1186
    %1886 = vmatpush.bf16.msra.mxu0 %v1183
    %1887 = vmatpush.bf16.msra.mxu0 %v1180
    %1888 = vmatpush.bf16.msra.mxu0 %v1177
    %1889 = vmatmul.bf16.gmra.mxu0 %v1866
    %v1890 = vpop.f32.mrf.mxu0
    %v1891 = vadd.f32 %v1226, %v1890
    %v1892 = vpop.f32.mrf.mxu0
    %1893 = vdwg.mxu0
    %1894 = vmatpush.bf16.msra.mxu0 %v1199
    %1895 = vmatpush.bf16.msra.mxu0 %v1196
    %1896 = vmatpush.bf16.msra.mxu0 %v1193
    %1897 = vmatpush.bf16.msra.mxu0 %v1190
    %1898 = vmatpush.bf16.msra.mxu0 %v1187
    %1899 = vmatpush.bf16.msra.mxu0 %v1184
    %1900 = vmatpush.bf16.msra.mxu0 %v1181
    %1901 = vmatpush.bf16.msra.mxu0 %v1178
    %1902 = vmatmul.bf16.gmra.mxu0 %v1866
    %v1903 = vpop.f32.mrf.mxu0
    %v1904 = vadd.f32 %v1227, %v1903
    %v1905 = vpop.f32.mrf.mxu0
    %1906 = vdwg.mxu0
    %v1908 = vrot.slane %v1878, 2
    %v1910 = vadd.f32 %v1034, %v1908
    %v1911 = vxor.u32 %v1910, 2147483648
    %v1912 = vmul.f32 %v1911, 1.442695
    %v1913 = vpow.pop %v1912
    %v1914 = vadd.f32 %v1913, 1.0
    %v1915 = vrcp.pop %v1914
    %v1916 = vmul.f32 %v1914, %v1915
    %v1917 = vsub.f32 1.0, %v1916
    %v1918 = vmul.f32 %v1915, %v1917
    %v1919 = vadd.f32 %v1915, %v1918
    %vm1920 = vweird.f32 %v1914
    %vm1921 = vweird.f32 %v1915
    %vm1922 = vmor %vm1920, %vm1921
    %v1923 = vsel %vm1922, %v1915, %v1919
    %v1924 = vand.u32 2147483647, %v1914
    %vm1925 = vcmp.eq.f32.partialorder %v1924, 8.507059e+37
    %v1926 = vand.u32 %v1914, 2147483648
    %v1927 = vor.u32 1.1754944e-38, %v1926
    %v1928 = vsel %vm1925, %v1927, %v1923
    %v1929 = vmul.f32 1.0, %v1928
    %v1931 = vrot.slane %v1891, 2
    %v1933 = vadd.f32 %v1047, %v1931
    %v1934 = vxor.u32 %v1933, 2147483648
    %v1935 = vmul.f32 %v1934, 1.442695
    %v1936 = vpow.pop %v1935
    %v1937 = vadd.f32 %v1936, 1.0
    %v1938 = vrcp.pop %v1937
    %v1939 = vmul.f32 %v1937, %v1938
    %v1940 = vsub.f32 1.0, %v1939
    %v1941 = vmul.f32 %v1938, %v1940
    %v1942 = vadd.f32 %v1938, %v1941
    %vm1943 = vweird.f32 %v1937
    %vm1944 = vweird.f32 %v1938
    %vm1945 = vmor %vm1943, %vm1944
    %v1946 = vsel %vm1945, %v1938, %v1942
    %v1947 = vand.u32 2147483647, %v1937
    %vm1948 = vcmp.eq.f32.partialorder %v1947, 8.507059e+37
    %v1949 = vand.u32 %v1937, 2147483648
    %v1950 = vor.u32 1.1754944e-38, %v1949
    %v1951 = vsel %vm1948, %v1950, %v1946
    %v1952 = vmul.f32 1.0, %v1951
    %v1954 = vrot.slane %v1904, 2
    %v1956 = vmul.f32 %v1929, %v1954
    %v1957 = vadd.f32 %v1060, %v1956
    %v1958 = vtanh.pop %v1957
    %v1959 = vsub.f32 1.0, %v1952
    %v1960 = vmul.f32 %v1959, %v1958
    %v1962 = vrot.slane %v1861, 7
    %v1964 = vmul.f32 %v1952, %v1962
    %v1965 = vadd.f32 %v1960, %v1964
    %p1966 = scmp.gt.s32.totalorder %s192, 6
    %s1967 = scalar_select %p1966, 1, 0
    %v1968 = vstv %s1967
    %vm1969 = vcmp.eq.s32.totalorder %v1968, 1
    %v1970 = vsel %vm1969, %v1965, 0.0
    %v1971 = vsel %vm1969, %v1965, %v1962
    %v1972 = vpack.c.bf16 %v1971, %v1971
    %v1974 = vrot.slane %v1972, 3
    %1976 = vmatpush.bf16.msra.mxu0 %v1197
    %1977 = vmatpush.bf16.msra.mxu0 %v1194
    %1978 = vmatpush.bf16.msra.mxu0 %v1191
    %1979 = vmatpush.bf16.msra.mxu0 %v1188
    %1980 = vmatpush.bf16.msra.mxu0 %v1185
    %1981 = vmatpush.bf16.msra.mxu0 %v1182
    %1982 = vmatpush.bf16.msra.mxu0 %v1179
    %1983 = vmatpush.bf16.msra.mxu0 %v1176
    %1984 = vmatmul.bf16.gmra.mxu0 %v1974
    %v1985 = vpop.f32.mrf.mxu0
    %v1986 = vadd.f32 %v1225, %v1985
    %v1987 = vpop.f32.mrf.mxu0
    %1988 = vdwg.mxu0
    %1989 = vmatpush.bf16.msra.mxu0 %v1198
    %1990 = vmatpush.bf16.msra.mxu0 %v1195
    %1991 = vmatpush.bf16.msra.mxu0 %v1192
    %1992 = vmatpush.bf16.msra.mxu0 %v1189
    %1993 = vmatpush.bf16.msra.mxu0 %v1186
    %1994 = vmatpush.bf16.msra.mxu0 %v1183
    %1995 = vmatpush.bf16.msra.mxu0 %v1180
    %1996 = vmatpush.bf16.msra.mxu0 %v1177
    %1997 = vmatmul.bf16.gmra.mxu0 %v1974
    %v1998 = vpop.f32.mrf.mxu0
    %v1999 = vadd.f32 %v1226, %v1998
    %v2000 = vpop.f32.mrf.mxu0
    %2001 = vdwg.mxu0
    %2002 = vmatpush.bf16.msra.mxu0 %v1199
    %2003 = vmatpush.bf16.msra.mxu0 %v1196
    %2004 = vmatpush.bf16.msra.mxu0 %v1193
    %2005 = vmatpush.bf16.msra.mxu0 %v1190
    %2006 = vmatpush.bf16.msra.mxu0 %v1187
    %2007 = vmatpush.bf16.msra.mxu0 %v1184
    %2008 = vmatpush.bf16.msra.mxu0 %v1181
    %2009 = vmatpush.bf16.msra.mxu0 %v1178
    %2010 = vmatmul.bf16.gmra.mxu0 %v1974
    %v2011 = vpop.f32.mrf.mxu0
    %v2012 = vadd.f32 %v1227, %v2011
    %v2013 = vpop.f32.mrf.mxu0
    %2014 = vdwg.mxu0
    %v2016 = vrot.slane %v1986, 1
    %v2018 = vadd.f32 %v1034, %v2016
    %v2019 = vxor.u32 %v2018, 2147483648
    %v2020 = vmul.f32 %v2019, 1.442695
    %v2021 = vpow.pop %v2020
    %v2022 = vadd.f32 %v2021, 1.0
    %v2023 = vrcp.pop %v2022
    %v2024 = vmul.f32 %v2022, %v2023
    %v2025 = vsub.f32 1.0, %v2024
    %v2026 = vmul.f32 %v2023, %v2025
    %v2027 = vadd.f32 %v2023, %v2026
    %vm2028 = vweird.f32 %v2022
    %vm2029 = vweird.f32 %v2023
    %vm2030 = vmor %vm2028, %vm2029
    %v2031 = vsel %vm2030, %v2023, %v2027
    %v2032 = vand.u32 2147483647, %v2022
    %vm2033 = vcmp.eq.f32.partialorder %v2032, 8.507059e+37
    %v2034 = vand.u32 %v2022, 2147483648
    %v2035 = vor.u32 1.1754944e-38, %v2034
    %v2036 = vsel %vm2033, %v2035, %v2031
    %v2037 = vmul.f32 1.0, %v2036
    %v2039 = vrot.slane %v1999, 1
    %v2041 = vadd.f32 %v1047, %v2039
    %v2042 = vxor.u32 %v2041, 2147483648
    %v2043 = vmul.f32 %v2042, 1.442695
    %v2044 = vpow.pop %v2043
    %v2045 = vadd.f32 %v2044, 1.0
    %v2046 = vrcp.pop %v2045
    %v2047 = vmul.f32 %v2045, %v2046
    %v2048 = vsub.f32 1.0, %v2047
    %v2049 = vmul.f32 %v2046, %v2048
    %v2050 = vadd.f32 %v2046, %v2049
    %vm2051 = vweird.f32 %v2045
    %vm2052 = vweird.f32 %v2046
    %vm2053 = vmor %vm2051, %vm2052
    %v2054 = vsel %vm2053, %v2046, %v2050
    %v2055 = vand.u32 2147483647, %v2045
    %vm2056 = vcmp.eq.f32.partialorder %v2055, 8.507059e+37
    %v2057 = vand.u32 %v2045, 2147483648
    %v2058 = vor.u32 1.1754944e-38, %v2057
    %v2059 = vsel %vm2056, %v2058, %v2054
    %v2060 = vmul.f32 1.0, %v2059
    %v2062 = vrot.slane %v2012, 1
    %v2064 = vmul.f32 %v2037, %v2062
    %v2065 = vadd.f32 %v1060, %v2064
    %v2066 = vtanh.pop %v2065
    %v2067 = vsub.f32 1.0, %v2060
    %v2068 = vmul.f32 %v2067, %v2066
    %v2070 = vrot.slane %v1971, 7
    %v2072 = vmul.f32 %v2060, %v2070
    %v2073 = vadd.f32 %v2068, %v2072
    %p2074 = scmp.gt.s32.totalorder %s192, 7
    %s2075 = scalar_select %p2074, 1, 0
    %v2076 = vstv %s2075
    %vm2077 = vcmp.eq.s32.totalorder %v2076, 1
    %v2078 = vsel %vm2077, %v2073, 0.0
    %v2079 = vsel %vm2077, %v2073, %v2070
    %v2080 = vsel %vm841, %v1321, %v1425
    %v2081 = vsel %vm843, %v2080, %v1534
    %v2082 = vsel %vm845, %v2081, %v1642
    %v2083 = vsel %vm847, %v2082, %v1752
    %v2084 = vsel %vm849, %v2083, %v1860
    %v2085 = vsel %vm851, %v2084, %v1970
    %v2086 = vsel %vm853, %v2085, %v2078
    %v2087 = vld [vmem:[%s9] sm:$0x7]
    %v2088 = vld [vmem:[#allocation15] sm:$0x7]
    %v2089 = vld [vmem:[%s12] sm:$0x1]
    %v2090 = vld [vmem:[%s14] sm:$0x3]
    %v2091 = vlaneseq
    %v2092 = vand.u32 %v2091, 127
    %v2093 = vadd.s32 %v2092, 128
    %v2094 = vld [vmem:[#allocation2] sm:$0x11]
    %v2095 = vld [vmem:[#allocation2 + $0x8] sm:$0x1]
    %v2096 = vunpack.c.l.bf16 %v2094
    %v2097 = vunpack.c.h.bf16 %v2094
    %v2098 = vunpack.c.l.bf16 %v2095
    %v2100 = vperm.slane %v2087, 0
    %v2101 = vperm.slane %v2087, 1
    %v2102 = vperm.slane %v2087, 2
    %v2106 = vadd.f32 %v2096, %v2100
    %v2107 = vadd.f32 %v2097, %v2101
    %v2108 = vadd.f32 %v2098, %v2102
    %v2110 = vrot.slane %v2079, 7
    %v2115 = vrot.slane %v2106, 1
    %v2116 = vrot.slane %v2107, 1
    %v2117 = vrot.slane %v2108, 1
    loop: start=0, step=1, limit=10
    $region98: #{tpu_custom_call.1} parent=1 // loop_pre_header
      _
    $region99: #{tpu_custom_call.1} parent=1 // loop_header
      %s2122 = sphi 0, %s2126
      %p2123 = scmp.ge.s32.totalorder %s2122, 10
      %v2127 = vphi %v2110, %v2384
      %v2128 = vphi %v2115, %v3108
      %v2129 = vphi %v2116, %v3134
      %v2130 = vphi %v2117, %v3160
    $region100: #{tpu_custom_call.1} parent=1 // loop_header_branch
      %2125 = sbr.rel (%p2123) target = $region104
    $region101: #{tpu_custom_call.1} parent=1 // loop_body
      %v2131 = vpack.c.bf16 %v2127, %v2127
      %v2132 = vld [vmem:[#allocation14] sm:$0xff]
      %v2133 = vld [vmem:[#allocation14 + $0x8] sm:$0xf]
      %v2134 = vld [vmem:[#allocation14 + $0xc] sm:$0xff]
      %v2135 = vld [vmem:[#allocation14 + $0x14] sm:$0xf]
      %v2136 = vld [vmem:[#allocation14 + $0x18] sm:$0xff]
      %v2137 = vld [vmem:[#allocation14 + $0x20] sm:$0xf]
      %v2138 = vld [vmem:[#allocation14 + $0x24] sm:$0xff]
      %v2139 = vld [vmem:[#allocation14 + $0x2c] sm:$0xf]
      %v2140 = vld [vmem:[#allocation14 + $0x30] sm:$0xff]
      %v2141 = vld [vmem:[#allocation14 + $0x38] sm:$0xf]
      %v2142 = vld [vmem:[#allocation14 + $0x3c] sm:$0xff]
      %v2143 = vld [vmem:[#allocation14 + $0x44] sm:$0xf]
      %v2144 = vld [vmem:[#allocation14 + $0x48] sm:$0xff]
      %v2145 = vld [vmem:[#allocation14 + $0x50] sm:$0xf]
      %v2146 = vld [vmem:[#allocation14 + $0x54] sm:$0xff]
      %v2147 = vld [vmem:[#allocation14 + $0x5c] sm:$0xf]
      %v2148 = vld [vmem:[#allocation14 + $0x60] sm:$0xff]
      %v2149 = vld [vmem:[#allocation14 + $0x68] sm:$0xf]
      %v2150 = vld [vmem:[#allocation14 + $0x6c] sm:$0xff]
      %v2151 = vld [vmem:[#allocation14 + $0x74] sm:$0xf]
      %v2152 = vld [vmem:[#allocation14 + $0x78] sm:$0xff]
      %v2153 = vld [vmem:[#allocation14 + $0x80] sm:$0xf]
      %v2154 = vld [vmem:[#allocation14 + $0x84] sm:$0xff]
      %v2155 = vld [vmem:[#allocation14 + $0x8c] sm:$0xf]
      %v2156 = vld [vmem:[#allocation14 + $0x90] sm:$0xff]
      %v2157 = vld [vmem:[#allocation14 + $0x98] sm:$0xf]
      %v2158 = vld [vmem:[#allocation14 + $0x9c] sm:$0xff]
      %v2159 = vld [vmem:[#allocation14 + $0xa4] sm:$0xf]
      %v2160 = vld [vmem:[#allocation14 + $0xa8] sm:$0xff]
      %v2161 = vld [vmem:[#allocation14 + $0xb0] sm:$0xf]
      %v2162 = vld [vmem:[#allocation14 + $0xb4] sm:$0xff]
      %v2163 = vld [vmem:[#allocation14 + $0xbc] sm:$0xf]
      %v2196 = vunpack.c.l.b16 %v2132
      %v2197 = vunpack.c.h.b16 %v2132
      %v2198 = vunpack.c.l.b16 %v2133
      %v2199 = vunpack.c.l.b16 %v2134
      %v2200 = vunpack.c.h.b16 %v2134
      %v2201 = vunpack.c.l.b16 %v2135
      %v2202 = vunpack.c.l.b16 %v2136
      %v2203 = vunpack.c.h.b16 %v2136
      %v2204 = vunpack.c.l.b16 %v2137
      %v2205 = vunpack.c.l.b16 %v2138
      %v2206 = vunpack.c.h.b16 %v2138
      %v2207 = vunpack.c.l.b16 %v2139
      %v2208 = vunpack.c.l.b16 %v2140
      %v2209 = vunpack.c.h.b16 %v2140
      %v2210 = vunpack.c.l.b16 %v2141
      %v2211 = vunpack.c.l.b16 %v2142
      %v2212 = vunpack.c.h.b16 %v2142
      %v2213 = vunpack.c.l.b16 %v2143
      %v2214 = vunpack.c.l.b16 %v2144
      %v2215 = vunpack.c.h.b16 %v2144
      %v2216 = vunpack.c.l.b16 %v2145
      %v2217 = vunpack.c.l.b16 %v2146
      %v2218 = vunpack.c.h.b16 %v2146
      %v2219 = vunpack.c.l.b16 %v2147
      %v2220 = vunpack.c.l.b16 %v2148
      %v2221 = vunpack.c.h.b16 %v2148
      %v2222 = vunpack.c.l.b16 %v2149
      %v2223 = vunpack.c.l.b16 %v2150
      %v2224 = vunpack.c.h.b16 %v2150
      %v2225 = vunpack.c.l.b16 %v2151
      %v2226 = vunpack.c.l.b16 %v2152
      %v2227 = vunpack.c.h.b16 %v2152
      %v2228 = vunpack.c.l.b16 %v2153
      %v2229 = vunpack.c.l.b16 %v2154
      %v2230 = vunpack.c.h.b16 %v2154
      %v2231 = vunpack.c.l.b16 %v2155
      %v2232 = vunpack.c.l.b16 %v2156
      %v2233 = vunpack.c.h.b16 %v2156
      %v2234 = vunpack.c.l.b16 %v2157
      %v2235 = vunpack.c.l.b16 %v2158
      %v2236 = vunpack.c.h.b16 %v2158
      %v2237 = vunpack.c.l.b16 %v2159
      %v2238 = vunpack.c.l.b16 %v2160
      %v2239 = vunpack.c.h.b16 %v2160
      %v2240 = vunpack.c.l.b16 %v2161
      %v2241 = vunpack.c.l.b16 %v2162
      %v2242 = vunpack.c.h.b16 %v2162
      %v2243 = vunpack.c.l.b16 %v2163
      %v2244 = vpack.c.b16 %v2199, %v2196
      %v2245 = vpack.c.b16 %v2200, %v2197
      %v2246 = vpack.c.b16 %v2201, %v2198
      %v2247 = vpack.c.b16 %v2205, %v2202
      %v2248 = vpack.c.b16 %v2206, %v2203
      %v2249 = vpack.c.b16 %v2207, %v2204
      %v2250 = vpack.c.b16 %v2211, %v2208
      %v2251 = vpack.c.b16 %v2212, %v2209
      %v2252 = vpack.c.b16 %v2213, %v2210
      %v2253 = vpack.c.b16 %v2217, %v2214
      %v2254 = vpack.c.b16 %v2218, %v2215
      %v2255 = vpack.c.b16 %v2219, %v2216
      %v2256 = vpack.c.b16 %v2223, %v2220
      %v2257 = vpack.c.b16 %v2224, %v2221
      %v2258 = vpack.c.b16 %v2225, %v2222
      %v2259 = vpack.c.b16 %v2229, %v2226
      %v2260 = vpack.c.b16 %v2230, %v2227
      %v2261 = vpack.c.b16 %v2231, %v2228
      %v2262 = vpack.c.b16 %v2235, %v2232
      %v2263 = vpack.c.b16 %v2236, %v2233
      %v2264 = vpack.c.b16 %v2237, %v2234
      %v2265 = vpack.c.b16 %v2241, %v2238
      %v2266 = vpack.c.b16 %v2242, %v2239
      %v2267 = vpack.c.b16 %v2243, %v2240
      %v2293 = vperm.slane %v2088, 0
      %v2294 = vperm.slane %v2088, 1
      %v2295 = vperm.slane %v2088, 2
      %2299 = vmatpush.bf16.msra.mxu0 %v2265
      %2300 = vmatpush.bf16.msra.mxu0 %v2262
      %2301 = vmatpush.bf16.msra.mxu0 %v2259
      %2302 = vmatpush.bf16.msra.mxu0 %v2256
      %2303 = vmatpush.bf16.msra.mxu0 %v2253
      %2304 = vmatpush.bf16.msra.mxu0 %v2250
      %2305 = vmatpush.bf16.msra.mxu0 %v2247
      %2306 = vmatpush.bf16.msra.mxu0 %v2244
      %2307 = vmatmul.bf16.gmra.mxu0 %v2131
      %v2308 = vpop.f32.mrf.mxu0
      %v2309 = vadd.f32 %v2293, %v2308
      %v2310 = vpop.f32.mrf.mxu0
      %2311 = vdwg.mxu0
      %2312 = vmatpush.bf16.msra.mxu0 %v2266
      %2313 = vmatpush.bf16.msra.mxu0 %v2263
      %2314 = vmatpush.bf16.msra.mxu0 %v2260
      %2315 = vmatpush.bf16.msra.mxu0 %v2257
      %2316 = vmatpush.bf16.msra.mxu0 %v2254
      %2317 = vmatpush.bf16.msra.mxu0 %v2251
      %2318 = vmatpush.bf16.msra.mxu0 %v2248
      %2319 = vmatpush.bf16.msra.mxu0 %v2245
      %2320 = vmatmul.bf16.gmra.mxu0 %v2131
      %v2321 = vpop.f32.mrf.mxu0
      %v2322 = vadd.f32 %v2294, %v2321
      %v2323 = vpop.f32.mrf.mxu0
      %2324 = vdwg.mxu0
      %2325 = vmatpush.bf16.msra.mxu0 %v2267
      %2326 = vmatpush.bf16.msra.mxu0 %v2264
      %2327 = vmatpush.bf16.msra.mxu0 %v2261
      %2328 = vmatpush.bf16.msra.mxu0 %v2258
      %2329 = vmatpush.bf16.msra.mxu0 %v2255
      %2330 = vmatpush.bf16.msra.mxu0 %v2252
      %2331 = vmatpush.bf16.msra.mxu0 %v2249
      %2332 = vmatpush.bf16.msra.mxu0 %v2246
      %2333 = vmatmul.bf16.gmra.mxu0 %v2131
      %v2334 = vpop.f32.mrf.mxu0
      %v2335 = vadd.f32 %v2295, %v2334
      %v2336 = vpop.f32.mrf.mxu0
      %2337 = vdwg.mxu0
      %v2338 = vadd.f32 %v2128, %v2309
      %v2339 = vxor.u32 %v2338, 2147483648
      %v2340 = vmul.f32 %v2339, 1.442695
      %v2341 = vpow.pop %v2340
      %v2342 = vadd.f32 %v2341, 1.0
      %v2343 = vrcp.pop %v2342
      %v2344 = vmul.f32 %v2342, %v2343
      %v2345 = vsub.f32 1.0, %v2344
      %v2346 = vmul.f32 %v2343, %v2345
      %v2347 = vadd.f32 %v2343, %v2346
      %vm2348 = vweird.f32 %v2342
      %vm2349 = vweird.f32 %v2343
      %vm2350 = vmor %vm2348, %vm2349
      %v2351 = vsel %vm2350, %v2343, %v2347
      %v2352 = vand.u32 2147483647, %v2342
      %vm2353 = vcmp.eq.f32.partialorder %v2352, 8.507059e+37
      %v2354 = vand.u32 %v2342, 2147483648
      %v2355 = vor.u32 1.1754944e-38, %v2354
      %v2356 = vsel %vm2353, %v2355, %v2351
      %v2357 = vmul.f32 1.0, %v2356
      %v2358 = vadd.f32 %v2129, %v2322
      %v2359 = vxor.u32 %v2358, 2147483648
      %v2360 = vmul.f32 %v2359, 1.442695
      %v2361 = vpow.pop %v2360
      %v2362 = vadd.f32 %v2361, 1.0
      %v2363 = vrcp.pop %v2362
      %v2364 = vmul.f32 %v2362, %v2363
      %v2365 = vsub.f32 1.0, %v2364
      %v2366 = vmul.f32 %v2363, %v2365
      %v2367 = vadd.f32 %v2363, %v2366
      %vm2368 = vweird.f32 %v2362
      %vm2369 = vweird.f32 %v2363
      %vm2370 = vmor %vm2368, %vm2369
      %v2371 = vsel %vm2370, %v2363, %v2367
      %v2372 = vand.u32 2147483647, %v2362
      %vm2373 = vcmp.eq.f32.partialorder %v2372, 8.507059e+37
      %v2374 = vand.u32 %v2362, 2147483648
      %v2375 = vor.u32 1.1754944e-38, %v2374
      %v2376 = vsel %vm2373, %v2375, %v2371
      %v2377 = vmul.f32 1.0, %v2376
      %v2378 = vmul.f32 %v2357, %v2335
      %v2379 = vadd.f32 %v2130, %v2378
      %v2380 = vtanh.pop %v2379
      %v2381 = vsub.f32 1.0, %v2377
      %v2382 = vmul.f32 %v2381, %v2380
      %v2383 = vmul.f32 %v2377, %v2127
      %v2384 = vadd.f32 %v2382, %v2383
      %v2385 = vperm.slane %v2384, 0
      %v2386 = vmul.f32 %v2086, %v2385
      %2387 = vadd.xlane.f32.xlu0 %v2386
      %v2388 = vpop.xlane.xlu0 %2387
      %v2389 = vrot.slane %v2388, 4
      %v2390 = vmax.f32 %v2388, %v2389
      %v2391 = vrot.slane %v2390, 2
      %v2392 = vmax.f32 %v2390, %v2391
      %v2393 = vrot.slane %v2392, 1
      %v2394 = vmax.f32 %v2392, %v2393
      %v2395 = vsub.f32 %v2388, %v2394
      %v2396 = vmul.f32 %v2395, 1.442695
      %v2397 = vpow.pop %v2396
      %v2398 = vrot.slane %v2397, 4
      %v2399 = vadd.f32 %v2397, %v2398
      %v2400 = vrot.slane %v2399, 2
      %v2401 = vadd.f32 %v2399, %v2400
      %v2402 = vrot.slane %v2401, 1
      %v2403 = vadd.f32 %v2401, %v2402
      %v2404 = vrcp.pop %v2403
      %v2405 = vmul.f32 %v2397, %v2404
      %v2406 = vmul.f32 %v2405, %v2086
      %v2407 = vrot.slane %v2406, 4
      %v2408 = vadd.f32 %v2406, %v2407
      %v2409 = vrot.slane %v2408, 2
      %v2410 = vadd.f32 %v2408, %v2409
      %v2411 = vrot.slane %v2410, 1
      %v2412 = vadd.f32 %v2410, %v2411
      %v2413 = vpack.c.bf16 %v2384, %v2384
      %v2414 = vpack.c.bf16 %v2412, %v2412
      %v2415 = vld [vmem:[#allocation17] sm:$0xf]
      %v2416 = vld [vmem:[#allocation17 + $0x4] sm:$0xf]
      %v2417 = vld [vmem:[#allocation17 + $0x8] sm:$0xf]
      %v2418 = vld [vmem:[#allocation17 + $0xc] sm:$0xf]
      %v2419 = vld [vmem:[#allocation17 + $0x10] sm:$0xf]
      %v2420 = vld [vmem:[#allocation17 + $0x14] sm:$0xf]
      %v2421 = vld [vmem:[#allocation17 + $0x18] sm:$0xf]
      %v2422 = vld [vmem:[#allocation17 + $0x1c] sm:$0xf]
      %v2423 = vld [vmem:[#allocation17 + $0x20] sm:$0xf]
      %v2424 = vld [vmem:[#allocation17 + $0x24] sm:$0xf]
      %v2425 = vld [vmem:[#allocation17 + $0x28] sm:$0xf]
      %v2426 = vld [vmem:[#allocation17 + $0x2c] sm:$0xf]
      %v2427 = vld [vmem:[#allocation17 + $0x30] sm:$0xf]
      %v2428 = vld [vmem:[#allocation17 + $0x34] sm:$0xf]
      %v2429 = vld [vmem:[#allocation17 + $0x38] sm:$0xf]
      %v2430 = vld [vmem:[#allocation17 + $0x3c] sm:$0xf]
      %v2431 = vld [vmem:[#allocation17 + $0x40] sm:$0xf]
      %v2432 = vld [vmem:[#allocation17 + $0x44] sm:$0xf]
      %v2433 = vld [vmem:[#allocation17 + $0x48] sm:$0xf]
      %v2434 = vld [vmem:[#allocation17 + $0x4c] sm:$0xf]
      %v2435 = vld [vmem:[#allocation17 + $0x50] sm:$0xf]
      %v2436 = vld [vmem:[#allocation17 + $0x54] sm:$0xf]
      %v2437 = vld [vmem:[#allocation17 + $0x58] sm:$0xf]
      %v2438 = vld [vmem:[#allocation17 + $0x5c] sm:$0xf]
      %v2439 = vld [vmem:[#allocation17 + $0x60] sm:$0xf]
      %v2440 = vld [vmem:[#allocation17 + $0x64] sm:$0xf]
      %v2441 = vld [vmem:[#allocation17 + $0x68] sm:$0xf]
      %v2442 = vld [vmem:[#allocation17 + $0x6c] sm:$0xf]
      %v2443 = vld [vmem:[#allocation17 + $0x70] sm:$0xf]
      %v2444 = vld [vmem:[#allocation17 + $0x74] sm:$0xf]
      %v2445 = vld [vmem:[#allocation17 + $0x78] sm:$0xf]
      %v2446 = vld [vmem:[#allocation17 + $0x7c] sm:$0xf]
      %v2479 = vunpack.c.l.b16 %v2415
      %v2480 = vunpack.c.l.b16 %v2416
      %v2481 = vunpack.c.l.b16 %v2417
      %v2482 = vunpack.c.l.b16 %v2418
      %v2483 = vunpack.c.l.b16 %v2419
      %v2484 = vunpack.c.l.b16 %v2420
      %v2485 = vunpack.c.l.b16 %v2421
      %v2486 = vunpack.c.l.b16 %v2422
      %v2487 = vunpack.c.l.b16 %v2423
      %v2488 = vunpack.c.l.b16 %v2424
      %v2489 = vunpack.c.l.b16 %v2425
      %v2490 = vunpack.c.l.b16 %v2426
      %v2491 = vunpack.c.l.b16 %v2427
      %v2492 = vunpack.c.l.b16 %v2428
      %v2493 = vunpack.c.l.b16 %v2429
      %v2494 = vunpack.c.l.b16 %v2430
      %v2495 = vunpack.c.l.b16 %v2431
      %v2496 = vunpack.c.l.b16 %v2432
      %v2497 = vunpack.c.l.b16 %v2433
      %v2498 = vunpack.c.l.b16 %v2434
      %v2499 = vunpack.c.l.b16 %v2435
      %v2500 = vunpack.c.l.b16 %v2436
      %v2501 = vunpack.c.l.b16 %v2437
      %v2502 = vunpack.c.l.b16 %v2438
      %v2503 = vunpack.c.l.b16 %v2439
      %v2504 = vunpack.c.l.b16 %v2440
      %v2505 = vunpack.c.l.b16 %v2441
      %v2506 = vunpack.c.l.b16 %v2442
      %v2507 = vunpack.c.l.b16 %v2443
      %v2508 = vunpack.c.l.b16 %v2444
      %v2509 = vunpack.c.l.b16 %v2445
      %v2510 = vunpack.c.l.b16 %v2446
      %v2511 = vpack.c.b16 %v2480, %v2479
      %v2512 = vpack.c.b16 %v2482, %v2481
      %v2513 = vpack.c.b16 %v2484, %v2483
      %v2514 = vpack.c.b16 %v2486, %v2485
      %v2515 = vpack.c.b16 %v2488, %v2487
      %v2516 = vpack.c.b16 %v2490, %v2489
      %v2517 = vpack.c.b16 %v2492, %v2491
      %v2518 = vpack.c.b16 %v2494, %v2493
      %v2519 = vpack.c.b16 %v2496, %v2495
      %v2520 = vpack.c.b16 %v2498, %v2497
      %v2521 = vpack.c.b16 %v2500, %v2499
      %v2522 = vpack.c.b16 %v2502, %v2501
      %v2523 = vpack.c.b16 %v2504, %v2503
      %v2524 = vpack.c.b16 %v2506, %v2505
      %v2525 = vpack.c.b16 %v2508, %v2507
      %v2526 = vpack.c.b16 %v2510, %v2509
      %2543 = vmatpush.bf16.msra.mxu0 %v2518
      %2544 = vmatpush.bf16.msra.mxu0 %v2517
      %2545 = vmatpush.bf16.msra.mxu0 %v2516
      %2546 = vmatpush.bf16.msra.mxu0 %v2515
      %2547 = vmatpush.bf16.msra.mxu0 %v2514
      %2548 = vmatpush.bf16.msra.mxu0 %v2513
      %2549 = vmatpush.bf16.msra.mxu0 %v2512
      %2550 = vmatpush.bf16.msra.mxu0 %v2511
      %2551 = vmatmul.bf16.gmra.mxu0 %v2413
      %v2552 = vpop.f32.mrf.mxu0
      %v2553 = vadd.f32 %v2089, %v2552
      %v2554 = vpop.f32.mrf.mxu0
      %2555 = vdwg.mxu0
      %2556 = vmatpush.bf16.msra.mxu0 %v2526
      %2557 = vmatpush.bf16.msra.mxu0 %v2525
      %2558 = vmatpush.bf16.msra.mxu0 %v2524
      %2559 = vmatpush.bf16.msra.mxu0 %v2523
      %2560 = vmatpush.bf16.msra.mxu0 %v2522
      %2561 = vmatpush.bf16.msra.mxu0 %v2521
      %2562 = vmatpush.bf16.msra.mxu0 %v2520
      %2563 = vmatpush.bf16.msra.mxu0 %v2519
      %2564 = vmatmul.bf16.gmra.mxu0 %v2414
      %v2565 = vpop.f32.mrf.mxu0
      %v2566 = vadd.f32 %v2553, %v2565
      %v2567 = vpop.f32.mrf.mxu0
      %2568 = vdwg.mxu0
      %v2569 = vtanh.pop %v2566
      %v2570 = vpack.c.bf16 %v2569, %v2569
      %v2571 = vld [vmem:[#allocation18] sm:$0xff]
      %v2572 = vld [vmem:[#allocation18 + $0x8] sm:$0xff]
      %v2573 = vld [vmem:[#allocation18 + $0x10] sm:$0xff]
      %v2574 = vld [vmem:[#allocation18 + $0x18] sm:$0xff]
      %v2575 = vld [vmem:[#allocation18 + $0x20] sm:$0xff]
      %v2576 = vld [vmem:[#allocation18 + $0x28] sm:$0xff]
      %v2577 = vld [vmem:[#allocation18 + $0x30] sm:$0xff]
      %v2578 = vld [vmem:[#allocation18 + $0x38] sm:$0xff]
      %v2579 = vld [vmem:[#allocation18 + $0x40] sm:$0xff]
      %v2580 = vld [vmem:[#allocation18 + $0x48] sm:$0xff]
      %v2581 = vld [vmem:[#allocation18 + $0x50] sm:$0xff]
      %v2582 = vld [vmem:[#allocation18 + $0x58] sm:$0xff]
      %v2583 = vld [vmem:[#allocation18 + $0x60] sm:$0xff]
      %v2584 = vld [vmem:[#allocation18 + $0x68] sm:$0xff]
      %v2585 = vld [vmem:[#allocation18 + $0x70] sm:$0xff]
      %v2586 = vld [vmem:[#allocation18 + $0x78] sm:$0xff]
      %v2603 = vunpack.c.l.b16 %v2571
      %v2604 = vunpack.c.h.b16 %v2571
      %v2605 = vunpack.c.l.b16 %v2572
      %v2606 = vunpack.c.h.b16 %v2572
      %v2607 = vunpack.c.l.b16 %v2573
      %v2608 = vunpack.c.h.b16 %v2573
      %v2609 = vunpack.c.l.b16 %v2574
      %v2610 = vunpack.c.h.b16 %v2574
      %v2611 = vunpack.c.l.b16 %v2575
      %v2612 = vunpack.c.h.b16 %v2575
      %v2613 = vunpack.c.l.b16 %v2576
      %v2614 = vunpack.c.h.b16 %v2576
      %v2615 = vunpack.c.l.b16 %v2577
      %v2616 = vunpack.c.h.b16 %v2577
      %v2617 = vunpack.c.l.b16 %v2578
      %v2618 = vunpack.c.h.b16 %v2578
      %v2619 = vunpack.c.l.b16 %v2579
      %v2620 = vunpack.c.h.b16 %v2579
      %v2621 = vunpack.c.l.b16 %v2580
      %v2622 = vunpack.c.h.b16 %v2580
      %v2623 = vunpack.c.l.b16 %v2581
      %v2624 = vunpack.c.h.b16 %v2581
      %v2625 = vunpack.c.l.b16 %v2582
      %v2626 = vunpack.c.h.b16 %v2582
      %v2627 = vunpack.c.l.b16 %v2583
      %v2628 = vunpack.c.h.b16 %v2583
      %v2629 = vunpack.c.l.b16 %v2584
      %v2630 = vunpack.c.h.b16 %v2584
      %v2631 = vunpack.c.l.b16 %v2585
      %v2632 = vunpack.c.h.b16 %v2585
      %v2633 = vunpack.c.l.b16 %v2586
      %v2634 = vunpack.c.h.b16 %v2586
      %v2635 = vpack.c.b16 %v2605, %v2603
      %v2636 = vpack.c.b16 %v2606, %v2604
      %v2637 = vpack.c.b16 %v2609, %v2607
      %v2638 = vpack.c.b16 %v2610, %v2608
      %v2639 = vpack.c.b16 %v2613, %v2611
      %v2640 = vpack.c.b16 %v2614, %v2612
      %v2641 = vpack.c.b16 %v2617, %v2615
      %v2642 = vpack.c.b16 %v2618, %v2616
      %v2643 = vpack.c.b16 %v2621, %v2619
      %v2644 = vpack.c.b16 %v2622, %v2620
      %v2645 = vpack.c.b16 %v2625, %v2623
      %v2646 = vpack.c.b16 %v2626, %v2624
      %v2647 = vpack.c.b16 %v2629, %v2627
      %v2648 = vpack.c.b16 %v2630, %v2628
      %v2649 = vpack.c.b16 %v2633, %v2631
      %v2650 = vpack.c.b16 %v2634, %v2632
      %v2668 = vperm.slane %v2090, 0
      %v2669 = vperm.slane %v2090, 1
      %2672 = vmatpush.bf16.msra.mxu0 %v2649
      %2673 = vmatpush.bf16.msra.mxu0 %v2647
      %2674 = vmatpush.bf16.msra.mxu0 %v2645
      %2675 = vmatpush.bf16.msra.mxu0 %v2643
      %2676 = vmatpush.bf16.msra.mxu0 %v2641
      %2677 = vmatpush.bf16.msra.mxu0 %v2639
      %2678 = vmatpush.bf16.msra.mxu0 %v2637
      %2679 = vmatpush.bf16.msra.mxu0 %v2635
      %2680 = vmatmul.bf16.gmra.mxu0 %v2570
      %v2681 = vpop.f32.mrf.mxu0
      %v2682 = vadd.f32 %v2668, %v2681
      %v2683 = vpop.f32.mrf.mxu0
      %2684 = vdwg.mxu0
      %2685 = vmatpush.bf16.msra.mxu0 %v2650
      %2686 = vmatpush.bf16.msra.mxu0 %v2648
      %2687 = vmatpush.bf16.msra.mxu0 %v2646
      %2688 = vmatpush.bf16.msra.mxu0 %v2644
      %2689 = vmatpush.bf16.msra.mxu0 %v2642
      %2690 = vmatpush.bf16.msra.mxu0 %v2640
      %2691 = vmatpush.bf16.msra.mxu0 %v2638
      %2692 = vmatpush.bf16.msra.mxu0 %v2636
      %2693 = vmatmul.bf16.gmra.mxu0 %v2570
      %v2694 = vpop.f32.mrf.mxu0
      %v2695 = vadd.f32 %v2669, %v2694
      %v2696 = vpop.f32.mrf.mxu0
      %2697 = vdwg.mxu0
      %v2698 = vsel %vm841, %v2682, -inf
      %v2699 = vsel %vm841, %v2695, -inf
      %v2700 = vmax.f32 %v2698, %v2699
      %2701 = vmax.xlane.f32.xlu0 %v2700
      %v2702 = vpop.xlane.xlu0 %2701
      %v2703 = vsub.f32 %v2682, %v2702
      %v2704 = vsub.f32 %v2695, %v2702
      %v2705 = vmul.f32 %v2703, 1.442695
      %v2706 = vpow.pop %v2705
      %v2707 = vmul.f32 %v2704, 1.442695
      %v2708 = vpow.pop %v2707
      %v2709 = vsel %vm841, %v2706, 0.0
      %v2710 = vsel %vm841, %v2708, 0.0
      %v2711 = vadd.f32 %v2709, %v2710
      %2712 = vadd.xlane.f32.xlu0 %v2711
      %v2713 = vpop.xlane.xlu0 %2712
      %vm2714 = vcmp.eq.f32.partialorder %v2682, %v2702
      %vm2715 = vcmp.eq.f32.partialorder %v2695, %v2702
      %v2716 = vsel %vm2714, %v2092, 256
      %v2717 = vsel %vm2715, %v2093, 256
      %v2718 = vsel %vm841, %v2716, 2147483647
      %v2719 = vsel %vm841, %v2717, 2147483647
      %vm2720 = vcmp.lt.s32.totalorder %v2718, %v2719
      %v2721 = vsel %vm2720, %v2718, %v2719
      %v2722 = vand.u32 %v2721, 65535
      %v2723 = vshra.s32 %v2721, 16
      %v2724 = vcvt.s32.f32 %v2722
      %v2725 = vcvt.s32.f32 %v2723
      %2726 = vmin.xlane.f32.xlu0 %v2725
      %v2727 = vpop.xlane.xlu0 %2726
      %vm2728 = vcmp.eq.f32.partialorder %v2725, %v2727
      %v2729 = vsel %vm2728, %v2724, inf
      %2730 = vmin.xlane.f32.xlu0 %v2729
      %v2731 = vpop.xlane.xlu0 %2730
      %v2732 = vcvt.f32.s32 %v2731
      %v2733 = vcvt.f32.s32 %v2727
      %v2734 = vshll.u32 %v2733, 16
      %v2735 = vadd.s32 %v2734, %v2732
      %s2736 = vtos %v2735
      %s2737 = scalar_lea.smem [#allocation20], %s2122
      %2738 = sst [smem:[%s2737]] %s2736
      %v2739 = vrcp.pop %v2713
      %v2740 = vmul.f32 %v2713, %v2739
      %v2741 = vsub.f32 1.0, %v2740
      %v2742 = vmul.f32 %v2739, %v2741
      %v2743 = vadd.f32 %v2739, %v2742
      %vm2744 = vweird.f32 %v2713
      %vm2745 = vweird.f32 %v2739
      %vm2746 = vmor %vm2744, %vm2745
      %v2747 = vsel %vm2746, %v2739, %v2743
      %v2748 = vand.u32 2147483647, %v2713
      %vm2749 = vcmp.eq.f32.partialorder %v2748, 8.507059e+37
      %v2750 = vand.u32 %v2713, 2147483648
      %v2751 = vor.u32 1.1754944e-38, %v2750
      %v2752 = vsel %vm2749, %v2751, %v2747
      %v2753 = vmul.f32 1.0, %v2752
      %s2754 = vtos %v2753
      %s2755 = scalar_lea.smem [#allocation21], %s2122
      %2756 = sst [smem:[%s2755]] %s2754
      %vm2757 = vcmp.eq.s32.totalorder %v2092, %v2735
      %vm2758 = vcmp.eq.s32.totalorder %v2093, %v2735
      %v2759 = vsel %vm2757, 1, 0
      %v2760 = vsel %vm2758, 1, 0
      %v2761 = vcvt.s32.f32 %v2759
      %v2762 = vcvt.s32.f32 %v2760
      %v2763 = vpack.c.bf16 %v2761, %v2761
      %v2764 = vpack.c.bf16 %v2762, %v2762
      %v2765 = vld [vmem:[#allocation2] sm:$0xff]
      %v2766 = vld [vmem:[#allocation2 + $0x8] sm:$0xf]
      %v2767 = vld [vmem:[#allocation2 + $0xc] sm:$0xff]
      %v2768 = vld [vmem:[#allocation2 + $0x14] sm:$0xf]
      %v2769 = vld [vmem:[#allocation2 + $0x18] sm:$0xff]
      %v2770 = vld [vmem:[#allocation2 + $0x20] sm:$0xf]
      %v2771 = vld [vmem:[#allocation2 + $0x24] sm:$0xff]
      %v2772 = vld [vmem:[#allocation2 + $0x2c] sm:$0xf]
      %v2773 = vld [vmem:[#allocation2 + $0x30] sm:$0xff]
      %v2774 = vld [vmem:[#allocation2 + $0x38] sm:$0xf]
      %v2775 = vld [vmem:[#allocation2 + $0x3c] sm:$0xff]
      %v2776 = vld [vmem:[#allocation2 + $0x44] sm:$0xf]
      %v2777 = vld [vmem:[#allocation2 + $0x48] sm:$0xff]
      %v2778 = vld [vmem:[#allocation2 + $0x50] sm:$0xf]
      %v2779 = vld [vmem:[#allocation2 + $0x54] sm:$0xff]
      %v2780 = vld [vmem:[#allocation2 + $0x5c] sm:$0xf]
      %v2781 = vld [vmem:[#allocation2 + $0x60] sm:$0xff]
      %v2782 = vld [vmem:[#allocation2 + $0x68] sm:$0xf]
      %v2783 = vld [vmem:[#allocation2 + $0x6c] sm:$0xff]
      %v2784 = vld [vmem:[#allocation2 + $0x74] sm:$0xf]
      %v2785 = vld [vmem:[#allocation2 + $0x78] sm:$0xff]
      %v2786 = vld [vmem:[#allocation2 + $0x80] sm:$0xf]
      %v2787 = vld [vmem:[#allocation2 + $0x84] sm:$0xff]
      %v2788 = vld [vmem:[#allocation2 + $0x8c] sm:$0xf]
      %v2789 = vld [vmem:[#allocation2 + $0x90] sm:$0xff]
      %v2790 = vld [vmem:[#allocation2 + $0x98] sm:$0xf]
      %v2791 = vld [vmem:[#allocation2 + $0x9c] sm:$0xff]
      %v2792 = vld [vmem:[#allocation2 + $0xa4] sm:$0xf]
      %v2793 = vld [vmem:[#allocation2 + $0xa8] sm:$0xff]
      %v2794 = vld [vmem:[#allocation2 + $0xb0] sm:$0xf]
      %v2795 = vld [vmem:[#allocation2 + $0xb4] sm:$0xff]
      %v2796 = vld [vmem:[#allocation2 + $0xbc] sm:$0xf]
      %v2797 = vld [vmem:[#allocation2 + $0xc0] sm:$0xff]
      %v2798 = vld [vmem:[#allocation2 + $0xc8] sm:$0xf]
      %v2799 = vld [vmem:[#allocation2 + $0xcc] sm:$0xff]
      %v2800 = vld [vmem:[#allocation2 + $0xd4] sm:$0xf]
      %v2801 = vld [vmem:[#allocation2 + $0xd8] sm:$0xff]
      %v2802 = vld [vmem:[#allocation2 + $0xe0] sm:$0xf]
      %v2803 = vld [vmem:[#allocation2 + $0xe4] sm:$0xff]
      %v2804 = vld [vmem:[#allocation2 + $0xec] sm:$0xf]
      %v2805 = vld [vmem:[#allocation2 + $0xf0] sm:$0xff]
      %v2806 = vld [vmem:[#allocation2 + $0xf8] sm:$0xf]
      %v2807 = vld [vmem:[#allocation2 + $0xfc] sm:$0xff]
      %v2808 = vld [vmem:[#allocation2 + $0x104] sm:$0xf]
      %v2809 = vld [vmem:[#allocation2 + $0x108] sm:$0xff]
      %v2810 = vld [vmem:[#allocation2 + $0x110] sm:$0xf]
      %v2811 = vld [vmem:[#allocation2 + $0x114] sm:$0xff]
      %v2812 = vld [vmem:[#allocation2 + $0x11c] sm:$0xf]
      %v2813 = vld [vmem:[#allocation2 + $0x120] sm:$0xff]
      %v2814 = vld [vmem:[#allocation2 + $0x128] sm:$0xf]
      %v2815 = vld [vmem:[#allocation2 + $0x12c] sm:$0xff]
      %v2816 = vld [vmem:[#allocation2 + $0x134] sm:$0xf]
      %v2817 = vld [vmem:[#allocation2 + $0x138] sm:$0xff]
      %v2818 = vld [vmem:[#allocation2 + $0x140] sm:$0xf]
      %v2819 = vld [vmem:[#allocation2 + $0x144] sm:$0xff]
      %v2820 = vld [vmem:[#allocation2 + $0x14c] sm:$0xf]
      %v2821 = vld [vmem:[#allocation2 + $0x150] sm:$0xff]
      %v2822 = vld [vmem:[#allocation2 + $0x158] sm:$0xf]
      %v2823 = vld [vmem:[#allocation2 + $0x15c] sm:$0xff]
      %v2824 = vld [vmem:[#allocation2 + $0x164] sm:$0xf]
      %v2825 = vld [vmem:[#allocation2 + $0x168] sm:$0xff]
      %v2826 = vld [vmem:[#allocation2 + $0x170] sm:$0xf]
      %v2827 = vld [vmem:[#allocation2 + $0x174] sm:$0xff]
      %v2828 = vld [vmem:[#allocation2 + $0x17c] sm:$0xf]
      %v2893 = vunpack.c.l.b16 %v2765
      %v2894 = vunpack.c.h.b16 %v2765
      %v2895 = vunpack.c.l.b16 %v2766
      %v2896 = vunpack.c.l.b16 %v2767
      %v2897 = vunpack.c.h.b16 %v2767
      %v2898 = vunpack.c.l.b16 %v2768
      %v2899 = vunpack.c.l.b16 %v2769
      %v2900 = vunpack.c.h.b16 %v2769
      %v2901 = vunpack.c.l.b16 %v2770
      %v2902 = vunpack.c.l.b16 %v2771
      %v2903 = vunpack.c.h.b16 %v2771
      %v2904 = vunpack.c.l.b16 %v2772
      %v2905 = vunpack.c.l.b16 %v2773
      %v2906 = vunpack.c.h.b16 %v2773
      %v2907 = vunpack.c.l.b16 %v2774
      %v2908 = vunpack.c.l.b16 %v2775
      %v2909 = vunpack.c.h.b16 %v2775
      %v2910 = vunpack.c.l.b16 %v2776
      %v2911 = vunpack.c.l.b16 %v2777
      %v2912 = vunpack.c.h.b16 %v2777
      %v2913 = vunpack.c.l.b16 %v2778
      %v2914 = vunpack.c.l.b16 %v2779
      %v2915 = vunpack.c.h.b16 %v2779
      %v2916 = vunpack.c.l.b16 %v2780
      %v2917 = vunpack.c.l.b16 %v2781
      %v2918 = vunpack.c.h.b16 %v2781
      %v2919 = vunpack.c.l.b16 %v2782
      %v2920 = vunpack.c.l.b16 %v2783
      %v2921 = vunpack.c.h.b16 %v2783
      %v2922 = vunpack.c.l.b16 %v2784
      %v2923 = vunpack.c.l.b16 %v2785
      %v2924 = vunpack.c.h.b16 %v2785
      %v2925 = vunpack.c.l.b16 %v2786
      %v2926 = vunpack.c.l.b16 %v2787
      %v2927 = vunpack.c.h.b16 %v2787
      %v2928 = vunpack.c.l.b16 %v2788
      %v2929 = vunpack.c.l.b16 %v2789
      %v2930 = vunpack.c.h.b16 %v2789
      %v2931 = vunpack.c.l.b16 %v2790
      %v2932 = vunpack.c.l.b16 %v2791
      %v2933 = vunpack.c.h.b16 %v2791
      %v2934 = vunpack.c.l.b16 %v2792
      %v2935 = vunpack.c.l.b16 %v2793
      %v2936 = vunpack.c.h.b16 %v2793
      %v2937 = vunpack.c.l.b16 %v2794
      %v2938 = vunpack.c.l.b16 %v2795
      %v2939 = vunpack.c.h.b16 %v2795
      %v2940 = vunpack.c.l.b16 %v2796
      %v2941 = vunpack.c.l.b16 %v2797
      %v2942 = vunpack.c.h.b16 %v2797
      %v2943 = vunpack.c.l.b16 %v2798
      %v2944 = vunpack.c.l.b16 %v2799
      %v2945 = vunpack.c.h.b16 %v2799
      %v2946 = vunpack.c.l.b16 %v2800
      %v2947 = vunpack.c.l.b16 %v2801
      %v2948 = vunpack.c.h.b16 %v2801
      %v2949 = vunpack.c.l.b16 %v2802
      %v2950 = vunpack.c.l.b16 %v2803
      %v2951 = vunpack.c.h.b16 %v2803
      %v2952 = vunpack.c.l.b16 %v2804
      %v2953 = vunpack.c.l.b16 %v2805
      %v2954 = vunpack.c.h.b16 %v2805
      %v2955 = vunpack.c.l.b16 %v2806
      %v2956 = vunpack.c.l.b16 %v2807
      %v2957 = vunpack.c.h.b16 %v2807
      %v2958 = vunpack.c.l.b16 %v2808
      %v2959 = vunpack.c.l.b16 %v2809
      %v2960 = vunpack.c.h.b16 %v2809
      %v2961 = vunpack.c.l.b16 %v2810
      %v2962 = vunpack.c.l.b16 %v2811
      %v2963 = vunpack.c.h.b16 %v2811
      %v2964 = vunpack.c.l.b16 %v2812
      %v2965 = vunpack.c.l.b16 %v2813
      %v2966 = vunpack.c.h.b16 %v2813
      %v2967 = vunpack.c.l.b16 %v2814
      %v2968 = vunpack.c.l.b16 %v2815
      %v2969 = vunpack.c.h.b16 %v2815
      %v2970 = vunpack.c.l.b16 %v2816
      %v2971 = vunpack.c.l.b16 %v2817
      %v2972 = vunpack.c.h.b16 %v2817
      %v2973 = vunpack.c.l.b16 %v2818
      %v2974 = vunpack.c.l.b16 %v2819
      %v2975 = vunpack.c.h.b16 %v2819
      %v2976 = vunpack.c.l.b16 %v2820
      %v2977 = vunpack.c.l.b16 %v2821
      %v2978 = vunpack.c.h.b16 %v2821
      %v2979 = vunpack.c.l.b16 %v2822
      %v2980 = vunpack.c.l.b16 %v2823
      %v2981 = vunpack.c.h.b16 %v2823
      %v2982 = vunpack.c.l.b16 %v2824
      %v2983 = vunpack.c.l.b16 %v2825
      %v2984 = vunpack.c.h.b16 %v2825
      %v2985 = vunpack.c.l.b16 %v2826
      %v2986 = vunpack.c.l.b16 %v2827
      %v2987 = vunpack.c.h.b16 %v2827
      %v2988 = vunpack.c.l.b16 %v2828
      %v2989 = vpack.c.b16 %v2896, %v2893
      %v2990 = vpack.c.b16 %v2897, %v2894
      %v2991 = vpack.c.b16 %v2898, %v2895
      %v2992 = vpack.c.b16 %v2902, %v2899
      %v2993 = vpack.c.b16 %v2903, %v2900
      %v2994 = vpack.c.b16 %v2904, %v2901
      %v2995 = vpack.c.b16 %v2908, %v2905
      %v2996 = vpack.c.b16 %v2909, %v2906
      %v2997 = vpack.c.b16 %v2910, %v2907
      %v2998 = vpack.c.b16 %v2914, %v2911
      %v2999 = vpack.c.b16 %v2915, %v2912
      %v3000 = vpack.c.b16 %v2916, %v2913
      %v3001 = vpack.c.b16 %v2920, %v2917
      %v3002 = vpack.c.b16 %v2921, %v2918
      %v3003 = vpack.c.b16 %v2922, %v2919
      %v3004 = vpack.c.b16 %v2926, %v2923
      %v3005 = vpack.c.b16 %v2927, %v2924
      %v3006 = vpack.c.b16 %v2928, %v2925
      %v3007 = vpack.c.b16 %v2932, %v2929
      %v3008 = vpack.c.b16 %v2933, %v2930
      %v3009 = vpack.c.b16 %v2934, %v2931
      %v3010 = vpack.c.b16 %v2938, %v2935
      %v3011 = vpack.c.b16 %v2939, %v2936
      %v3012 = vpack.c.b16 %v2940, %v2937
      %v3013 = vpack.c.b16 %v2944, %v2941
      %v3014 = vpack.c.b16 %v2945, %v2942
      %v3015 = vpack.c.b16 %v2946, %v2943
      %v3016 = vpack.c.b16 %v2950, %v2947
      %v3017 = vpack.c.b16 %v2951, %v2948
      %v3018 = vpack.c.b16 %v2952, %v2949
      %v3019 = vpack.c.b16 %v2956, %v2953
      %v3020 = vpack.c.b16 %v2957, %v2954
      %v3021 = vpack.c.b16 %v2958, %v2955
      %v3022 = vpack.c.b16 %v2962, %v2959
      %v3023 = vpack.c.b16 %v2963, %v2960
      %v3024 = vpack.c.b16 %v2964, %v2961
      %v3025 = vpack.c.b16 %v2968, %v2965
      %v3026 = vpack.c.b16 %v2969, %v2966
      %v3027 = vpack.c.b16 %v2970, %v2967
      %v3028 = vpack.c.b16 %v2974, %v2971
      %v3029 = vpack.c.b16 %v2975, %v2972
      %v3030 = vpack.c.b16 %v2976, %v2973
      %v3031 = vpack.c.b16 %v2980, %v2977
      %v3032 = vpack.c.b16 %v2981, %v2978
      %v3033 = vpack.c.b16 %v2982, %v2979
      %v3034 = vpack.c.b16 %v2986, %v2983
      %v3035 = vpack.c.b16 %v2987, %v2984
      %v3036 = vpack.c.b16 %v2988, %v2985
      %3085 = vmatpush.bf16.msra.mxu0 %v3010
      %3086 = vmatpush.bf16.msra.mxu0 %v3007
      %3087 = vmatpush.bf16.msra.mxu0 %v3004
      %3088 = vmatpush.bf16.msra.mxu0 %v3001
      %3089 = vmatpush.bf16.msra.mxu0 %v2998
      %3090 = vmatpush.bf16.msra.mxu0 %v2995
      %3091 = vmatpush.bf16.msra.mxu0 %v2992
      %3092 = vmatpush.bf16.msra.mxu0 %v2989
      %3093 = vmatmul.bf16.gmra.mxu0 %v2763
      %v3094 = vpop.f32.mrf.mxu0
      %v3095 = vadd.f32 %v2100, %v3094
      %v3096 = vpop.f32.mrf.mxu0
      %3097 = vdwg.mxu0
      %3098 = vmatpush.bf16.msra.mxu0 %v3034
      %3099 = vmatpush.bf16.msra.mxu0 %v3031
      %3100 = vmatpush.bf16.msra.mxu0 %v3028
      %3101 = vmatpush.bf16.msra.mxu0 %v3025
      %3102 = vmatpush.bf16.msra.mxu0 %v3022
      %3103 = vmatpush.bf16.msra.mxu0 %v3019
      %3104 = vmatpush.bf16.msra.mxu0 %v3016
      %3105 = vmatpush.bf16.msra.mxu0 %v3013
      %3106 = vmatmul.bf16.gmra.mxu0 %v2764
      %v3107 = vpop.f32.mrf.mxu0
      %v3108 = vadd.f32 %v3095, %v3107
      %v3109 = vpop.f32.mrf.mxu0
      %3110 = vdwg.mxu0
      %3111 = vmatpush.bf16.msra.mxu0 %v3011
      %3112 = vmatpush.bf16.msra.mxu0 %v3008
      %3113 = vmatpush.bf16.msra.mxu0 %v3005
      %3114 = vmatpush.bf16.msra.mxu0 %v3002
      %3115 = vmatpush.bf16.msra.mxu0 %v2999
      %3116 = vmatpush.bf16.msra.mxu0 %v2996
      %3117 = vmatpush.bf16.msra.mxu0 %v2993
      %3118 = vmatpush.bf16.msra.mxu0 %v2990
      %3119 = vmatmul.bf16.gmra.mxu0 %v2763
      %v3120 = vpop.f32.mrf.mxu0
      %v3121 = vadd.f32 %v2101, %v3120
      %v3122 = vpop.f32.mrf.mxu0
      %3123 = vdwg.mxu0
      %3124 = vmatpush.bf16.msra.mxu0 %v3035
      %3125 = vmatpush.bf16.msra.mxu0 %v3032
      %3126 = vmatpush.bf16.msra.mxu0 %v3029
      %3127 = vmatpush.bf16.msra.mxu0 %v3026
      %3128 = vmatpush.bf16.msra.mxu0 %v3023
      %3129 = vmatpush.bf16.msra.mxu0 %v3020
      %3130 = vmatpush.bf16.msra.mxu0 %v3017
      %3131 = vmatpush.bf16.msra.mxu0 %v3014
      %3132 = vmatmul.bf16.gmra.mxu0 %v2764
      %v3133 = vpop.f32.mrf.mxu0
      %v3134 = vadd.f32 %v3121, %v3133
      %v3135 = vpop.f32.mrf.mxu0
      %3136 = vdwg.mxu0
      %3137 = vmatpush.bf16.msra.mxu0 %v3012
      %3138 = vmatpush.bf16.msra.mxu0 %v3009
      %3139 = vmatpush.bf16.msra.mxu0 %v3006
      %3140 = vmatpush.bf16.msra.mxu0 %v3003
      %3141 = vmatpush.bf16.msra.mxu0 %v3000
      %3142 = vmatpush.bf16.msra.mxu0 %v2997
      %3143 = vmatpush.bf16.msra.mxu0 %v2994
      %3144 = vmatpush.bf16.msra.mxu0 %v2991
      %3145 = vmatmul.bf16.gmra.mxu0 %v2763
      %v3146 = vpop.f32.mrf.mxu0
      %v3147 = vadd.f32 %v2102, %v3146
      %v3148 = vpop.f32.mrf.mxu0
      %3149 = vdwg.mxu0
      %3150 = vmatpush.bf16.msra.mxu0 %v3036
      %3151 = vmatpush.bf16.msra.mxu0 %v3033
      %3152 = vmatpush.bf16.msra.mxu0 %v3030
      %3153 = vmatpush.bf16.msra.mxu0 %v3027
      %3154 = vmatpush.bf16.msra.mxu0 %v3024
      %3155 = vmatpush.bf16.msra.mxu0 %v3021
      %3156 = vmatpush.bf16.msra.mxu0 %v3018
      %3157 = vmatpush.bf16.msra.mxu0 %v3015
      %3158 = vmatmul.bf16.gmra.mxu0 %v2764
      %v3159 = vpop.f32.mrf.mxu0
      %v3160 = vadd.f32 %v3147, %v3159
      %v3161 = vpop.f32.mrf.mxu0
      %3162 = vdwg.mxu0
    $region102: #{tpu_custom_call.1} parent=1 // loop_footer
      %s2126 = sadd.s32 1, %s2122
    $region103: #{tpu_custom_call.1} parent=1 // loop_footer_branch
      %2121 = sbr.rel target = $region99
    $region104: #{tpu_custom_call.1} parent=1 // loop_exit
      _
    // Predicated region
    $region105: #{tpu_custom_call.1} parent=1 // pred_check
      _
    $region106: #{tpu_custom_call.1} parent=1 // pred_check_branch
      %3164 = sbr.rel (0) target = $region108
    $region107: #{tpu_custom_call.1} parent=1 // pred_region
      %3166 = vsyncadd [#allocation7], 0
      %s3168 = sshll.u32 %s15, 4
      %s3169 = int_to_ptr.hbm [resolvable:$true] %s3168
      %3171 = dma.smem_to_hbm [#allocation20], 16, %s3169, [#allocation7]
    $region108: #{tpu_custom_call.1} parent=1 // pred_fallthru
      _
    // Predicated region
    $region109: #{tpu_custom_call.1} parent=1 // pred_check
      _
    $region110: #{tpu_custom_call.1} parent=1 // pred_check_branch
      %3173 = sbr.rel (0) target = $region112
    $region111: #{tpu_custom_call.1} parent=1 // pred_region
      %3175 = vsyncadd [#allocation22], 0
      %s3177 = sshll.u32 %s16, 4
      %s3178 = int_to_ptr.hbm [resolvable:$true] %s3177
      %3180 = dma.smem_to_hbm [#allocation21], 16, %s3178, [#allocation22]
    $region112: #{tpu_custom_call.1} parent=1 // pred_fallthru
      _
    // Predicated region
    $region113: #{tpu_custom_call.1} parent=1 // pred_check
      _
    $region114: #{tpu_custom_call.1} parent=1 // pred_check_branch
      %3182 = sbr.rel (0) target = $region116
    $region115: #{tpu_custom_call.1} parent=1 // pred_region
      %3184 = dma.done [#allocation7], 16
    $region116: #{tpu_custom_call.1} parent=1 // pred_fallthru
      _
    // Predicated region
    $region117: #{tpu_custom_call.1} parent=1 // pred_check
      _
    $region118: #{tpu_custom_call.1} parent=1 // pred_check_branch
      %3186 = sbr.rel (0) target = $region120
    $region119: #{tpu_custom_call.1} parent=1 // pred_region
      %3188 = dma.done [#allocation22], 16
    $region120: #{tpu_custom_call.1} parent=1 // pred_fallthru
      _
    %3189 = sfence
    %3190 = vsyncpa [#allocation5], 1
    %3191 = vsyncpa [#allocation10], 1
    %3192 = vsyncpa [#allocation13], 1
    %3193 = vsyncpa [#allocation16], 1
    %3194 = vsyncpa [#allocation19], 1
    %3195 = vsyncpa [#allocation6], 1
    %3196 = vsyncpa [#allocation7], 1
    %3197 = vsyncpa [#allocation22], 1

</llo_original>
